<compile_context>
chip_gen: v7x
topology: tpu7x:2x2x1
jax: 0.10.0
libtpu: 0.0.40
codegen_flags: <defaults>
</compile_context>

<pallas_src>
import numpy as np
import jax
import jax.numpy as jnp
from jax import lax
from jax.experimental import pallas as pl
from jax.experimental.pallas import tpu as pltpu

# ---------------- configuration (small synthetic shapes) ----------------
B = 2                 # batch
C_IN = 4              # image channels
H = W = 16            # spatial size
KSIZE = 3             # backbone conv kernel (SAME)
BB_CH = 32            # synthetic backbone channels (real, padded to 128 lanes)
OUT_CH = 16           # FPN out_channels (stand-in for out_channels=196)
N_LEVELS = 5          # num_outs=5
META_DIM = 32         # meta_dim (age / sex / ant embeddings)
NUM_CLASSES = 8       # num_classes (>1 so no [:, 0] squeeze)
DROPOUT_P = 0.2
N_DROP_SAMPLES = 5    # multisample_dropout

LANE = 128                                 # TPU lane width: channel dims padded to this
KKC = KSIZE * KSIZE * C_IN                 # 36 -> padded to 128
DIM_FEATS = N_LEVELS * OUT_CH * 2          # concat pool doubles channels -> 160
FEAT_DIM = DIM_FEATS + 3 * META_DIM        # 256
VOCAB_PAD = 16                             # embedding vocab slot width (age=10, sex=2, ant=6)
SPATIAL = [(H >> l) * (W >> l) for l in range(N_LEVELS)]   # 256, 64, 16, 4, 1
POOL_CHUNK = 64                            # spatial rows reduced per step (bounds live vregs)

# fc-weight row chunks: (offset in the 256-dim feature vector, width).  Order matches the
# PyTorch concat: per level [maxpool(16), avgpool(16)], then age/sex/ant embeddings (96).
CHUNK_ROWS = []
for _l in range(N_LEVELS):
    CHUNK_ROWS.append((2 * OUT_CH * _l, OUT_CH))             # max-pool chunk
    CHUNK_ROWS.append((2 * OUT_CH * _l + OUT_CH, OUT_CH))    # avg-pool chunk
CHUNK_ROWS.append((DIM_FEATS, 3 * META_DIM))                 # fused embeddings chunk
N_CHUNKS = len(CHUNK_ROWS)                                   # 11


# ---------------- fused Pallas kernel ----------------
def _pool_concat(y, s):
    """AdaptiveConcatPool2d body: (max, avg) over spatial of a [B*s, LANE] f32 value,
    reduced in POOL_CHUNK-row slices to bound the live vreg set."""
    if s == 1:
        return y, y
    y3 = y.reshape(B, s, LANE)
    step = min(POOL_CHUNK, s)
    mx = jnp.max(y3[:, :step, :], axis=1)
    sm = jnp.sum(y3[:, :step, :], axis=1)
    for c0 in range(step, s, step):
        blk = y3[:, c0:c0 + step, :]
        mx = jnp.maximum(mx, jnp.max(blk, axis=1))
        sm = sm + jnp.sum(blk, axis=1)
    return mx, sm * (1.0 / s)


def netmeta_fused_kernel(patches_ref, conv_w_ref, conv_b_ref,
                         pool0_ref, pool1_ref, pool2_ref, pool3_ref,
                         lat_w_ref, lat_b_ref,
                         meta_off_ref, meta_tab_ref,
                         mask_ref, fc_w_ref, fc_b_ref,
                         out_ref):
    f32, bf16 = jnp.float32, jnp.bfloat16
    pool_refs = (pool0_ref, pool1_ref, pool2_ref, pool3_ref)

    # --- synthetic backbone: 3x3 conv (im2col matmul, bf16 in / f32 acc) + ReLU --------
    x = jnp.dot(patches_ref[...], conv_w_ref[...], preferred_element_type=f32)
    x = jnp.maximum(x + conv_b_ref[...], 0.0)                     # [B*256, 128] f32

    acc = jnp.zeros((B, LANE), f32)                               # logits accumulator

    # --- interleaved pyramid: consume level l (lateral conv + concat-pool + fc-chunk
    #     accumulation) before deriving level l+1, so at most one level is live ---------
    for l in range(N_LEVELS):
        x_bf = x.astype(bf16)
        y = jnp.dot(x_bf, lat_w_ref[l], preferred_element_type=f32)
        y = jnp.maximum(y + lat_b_ref[pl.ds(l, 1), :], 0.0)       # [B*S_l, 128] f32
        mx, av = _pool_concat(y, SPATIAL[l])                      # [B, 128] each
        acc += jnp.dot((mx * mask_ref[2 * l]).astype(bf16),
                       fc_w_ref[2 * l], preferred_element_type=f32)
        acc += jnp.dot((av * mask_ref[2 * l + 1]).astype(bf16),
                       fc_w_ref[2 * l + 1], preferred_element_type=f32)
        if l < N_LEVELS - 1:                                      # next level = 2x2 avg pool
            x = jnp.dot(pool_refs[l][...], x_bf, preferred_element_type=f32)

    # --- meta embeddings: one fused one-hot @ block-diagonal table matmul --------------
    iota = lax.broadcasted_iota(jnp.int32, (B, LANE), 1)
    oh = ((iota == meta_off_ref[0]) | (iota == meta_off_ref[1]) |
          (iota == meta_off_ref[2]))
    oh = oh.astype(f32).astype(bf16)                              # [B, 128] fused one-hot
    emb = jnp.dot(oh, meta_tab_ref[...], preferred_element_type=f32)   # age|sex|ant lanes
    acc += jnp.dot((emb * mask_ref[2 * N_LEVELS]).astype(bf16),
                   fc_w_ref[2 * N_LEVELS], preferred_element_type=f32)

    out_ref[...] = acc + fc_b_ref[...]                            # [B, 128] lane-dense


# ---------------- wrapper / glue ----------------
def im2col_same(x_nhwc, k):
    n, h, w, c = x_nhwc.shape
    pad = k // 2
    xp = jnp.pad(x_nhwc, ((0, 0), (pad, pad), (pad, pad), (0, 0)))
    cols = [xp[:, di:di + h, dj:dj + w, :] for di in range(k) for dj in range(k)]
    return jnp.concatenate(cols, axis=-1).reshape(n * h * w, k * k * c)


def make_seq_pool_matrix(b, h, w):
    """Constant 2x2 avg-pool matrix mapping level rows [b*h*w] -> [b*(h//2)*(w//2)]."""
    hp, wp = h // 2, w // 2
    cols = b * h * w
    ci = np.arange(cols)
    bi = ci // (h * w)
    yi = (ci // w) % h
    xi = ci % w
    row = bi * (hp * wp) + (yi // 2) * wp + (xi // 2)
    mat = np.zeros((b * hp * wp, cols), np.float32)
    mat[row, ci] = 0.25                      # exactly representable in bf16
    return jnp.asarray(mat, jnp.bfloat16)


@jax.jit
def _forward_core(img, meta_idx, eff_mask, params):
    # NCHW -> NHWC, im2col, lane-pad to 128 and cast to bf16 under the same jit.
    x_nhwc = jnp.transpose(img, (0, 2, 3, 1))
    patches = im2col_same(x_nhwc, KSIZE)                          # [B*H*W, 36]
    patches = jnp.pad(patches, ((0, 0), (0, LANE - KKC))).astype(jnp.bfloat16)

    # Lane-broadcast fused-embedding offsets (lane 16*j + idx): avoids a (B,3) sub-tile
    # VMEM block / lane extraction inside the kernel.
    off = (meta_idx + jnp.arange(3, dtype=jnp.int32)[None, :] * VOCAB_PAD).astype(jnp.int32)
    meta_off = jnp.broadcast_to(off.T[:, :, None], (3, B, LANE))

    # Per-chunk dropout-mask slabs, lane-dense [N_CHUNKS, B, 128] (padding lanes = 1.0;
    # harmless since the matching fc-chunk rows are zero there).
    mask_slabs = jnp.stack(
        [jnp.pad(eff_mask[:, r0:r0 + w_], ((0, 0), (0, LANE - w_)), constant_values=1.0)
         for (r0, w_) in CHUNK_ROWS], axis=0)

    operands = (patches, params["conv_w"], params["conv_b"],
                params["pool0"], params["pool1"], params["pool2"], params["pool3"],
                params["lat_w"], params["lat_b"],
                meta_off, params["meta_tab"],
                mask_slabs, params["fc_w_chunks"], params["fc_b"])

    in_specs = [pl.BlockSpec(a.shape, lambda i, nd=a.ndim: (0,) * nd) for a in operands]

    logits_pad = pl.pallas_call(
        netmeta_fused_kernel,
        out_shape=jax.ShapeDtypeStruct((B, LANE), jnp.float32),
        grid=(1,),
        in_specs=in_specs,
        out_specs=pl.BlockSpec((B, LANE), lambda i: (0, 0)),
        compiler_params=pltpu.CompilerParams(dimension_semantics=("arbitrary",)),
    )(*operands)
    return logits_pad[:, :NUM_CLASSES]


def make_dropout_masks(rng, bsz):
    # TODO(synk): PyTorch's dropout RNG stream can't be reproduced; masks are
    # statistically equivalent Bernoulli(1-p) draws scaled by 1/(1-p).
    keep = jax.random.bernoulli(rng, 1.0 - DROPOUT_P, (N_DROP_SAMPLES, bsz, FEAT_DIM))
    return keep.astype(jnp.float32) / (1.0 - DROPOUT_P)


def netmeta_forward(batch, params, *, training=False, rng=None):
    img = batch["img"]
    square_tta = (img.ndim == 5 and img.shape[0] == 1)
    if square_tta:
        batch = {k: v[0] for k, v in batch.items()}
        img = batch["img"]
    bsz = img.shape[0]
    meta_idx = jnp.stack([batch["age"], batch["sex"], batch["ant"]],
                         axis=1).astype(jnp.int32)                # [B, 3]
    if training:
        if rng is None:
            rng = jax.random.PRNGKey(0)
        # mean_s(drop_s(f) @ W + b) == (f * mean_s(mask_s)) @ W + b for a linear fc:
        # the 5-sample multisample dropout collapses onto ONE pre-averaged mask.
        eff_mask = make_dropout_masks(rng, bsz).mean(axis=0)
    else:
        eff_mask = jnp.ones((bsz, FEAT_DIM), jnp.float32)
    logits = _forward_core(img, meta_idx, eff_mask, params)
    if NUM_CLASSES == 1:
        logits = logits[:, 0]
    if square_tta:
        logits = jnp.mean(logits, axis=0, keepdims=True)
    return logits


# ---------------- pure-JAX reference (bf16-mirroring, unsplit fc, true 5-pass dropout) --
def netmeta_reference(batch, params, drop_masks):
    f32, bf16 = jnp.float32, jnp.bfloat16
    x_nhwc = jnp.transpose(batch["img"], (0, 2, 3, 1))
    patches = jnp.pad(im2col_same(x_nhwc, KSIZE), ((0, 0), (0, LANE - KKC))).astype(bf16)
    x = jnp.maximum(jnp.dot(patches, params["conv_w"], preferred_element_type=f32)
                    + params["conv_b"], 0.0)
    pools = [params["pool0"], params["pool1"], params["pool2"], params["pool3"]]
    chunks = []
    for l in range(N_LEVELS):
        xb = x.astype(bf16)
        y = jnp.maximum(jnp.dot(xb, params["lat_w"][l], preferred_element_type=f32)
                        + params["lat_b"][l][None, :], 0.0)
        y3 = y.reshape(B, SPATIAL[l], LANE)
        chunks.append(jnp.max(y3, axis=1)[:, :OUT_CH])
        chunks.append(jnp.mean(y3, axis=1)[:, :OUT_CH])
        if l < N_LEVELS - 1:
            x = jnp.dot(pools[l], xb, preferred_element_type=f32)
    meta_idx = jnp.stack([batch["age"], batch["sex"], batch["ant"]], 1).astype(jnp.int32)
    offs = meta_idx + jnp.arange(3, dtype=jnp.int32)[None, :] * VOCAB_PAD
    oh = jax.nn.one_hot(offs, LANE, dtype=f32).sum(axis=1).astype(bf16)
    emb = jnp.dot(oh, params["meta_tab"], preferred_element_type=f32)
    features = jnp.concatenate(chunks + [emb[:, :3 * META_DIM]], axis=1)   # [B, 256]
    # genuine per-sample 5-pass multisample dropout (validates the in-kernel folding)
    logits = jnp.mean(jnp.stack(
        [jnp.dot((features * drop_masks[s]).astype(bf16), params["fc_w_full"],
                 preferred_element_type=f32) for s in range(drop_masks.shape[0])],
        axis=0), axis=0) + params["fc_b"]
    return logits[:, :NUM_CLASSES]


# ---------------- demo ----------------
if __name__ == "__main__":
    key = jax.random.PRNGKey(0)
    ks = jax.random.split(key, 13)

    img = jax.random.normal(ks[0], (B, C_IN, H, W), jnp.float32)          # NCHW
    age = jax.random.randint(ks[1], (B,), 0, 10)
    sex = jax.random.randint(ks[2], (B,), 0, 2)
    ant = jax.random.randint(ks[3], (B,), 0, 6)
    batch = {"img": img, "age": age, "sex": sex, "ant": ant}

    conv_w = jax.random.normal(ks[4], (KKC, BB_CH), jnp.float32) * 0.1
    conv_b = jax.random.normal(ks[5], (BB_CH,), jnp.float32) * 0.1
    lat_w = jax.random.normal(ks[6], (N_LEVELS, BB_CH, OUT_CH), jnp.float32) * 0.1
    lat_b = jax.random.normal(ks[7], (N_LEVELS, OUT_CH), jnp.float32) * 0.1
    age_tab = jax.random.normal(ks[8], (10, META_DIM), jnp.float32) * 0.1
    sex_tab = jax.random.normal(ks[9], (2, META_DIM), jnp.float32) * 0.1
    ant_tab = jax.random.normal(ks[10], (6, META_DIM), jnp.float32) * 0.1
    fc_w = jax.random.normal(ks[11], (NUM_CLASSES, FEAT_DIM), jnp.float32) * 0.1
    fc_b = jax.random.normal(ks[12], (NUM_CLASSES,), jnp.float32) * 0.1

    def padded(a, shape):
        out = np.zeros(shape, np.float32)
        out[tuple(slice(0, s) for s in np.shape(a))] = np.asarray(a)
        return out

    # block-diagonal fused embedding table: row 16*j + v -> columns 32*j .. 32*j+31
    meta_tab = np.zeros((LANE, LANE), np.float32)
    for j, tab in enumerate((age_tab, sex_tab, ant_tab)):
        t = np.asarray(tab)
        meta_tab[VOCAB_PAD * j:VOCAB_PAD * j + t.shape[0],
                 META_DIM * j:META_DIM * j + META_DIM] = t

    # fc weight, pre-transposed & lane-padded, split into per-feature-chunk row blocks
    fc_w_t = padded(np.asarray(fc_w).T, (FEAT_DIM, LANE))                 # [256, 128]
    fc_chunks = np.zeros((N_CHUNKS, LANE, LANE), np.float32)
    for c, (r0, w_) in enumerate(CHUNK_ROWS):
        fc_chunks[c, :w_, :] = fc_w_t[r0:r0 + w_, :]

    bf16 = jnp.bfloat16
    params = {
        "conv_w": jnp.asarray(padded(conv_w, (LANE, LANE)), bf16),
        "conv_b": jnp.asarray(padded(np.asarray(conv_b)[None, :], (1, LANE)), jnp.float32),
        "pool0": make_seq_pool_matrix(B, H, W),
        "pool1": make_seq_pool_matrix(B, H // 2, W // 2),
        "pool2": make_seq_pool_matrix(B, H // 4, W // 4),
        "pool3": make_seq_pool_matrix(B, H // 8, W // 8),
        "lat_w": jnp.asarray(padded(lat_w, (N_LEVELS, LANE, LANE)), bf16),
        "lat_b": jnp.asarray(padded(lat_b, (N_LEVELS, LANE)), jnp.float32),
        "meta_tab": jnp.asarray(meta_tab, bf16),
        "fc_w_chunks": jnp.asarray(fc_chunks, bf16),
        "fc_w_full": jnp.asarray(fc_w_t, bf16),     # reference only (unsplit fc weight)
        "fc_b": jnp.asarray(padded(np.asarray(fc_b)[None, :], (1, LANE)), jnp.float32),
    }

    # eval-mode forward (dropout = identity) and training-mode forward (5-sample dropout)
    out_eval = netmeta_forward(batch, params, training=False)
    rng_train = jax.random.PRNGKey(42)
    out_train = netmeta_forward(batch, params, training=True, rng=rng_train)
    jax.block_until_ready((out_eval, out_train))

    assert out_eval.shape == (B, NUM_CLASSES)
    assert out_train.shape == (B, NUM_CLASSES)

    # eval check: dropout = identity
    ones = jnp.ones((N_DROP_SAMPLES, B, FEAT_DIM), jnp.float32)
    ref_eval = netmeta_reference(batch, params, ones)
    assert jnp.allclose(out_eval, ref_eval, rtol=5e-3, atol=5e-3), "eval mismatch vs reference"

    # training check: kernel's folded mask vs a genuine per-sample 5-pass reference
    masks = make_dropout_masks(rng_train, B)
    ref_train = netmeta_reference(batch, params, masks)
    assert jnp.allclose(out_train, ref_train, rtol=2e-2, atol=2e-2), "train mismatch vs reference"

    print("KERNEL_OK")
</pallas_src>

<mosaic_0001>
module attributes {stable_mosaic.version = 11 : i64} {
  func.func @netmeta_fused_kernel(%arg0: i32, %arg1: memref<512x128xbf16, #tpu.memory_space<vmem>>, %arg2: memref<128x128xbf16, #tpu.memory_space<vmem>>, %arg3: memref<1x128xf32, #tpu.memory_space<vmem>>, %arg4: memref<128x512xbf16, #tpu.memory_space<vmem>>, %arg5: memref<32x128xbf16, #tpu.memory_space<vmem>>, %arg6: memref<8x32xbf16, #tpu.memory_space<vmem>>, %arg7: memref<2x8xbf16, #tpu.memory_space<vmem>>, %arg8: memref<5x128x128xbf16, #tpu.memory_space<vmem>>, %arg9: memref<5x128xf32, #tpu.memory_space<vmem>>, %arg10: memref<3x2x128xi32, #tpu.memory_space<vmem>>, %arg11: memref<128x128xbf16, #tpu.memory_space<vmem>>, %arg12: memref<11x2x128xf32, #tpu.memory_space<vmem>>, %arg13: memref<11x128x128xbf16, #tpu.memory_space<vmem>>, %arg14: memref<1x128xf32, #tpu.memory_space<vmem>>, %arg15: memref<2x128xf32, #tpu.memory_space<vmem>>) attributes {dimension_semantics = [#tpu.dimension_semantics<arbitrary>], iteration_bounds = array<i64: 1>, scalar_prefetch = 0 : i64, scratch_operands = 0 : i64, tpu.core_type = #tpu.core_type<tc>, window_params = [{pipeline_mode = #tpu.pipeline_mode<synchronous>, transform_indices = @transform_0, window_bounds = array<i64: 512, 128>}, {pipeline_mode = #tpu.pipeline_mode<synchronous>, transform_indices = @transform_1, window_bounds = array<i64: 128, 128>}, {pipeline_mode = #tpu.pipeline_mode<synchronous>, transform_indices = @transform_2, window_bounds = array<i64: 1, 128>}, {pipeline_mode = #tpu.pipeline_mode<synchronous>, transform_indices = @transform_3, window_bounds = array<i64: 128, 512>}, {pipeline_mode = #tpu.pipeline_mode<synchronous>, transform_indices = @transform_4, window_bounds = array<i64: 32, 128>}, {pipeline_mode = #tpu.pipeline_mode<synchronous>, transform_indices = @transform_5, window_bounds = array<i64: 8, 32>}, {pipeline_mode = #tpu.pipeline_mode<synchronous>, transform_indices = @transform_6, window_bounds = array<i64: 2, 8>}, {pipeline_mode = #tpu.pipeline_mode<synchronous>, transform_indices = @transform_7, window_bounds = array<i64: 5, 128, 128>}, {pipeline_mode = #tpu.pipeline_mode<synchronous>, transform_indices = @transform_8, window_bounds = array<i64: 5, 128>}, {pipeline_mode = #tpu.pipeline_mode<synchronous>, transform_indices = @transform_9, window_bounds = array<i64: 3, 2, 128>}, {pipeline_mode = #tpu.pipeline_mode<synchronous>, transform_indices = @transform_10, window_bounds = array<i64: 128, 128>}, {pipeline_mode = #tpu.pipeline_mode<synchronous>, transform_indices = @transform_11, window_bounds = array<i64: 11, 2, 128>}, {pipeline_mode = #tpu.pipeline_mode<synchronous>, transform_indices = @transform_12, window_bounds = array<i64: 11, 128, 128>}, {pipeline_mode = #tpu.pipeline_mode<synchronous>, transform_indices = @transform_13, window_bounds = array<i64: 1, 128>}, {pipeline_mode = #tpu.pipeline_mode<synchronous>, transform_indices = @transform_14, window_bounds = array<i64: 2, 128>}]} {
    %c0 = arith.constant 0 : index
    %c0_0 = arith.constant 0 : index
    %0 = vector.load %arg1[%c0, %c0_0] : memref<512x128xbf16, #tpu.memory_space<vmem>>, vector<512x128xbf16>
    %c0_1 = arith.constant 0 : index
    %c0_2 = arith.constant 0 : index
    %1 = vector.load %arg2[%c0_1, %c0_2] : memref<128x128xbf16, #tpu.memory_space<vmem>>, vector<128x128xbf16>
    %cst = arith.constant dense<0.000000e+00> : vector<512x128xf32>
    %2 = tpu.matmul %0, %1, %cst {dimension_numbers = #tpu.dot_dimension_numbers<[1], [0], [0], [1], [0, 0, 1, 1], [], []>} : vector<512x128xbf16>, vector<128x128xbf16>, vector<512x128xf32> -> vector<512x128xf32>
    %c0_3 = arith.constant 0 : index
    %c0_4 = arith.constant 0 : index
    %3 = vector.load %arg3[%c0_3, %c0_4] : memref<1x128xf32, #tpu.memory_space<vmem>>, vector<1x128xf32>
    %4 = vector.broadcast %3 : vector<1x128xf32> to vector<512x128xf32>
    %5 = arith.addf %2, %4 : vector<512x128xf32>
    %cst_5 = arith.constant 0.000000e+00 : f32
    %6 = vector.broadcast %cst_5 : f32 to vector<512x128xf32>
    %7 = arith.maximumf %5, %6 : vector<512x128xf32>
    %cst_6 = arith.constant 0.000000e+00 : f32
    %8 = vector.broadcast %cst_6 : f32 to vector<2x128xf32>
    %9 = arith.truncf %7 : vector<512x128xf32> to vector<512x128xbf16>
    %c0_7 = arith.constant 0 : index
    %c0_8 = arith.constant 0 : index
    %c0_9 = arith.constant 0 : index
    %10 = vector.load %arg8[%c0_7, %c0_8, %c0_9] : memref<5x128x128xbf16, #tpu.memory_space<vmem>>, vector<1x128x128xbf16>
    %11 = vector.shape_cast %10 : vector<1x128x128xbf16> to vector<128x128xbf16>
    %cst_10 = arith.constant dense<0.000000e+00> : vector<512x128xf32>
    %12 = tpu.matmul %9, %11, %cst_10 {dimension_numbers = #tpu.dot_dimension_numbers<[1], [0], [0], [1], [0, 0, 1, 1], [], []>} : vector<512x128xbf16>, vector<128x128xbf16>, vector<512x128xf32> -> vector<512x128xf32>
    %c0_11 = arith.constant 0 : index
    %c0_12 = arith.constant 0 : index
    %13 = vector.load %arg9[%c0_11, %c0_12] : memref<5x128xf32, #tpu.memory_space<vmem>>, vector<1x128xf32>
    %14 = vector.broadcast %13 : vector<1x128xf32> to vector<512x128xf32>
    %15 = arith.addf %12, %14 : vector<512x128xf32>
    %cst_13 = arith.constant 0.000000e+00 : f32
    %16 = vector.broadcast %cst_13 : f32 to vector<512x128xf32>
    %17 = arith.maximumf %15, %16 : vector<512x128xf32>
    %18 = vector.shape_cast %17 : vector<512x128xf32> to vector<2x256x128xf32>
    %19 = vector.extract_strided_slice %18 {offsets = [0, 0, 0], sizes = [2, 64, 128], strides = [1, 1, 1]} : vector<2x256x128xf32> to vector<2x64x128xf32>
    %cst_14 = arith.constant dense<0xFF800000> : vector<2x128xf32>
    %20 = vector.multi_reduction <maximumf>, %19, %cst_14 [1] : vector<2x64x128xf32> to vector<2x128xf32>
    %21 = vector.extract_strided_slice %18 {offsets = [0, 0, 0], sizes = [2, 64, 128], strides = [1, 1, 1]} : vector<2x256x128xf32> to vector<2x64x128xf32>
    %cst_15 = arith.constant dense<0.000000e+00> : vector<2x128xf32>
    %22 = vector.multi_reduction <add>, %21, %cst_15 [1] : vector<2x64x128xf32> to vector<2x128xf32>
    %23 = vector.extract_strided_slice %18 {offsets = [0, 64, 0], sizes = [2, 64, 128], strides = [1, 1, 1]} : vector<2x256x128xf32> to vector<2x64x128xf32>
    %cst_16 = arith.constant dense<0xFF800000> : vector<2x128xf32>
    %24 = vector.multi_reduction <maximumf>, %23, %cst_16 [1] : vector<2x64x128xf32> to vector<2x128xf32>
    %25 = arith.maximumf %20, %24 : vector<2x128xf32>
    %cst_17 = arith.constant dense<0.000000e+00> : vector<2x128xf32>
    %26 = vector.multi_reduction <add>, %23, %cst_17 [1] : vector<2x64x128xf32> to vector<2x128xf32>
    %27 = arith.addf %22, %26 : vector<2x128xf32>
    %28 = vector.extract_strided_slice %18 {offsets = [0, 128, 0], sizes = [2, 64, 128], strides = [1, 1, 1]} : vector<2x256x128xf32> to vector<2x64x128xf32>
    %cst_18 = arith.constant dense<0xFF800000> : vector<2x128xf32>
    %29 = vector.multi_reduction <maximumf>, %28, %cst_18 [1] : vector<2x64x128xf32> to vector<2x128xf32>
    %30 = arith.maximumf %25, %29 : vector<2x128xf32>
    %cst_19 = arith.constant dense<0.000000e+00> : vector<2x128xf32>
    %31 = vector.multi_reduction <add>, %28, %cst_19 [1] : vector<2x64x128xf32> to vector<2x128xf32>
    %32 = arith.addf %27, %31 : vector<2x128xf32>
    %33 = vector.extract_strided_slice %18 {offsets = [0, 192, 0], sizes = [2, 64, 128], strides = [1, 1, 1]} : vector<2x256x128xf32> to vector<2x64x128xf32>
    %cst_20 = arith.constant dense<0xFF800000> : vector<2x128xf32>
    %34 = vector.multi_reduction <maximumf>, %33, %cst_20 [1] : vector<2x64x128xf32> to vector<2x128xf32>
    %35 = arith.maximumf %30, %34 : vector<2x128xf32>
    %cst_21 = arith.constant dense<0.000000e+00> : vector<2x128xf32>
    %36 = vector.multi_reduction <add>, %33, %cst_21 [1] : vector<2x64x128xf32> to vector<2x128xf32>
    %37 = arith.addf %32, %36 : vector<2x128xf32>
    %cst_22 = arith.constant 3.906250e-03 : f32
    %38 = vector.broadcast %cst_22 : f32 to vector<2x128xf32>
    %39 = arith.mulf %37, %38 : vector<2x128xf32>
    %c0_23 = arith.constant 0 : index
    %c0_24 = arith.constant 0 : index
    %c0_25 = arith.constant 0 : index
    %40 = vector.load %arg12[%c0_23, %c0_24, %c0_25] : memref<11x2x128xf32, #tpu.memory_space<vmem>>, vector<1x2x128xf32>
    %41 = vector.shape_cast %40 : vector<1x2x128xf32> to vector<2x128xf32>
    %42 = arith.mulf %35, %41 : vector<2x128xf32>
    %43 = arith.truncf %42 : vector<2x128xf32> to vector<2x128xbf16>
    %c0_26 = arith.constant 0 : index
    %c0_27 = arith.constant 0 : index
    %c0_28 = arith.constant 0 : index
    %44 = vector.load %arg13[%c0_26, %c0_27, %c0_28] : memref<11x128x128xbf16, #tpu.memory_space<vmem>>, vector<1x128x128xbf16>
    %45 = vector.shape_cast %44 : vector<1x128x128xbf16> to vector<128x128xbf16>
    %cst_29 = arith.constant dense<0.000000e+00> : vector<2x128xf32>
    %46 = tpu.matmul %43, %45, %cst_29 {dimension_numbers = #tpu.dot_dimension_numbers<[1], [0], [0], [1], [0, 0, 1, 1], [], []>} : vector<2x128xbf16>, vector<128x128xbf16>, vector<2x128xf32> -> vector<2x128xf32>
    %47 = arith.addf %8, %46 : vector<2x128xf32>
    %c1 = arith.constant 1 : index
    %c0_30 = arith.constant 0 : index
    %c0_31 = arith.constant 0 : index
    %48 = vector.load %arg12[%c1, %c0_30, %c0_31] : memref<11x2x128xf32, #tpu.memory_space<vmem>>, vector<1x2x128xf32>
    %49 = vector.shape_cast %48 : vector<1x2x128xf32> to vector<2x128xf32>
    %50 = arith.mulf %39, %49 : vector<2x128xf32>
    %51 = arith.truncf %50 : vector<2x128xf32> to vector<2x128xbf16>
    %c1_32 = arith.constant 1 : index
    %c0_33 = arith.constant 0 : index
    %c0_34 = arith.constant 0 : index
    %52 = vector.load %arg13[%c1_32, %c0_33, %c0_34] : memref<11x128x128xbf16, #tpu.memory_space<vmem>>, vector<1x128x128xbf16>
    %53 = vector.shape_cast %52 : vector<1x128x128xbf16> to vector<128x128xbf16>
    %cst_35 = arith.constant dense<0.000000e+00> : vector<2x128xf32>
    %54 = tpu.matmul %51, %53, %cst_35 {dimension_numbers = #tpu.dot_dimension_numbers<[1], [0], [0], [1], [0, 0, 1, 1], [], []>} : vector<2x128xbf16>, vector<128x128xbf16>, vector<2x128xf32> -> vector<2x128xf32>
    %55 = arith.addf %47, %54 : vector<2x128xf32>
    %c0_36 = arith.constant 0 : index
    %c0_37 = arith.constant 0 : index
    %56 = vector.load %arg4[%c0_36, %c0_37] : memref<128x512xbf16, #tpu.memory_space<vmem>>, vector<128x512xbf16>
    %cst_38 = arith.constant dense<0.000000e+00> : vector<128x128xf32>
    %57 = tpu.matmul %56, %9, %cst_38 {dimension_numbers = #tpu.dot_dimension_numbers<[1], [0], [0], [1], [0, 0, 1, 1], [], []>} : vector<128x512xbf16>, vector<512x128xbf16>, vector<128x128xf32> -> vector<128x128xf32>
    %58 = arith.truncf %57 : vector<128x128xf32> to vector<128x128xbf16>
    %c1_39 = arith.constant 1 : index
    %c0_40 = arith.constant 0 : index
    %c0_41 = arith.constant 0 : index
    %59 = vector.load %arg8[%c1_39, %c0_40, %c0_41] : memref<5x128x128xbf16, #tpu.memory_space<vmem>>, vector<1x128x128xbf16>
    %60 = vector.shape_cast %59 : vector<1x128x128xbf16> to vector<128x128xbf16>
    %cst_42 = arith.constant dense<0.000000e+00> : vector<128x128xf32>
    %61 = tpu.matmul %58, %60, %cst_42 {dimension_numbers = #tpu.dot_dimension_numbers<[1], [0], [0], [1], [0, 0, 1, 1], [], []>} : vector<128x128xbf16>, vector<128x128xbf16>, vector<128x128xf32> -> vector<128x128xf32>
    %c1_43 = arith.constant 1 : index
    %c0_44 = arith.constant 0 : index
    %62 = vector.load %arg9[%c1_43, %c0_44] : memref<5x128xf32, #tpu.memory_space<vmem>>, vector<1x128xf32>
    %63 = vector.broadcast %62 : vector<1x128xf32> to vector<128x128xf32>
    %64 = arith.addf %61, %63 : vector<128x128xf32>
    %cst_45 = arith.constant 0.000000e+00 : f32
    %65 = vector.broadcast %cst_45 : f32 to vector<128x128xf32>
    %66 = arith.maximumf %64, %65 : vector<128x128xf32>
    %67 = vector.shape_cast %66 : vector<128x128xf32> to vector<2x64x128xf32>
    %cst_46 = arith.constant dense<0xFF800000> : vector<2x128xf32>
    %68 = vector.multi_reduction <maximumf>, %67, %cst_46 [1] : vector<2x64x128xf32> to vector<2x128xf32>
    %cst_47 = arith.constant dense<0.000000e+00> : vector<2x128xf32>
    %69 = vector.multi_reduction <add>, %67, %cst_47 [1] : vector<2x64x128xf32> to vector<2x128xf32>
    %cst_48 = arith.constant 1.562500e-02 : f32
    %70 = vector.broadcast %cst_48 : f32 to vector<2x128xf32>
    %71 = arith.mulf %69, %70 : vector<2x128xf32>
    %c2 = arith.constant 2 : index
    %c0_49 = arith.constant 0 : index
    %c0_50 = arith.constant 0 : index
    %72 = vector.load %arg12[%c2, %c0_49, %c0_50] : memref<11x2x128xf32, #tpu.memory_space<vmem>>, vector<1x2x128xf32>
    %73 = vector.shape_cast %72 : vector<1x2x128xf32> to vector<2x128xf32>
    %74 = arith.mulf %68, %73 : vector<2x128xf32>
    %75 = arith.truncf %74 : vector<2x128xf32> to vector<2x128xbf16>
    %c2_51 = arith.constant 2 : index
    %c0_52 = arith.constant 0 : index
    %c0_53 = arith.constant 0 : index
    %76 = vector.load %arg13[%c2_51, %c0_52, %c0_53] : memref<11x128x128xbf16, #tpu.memory_space<vmem>>, vector<1x128x128xbf16>
    %77 = vector.shape_cast %76 : vector<1x128x128xbf16> to vector<128x128xbf16>
    %cst_54 = arith.constant dense<0.000000e+00> : vector<2x128xf32>
    %78 = tpu.matmul %75, %77, %cst_54 {dimension_numbers = #tpu.dot_dimension_numbers<[1], [0], [0], [1], [0, 0, 1, 1], [], []>} : vector<2x128xbf16>, vector<128x128xbf16>, vector<2x128xf32> -> vector<2x128xf32>
    %79 = arith.addf %55, %78 : vector<2x128xf32>
    %c3 = arith.constant 3 : index
    %c0_55 = arith.constant 0 : index
    %c0_56 = arith.constant 0 : index
    %80 = vector.load %arg12[%c3, %c0_55, %c0_56] : memref<11x2x128xf32, #tpu.memory_space<vmem>>, vector<1x2x128xf32>
    %81 = vector.shape_cast %80 : vector<1x2x128xf32> to vector<2x128xf32>
    %82 = arith.mulf %71, %81 : vector<2x128xf32>
    %83 = arith.truncf %82 : vector<2x128xf32> to vector<2x128xbf16>
    %c3_57 = arith.constant 3 : index
    %c0_58 = arith.constant 0 : index
    %c0_59 = arith.constant 0 : index
    %84 = vector.load %arg13[%c3_57, %c0_58, %c0_59] : memref<11x128x128xbf16, #tpu.memory_space<vmem>>, vector<1x128x128xbf16>
    %85 = vector.shape_cast %84 : vector<1x128x128xbf16> to vector<128x128xbf16>
    %cst_60 = arith.constant dense<0.000000e+00> : vector<2x128xf32>
    %86 = tpu.matmul %83, %85, %cst_60 {dimension_numbers = #tpu.dot_dimension_numbers<[1], [0], [0], [1], [0, 0, 1, 1], [], []>} : vector<2x128xbf16>, vector<128x128xbf16>, vector<2x128xf32> -> vector<2x128xf32>
    %87 = arith.addf %79, %86 : vector<2x128xf32>
    %c0_61 = arith.constant 0 : index
    %c0_62 = arith.constant 0 : index
    %88 = vector.load %arg5[%c0_61, %c0_62] : memref<32x128xbf16, #tpu.memory_space<vmem>>, vector<32x128xbf16>
    %cst_63 = arith.constant dense<0.000000e+00> : vector<32x128xf32>
    %89 = tpu.matmul %88, %58, %cst_63 {dimension_numbers = #tpu.dot_dimension_numbers<[1], [0], [0], [1], [0, 0, 1, 1], [], []>} : vector<32x128xbf16>, vector<128x128xbf16>, vector<32x128xf32> -> vector<32x128xf32>
    %90 = arith.truncf %89 : vector<32x128xf32> to vector<32x128xbf16>
    %c2_64 = arith.constant 2 : index
    %c0_65 = arith.constant 0 : index
    %c0_66 = arith.constant 0 : index
    %91 = vector.load %arg8[%c2_64, %c0_65, %c0_66] : memref<5x128x128xbf16, #tpu.memory_space<vmem>>, vector<1x128x128xbf16>
    %92 = vector.shape_cast %91 : vector<1x128x128xbf16> to vector<128x128xbf16>
    %cst_67 = arith.constant dense<0.000000e+00> : vector<32x128xf32>
    %93 = tpu.matmul %90, %92, %cst_67 {dimension_numbers = #tpu.dot_dimension_numbers<[1], [0], [0], [1], [0, 0, 1, 1], [], []>} : vector<32x128xbf16>, vector<128x128xbf16>, vector<32x128xf32> -> vector<32x128xf32>
    %c2_68 = arith.constant 2 : index
    %c0_69 = arith.constant 0 : index
    %94 = vector.load %arg9[%c2_68, %c0_69] : memref<5x128xf32, #tpu.memory_space<vmem>>, vector<1x128xf32>
    %95 = vector.broadcast %94 : vector<1x128xf32> to vector<32x128xf32>
    %96 = arith.addf %93, %95 : vector<32x128xf32>
    %cst_70 = arith.constant 0.000000e+00 : f32
    %97 = vector.broadcast %cst_70 : f32 to vector<32x128xf32>
    %98 = arith.maximumf %96, %97 : vector<32x128xf32>
    %99 = vector.shape_cast %98 : vector<32x128xf32> to vector<2x16x128xf32>
    %cst_71 = arith.constant dense<0xFF800000> : vector<2x128xf32>
    %100 = vector.multi_reduction <maximumf>, %99, %cst_71 [1] : vector<2x16x128xf32> to vector<2x128xf32>
    %cst_72 = arith.constant dense<0.000000e+00> : vector<2x128xf32>
    %101 = vector.multi_reduction <add>, %99, %cst_72 [1] : vector<2x16x128xf32> to vector<2x128xf32>
    %cst_73 = arith.constant 6.250000e-02 : f32
    %102 = vector.broadcast %cst_73 : f32 to vector<2x128xf32>
    %103 = arith.mulf %101, %102 : vector<2x128xf32>
    %c4 = arith.constant 4 : index
    %c0_74 = arith.constant 0 : index
    %c0_75 = arith.constant 0 : index
    %104 = vector.load %arg12[%c4, %c0_74, %c0_75] : memref<11x2x128xf32, #tpu.memory_space<vmem>>, vector<1x2x128xf32>
    %105 = vector.shape_cast %104 : vector<1x2x128xf32> to vector<2x128xf32>
    %106 = arith.mulf %100, %105 : vector<2x128xf32>
    %107 = arith.truncf %106 : vector<2x128xf32> to vector<2x128xbf16>
    %c4_76 = arith.constant 4 : index
    %c0_77 = arith.constant 0 : index
    %c0_78 = arith.constant 0 : index
    %108 = vector.load %arg13[%c4_76, %c0_77, %c0_78] : memref<11x128x128xbf16, #tpu.memory_space<vmem>>, vector<1x128x128xbf16>
    %109 = vector.shape_cast %108 : vector<1x128x128xbf16> to vector<128x128xbf16>
    %cst_79 = arith.constant dense<0.000000e+00> : vector<2x128xf32>
    %110 = tpu.matmul %107, %109, %cst_79 {dimension_numbers = #tpu.dot_dimension_numbers<[1], [0], [0], [1], [0, 0, 1, 1], [], []>} : vector<2x128xbf16>, vector<128x128xbf16>, vector<2x128xf32> -> vector<2x128xf32>
    %111 = arith.addf %87, %110 : vector<2x128xf32>
    %c5 = arith.constant 5 : index
    %c0_80 = arith.constant 0 : index
    %c0_81 = arith.constant 0 : index
    %112 = vector.load %arg12[%c5, %c0_80, %c0_81] : memref<11x2x128xf32, #tpu.memory_space<vmem>>, vector<1x2x128xf32>
    %113 = vector.shape_cast %112 : vector<1x2x128xf32> to vector<2x128xf32>
    %114 = arith.mulf %103, %113 : vector<2x128xf32>
    %115 = arith.truncf %114 : vector<2x128xf32> to vector<2x128xbf16>
    %c5_82 = arith.constant 5 : index
    %c0_83 = arith.constant 0 : index
    %c0_84 = arith.constant 0 : index
    %116 = vector.load %arg13[%c5_82, %c0_83, %c0_84] : memref<11x128x128xbf16, #tpu.memory_space<vmem>>, vector<1x128x128xbf16>
    %117 = vector.shape_cast %116 : vector<1x128x128xbf16> to vector<128x128xbf16>
    %cst_85 = arith.constant dense<0.000000e+00> : vector<2x128xf32>
    %118 = tpu.matmul %115, %117, %cst_85 {dimension_numbers = #tpu.dot_dimension_numbers<[1], [0], [0], [1], [0, 0, 1, 1], [], []>} : vector<2x128xbf16>, vector<128x128xbf16>, vector<2x128xf32> -> vector<2x128xf32>
    %119 = arith.addf %111, %118 : vector<2x128xf32>
    %c0_86 = arith.constant 0 : index
    %c0_87 = arith.constant 0 : index
    %120 = vector.load %arg6[%c0_86, %c0_87] : memref<8x32xbf16, #tpu.memory_space<vmem>>, vector<8x32xbf16>
    %cst_88 = arith.constant dense<0.000000e+00> : vector<8x128xf32>
    %121 = tpu.matmul %120, %90, %cst_88 {dimension_numbers = #tpu.dot_dimension_numbers<[1], [0], [0], [1], [0, 0, 1, 1], [], []>} : vector<8x32xbf16>, vector<32x128xbf16>, vector<8x128xf32> -> vector<8x128xf32>
    %122 = arith.truncf %121 : vector<8x128xf32> to vector<8x128xbf16>
    %c3_89 = arith.constant 3 : index
    %c0_90 = arith.constant 0 : index
    %c0_91 = arith.constant 0 : index
    %123 = vector.load %arg8[%c3_89, %c0_90, %c0_91] : memref<5x128x128xbf16, #tpu.memory_space<vmem>>, vector<1x128x128xbf16>
    %124 = vector.shape_cast %123 : vector<1x128x128xbf16> to vector<128x128xbf16>
    %cst_92 = arith.constant dense<0.000000e+00> : vector<8x128xf32>
    %125 = tpu.matmul %122, %124, %cst_92 {dimension_numbers = #tpu.dot_dimension_numbers<[1], [0], [0], [1], [0, 0, 1, 1], [], []>} : vector<8x128xbf16>, vector<128x128xbf16>, vector<8x128xf32> -> vector<8x128xf32>
    %c3_93 = arith.constant 3 : index
    %c0_94 = arith.constant 0 : index
    %126 = vector.load %arg9[%c3_93, %c0_94] : memref<5x128xf32, #tpu.memory_space<vmem>>, vector<1x128xf32>
    %127 = vector.broadcast %126 : vector<1x128xf32> to vector<8x128xf32>
    %128 = arith.addf %125, %127 : vector<8x128xf32>
    %cst_95 = arith.constant 0.000000e+00 : f32
    %129 = vector.broadcast %cst_95 : f32 to vector<8x128xf32>
    %130 = arith.maximumf %128, %129 : vector<8x128xf32>
    %131 = vector.shape_cast %130 : vector<8x128xf32> to vector<2x4x128xf32>
    %cst_96 = arith.constant dense<0xFF800000> : vector<2x128xf32>
    %132 = vector.multi_reduction <maximumf>, %131, %cst_96 [1] : vector<2x4x128xf32> to vector<2x128xf32>
    %cst_97 = arith.constant dense<0.000000e+00> : vector<2x128xf32>
    %133 = vector.multi_reduction <add>, %131, %cst_97 [1] : vector<2x4x128xf32> to vector<2x128xf32>
    %cst_98 = arith.constant 2.500000e-01 : f32
    %134 = vector.broadcast %cst_98 : f32 to vector<2x128xf32>
    %135 = arith.mulf %133, %134 : vector<2x128xf32>
    %c6 = arith.constant 6 : index
    %c0_99 = arith.constant 0 : index
    %c0_100 = arith.constant 0 : index
    %136 = vector.load %arg12[%c6, %c0_99, %c0_100] : memref<11x2x128xf32, #tpu.memory_space<vmem>>, vector<1x2x128xf32>
    %137 = vector.shape_cast %136 : vector<1x2x128xf32> to vector<2x128xf32>
    %138 = arith.mulf %132, %137 : vector<2x128xf32>
    %139 = arith.truncf %138 : vector<2x128xf32> to vector<2x128xbf16>
    %c6_101 = arith.constant 6 : index
    %c0_102 = arith.constant 0 : index
    %c0_103 = arith.constant 0 : index
    %140 = vector.load %arg13[%c6_101, %c0_102, %c0_103] : memref<11x128x128xbf16, #tpu.memory_space<vmem>>, vector<1x128x128xbf16>
    %141 = vector.shape_cast %140 : vector<1x128x128xbf16> to vector<128x128xbf16>
    %cst_104 = arith.constant dense<0.000000e+00> : vector<2x128xf32>
    %142 = tpu.matmul %139, %141, %cst_104 {dimension_numbers = #tpu.dot_dimension_numbers<[1], [0], [0], [1], [0, 0, 1, 1], [], []>} : vector<2x128xbf16>, vector<128x128xbf16>, vector<2x128xf32> -> vector<2x128xf32>
    %143 = arith.addf %119, %142 : vector<2x128xf32>
    %c7 = arith.constant 7 : index
    %c0_105 = arith.constant 0 : index
    %c0_106 = arith.constant 0 : index
    %144 = vector.load %arg12[%c7, %c0_105, %c0_106] : memref<11x2x128xf32, #tpu.memory_space<vmem>>, vector<1x2x128xf32>
    %145 = vector.shape_cast %144 : vector<1x2x128xf32> to vector<2x128xf32>
    %146 = arith.mulf %135, %145 : vector<2x128xf32>
    %147 = arith.truncf %146 : vector<2x128xf32> to vector<2x128xbf16>
    %c7_107 = arith.constant 7 : index
    %c0_108 = arith.constant 0 : index
    %c0_109 = arith.constant 0 : index
    %148 = vector.load %arg13[%c7_107, %c0_108, %c0_109] : memref<11x128x128xbf16, #tpu.memory_space<vmem>>, vector<1x128x128xbf16>
    %149 = vector.shape_cast %148 : vector<1x128x128xbf16> to vector<128x128xbf16>
    %cst_110 = arith.constant dense<0.000000e+00> : vector<2x128xf32>
    %150 = tpu.matmul %147, %149, %cst_110 {dimension_numbers = #tpu.dot_dimension_numbers<[1], [0], [0], [1], [0, 0, 1, 1], [], []>} : vector<2x128xbf16>, vector<128x128xbf16>, vector<2x128xf32> -> vector<2x128xf32>
    %151 = arith.addf %143, %150 : vector<2x128xf32>
    %c0_111 = arith.constant 0 : index
    %c0_112 = arith.constant 0 : index
    %152 = vector.load %arg7[%c0_111, %c0_112] : memref<2x8xbf16, #tpu.memory_space<vmem>>, vector<2x8xbf16>
    %cst_113 = arith.constant dense<0.000000e+00> : vector<2x128xf32>
    %153 = tpu.matmul %152, %122, %cst_113 {dimension_numbers = #tpu.dot_dimension_numbers<[1], [0], [0], [1], [0, 0, 1, 1], [], []>} : vector<2x8xbf16>, vector<8x128xbf16>, vector<2x128xf32> -> vector<2x128xf32>
    %154 = arith.truncf %153 : vector<2x128xf32> to vector<2x128xbf16>
    %c4_114 = arith.constant 4 : index
    %c0_115 = arith.constant 0 : index
    %c0_116 = arith.constant 0 : index
    %155 = vector.load %arg8[%c4_114, %c0_115, %c0_116] : memref<5x128x128xbf16, #tpu.memory_space<vmem>>, vector<1x128x128xbf16>
    %156 = vector.shape_cast %155 : vector<1x128x128xbf16> to vector<128x128xbf16>
    %cst_117 = arith.constant dense<0.000000e+00> : vector<2x128xf32>
    %157 = tpu.matmul %154, %156, %cst_117 {dimension_numbers = #tpu.dot_dimension_numbers<[1], [0], [0], [1], [0, 0, 1, 1], [], []>} : vector<2x128xbf16>, vector<128x128xbf16>, vector<2x128xf32> -> vector<2x128xf32>
    %c4_118 = arith.constant 4 : index
    %c0_119 = arith.constant 0 : index
    %158 = vector.load %arg9[%c4_118, %c0_119] : memref<5x128xf32, #tpu.memory_space<vmem>>, vector<1x128xf32>
    %159 = vector.broadcast %158 : vector<1x128xf32> to vector<2x128xf32>
    %160 = arith.addf %157, %159 : vector<2x128xf32>
    %cst_120 = arith.constant 0.000000e+00 : f32
    %161 = vector.broadcast %cst_120 : f32 to vector<2x128xf32>
    %162 = arith.maximumf %160, %161 : vector<2x128xf32>
    %c8 = arith.constant 8 : index
    %c0_121 = arith.constant 0 : index
    %c0_122 = arith.constant 0 : index
    %163 = vector.load %arg12[%c8, %c0_121, %c0_122] : memref<11x2x128xf32, #tpu.memory_space<vmem>>, vector<1x2x128xf32>
    %164 = vector.shape_cast %163 : vector<1x2x128xf32> to vector<2x128xf32>
    %165 = arith.mulf %162, %164 : vector<2x128xf32>
    %166 = arith.truncf %165 : vector<2x128xf32> to vector<2x128xbf16>
    %c8_123 = arith.constant 8 : index
    %c0_124 = arith.constant 0 : index
    %c0_125 = arith.constant 0 : index
    %167 = vector.load %arg13[%c8_123, %c0_124, %c0_125] : memref<11x128x128xbf16, #tpu.memory_space<vmem>>, vector<1x128x128xbf16>
    %168 = vector.shape_cast %167 : vector<1x128x128xbf16> to vector<128x128xbf16>
    %cst_126 = arith.constant dense<0.000000e+00> : vector<2x128xf32>
    %169 = tpu.matmul %166, %168, %cst_126 {dimension_numbers = #tpu.dot_dimension_numbers<[1], [0], [0], [1], [0, 0, 1, 1], [], []>} : vector<2x128xbf16>, vector<128x128xbf16>, vector<2x128xf32> -> vector<2x128xf32>
    %170 = arith.addf %151, %169 : vector<2x128xf32>
    %c9 = arith.constant 9 : index
    %c0_127 = arith.constant 0 : index
    %c0_128 = arith.constant 0 : index
    %171 = vector.load %arg12[%c9, %c0_127, %c0_128] : memref<11x2x128xf32, #tpu.memory_space<vmem>>, vector<1x2x128xf32>
    %172 = vector.shape_cast %171 : vector<1x2x128xf32> to vector<2x128xf32>
    %173 = arith.mulf %162, %172 : vector<2x128xf32>
    %174 = arith.truncf %173 : vector<2x128xf32> to vector<2x128xbf16>
    %c9_129 = arith.constant 9 : index
    %c0_130 = arith.constant 0 : index
    %c0_131 = arith.constant 0 : index
    %175 = vector.load %arg13[%c9_129, %c0_130, %c0_131] : memref<11x128x128xbf16, #tpu.memory_space<vmem>>, vector<1x128x128xbf16>
    %176 = vector.shape_cast %175 : vector<1x128x128xbf16> to vector<128x128xbf16>
    %cst_132 = arith.constant dense<0.000000e+00> : vector<2x128xf32>
    %177 = tpu.matmul %174, %176, %cst_132 {dimension_numbers = #tpu.dot_dimension_numbers<[1], [0], [0], [1], [0, 0, 1, 1], [], []>} : vector<2x128xbf16>, vector<128x128xbf16>, vector<2x128xf32> -> vector<2x128xf32>
    %178 = arith.addf %170, %177 : vector<2x128xf32>
    %179 = tpu.iota {dimensions = array<i32: 1>} : vector<2x128xi32>
    %c0_133 = arith.constant 0 : index
    %c0_134 = arith.constant 0 : index
    %c0_135 = arith.constant 0 : index
    %180 = vector.load %arg10[%c0_133, %c0_134, %c0_135] : memref<3x2x128xi32, #tpu.memory_space<vmem>>, vector<1x2x128xi32>
    %181 = vector.shape_cast %180 : vector<1x2x128xi32> to vector<2x128xi32>
    %182 = arith.cmpi eq, %179, %181 : vector<2x128xi32>
    %c1_136 = arith.constant 1 : index
    %c0_137 = arith.constant 0 : index
    %c0_138 = arith.constant 0 : index
    %183 = vector.load %arg10[%c1_136, %c0_137, %c0_138] : memref<3x2x128xi32, #tpu.memory_space<vmem>>, vector<1x2x128xi32>
    %184 = vector.shape_cast %183 : vector<1x2x128xi32> to vector<2x128xi32>
    %185 = arith.cmpi eq, %179, %184 : vector<2x128xi32>
    %186 = arith.ori %182, %185 : vector<2x128xi1>
    %c2_139 = arith.constant 2 : index
    %c0_140 = arith.constant 0 : index
    %c0_141 = arith.constant 0 : index
    %187 = vector.load %arg10[%c2_139, %c0_140, %c0_141] : memref<3x2x128xi32, #tpu.memory_space<vmem>>, vector<1x2x128xi32>
    %188 = vector.shape_cast %187 : vector<1x2x128xi32> to vector<2x128xi32>
    %189 = arith.cmpi eq, %179, %188 : vector<2x128xi32>
    %190 = arith.ori %186, %189 : vector<2x128xi1>
    %191 = arith.extui %190 : vector<2x128xi1> to vector<2x128xi32>
    %192 = arith.sitofp %191 : vector<2x128xi32> to vector<2x128xf32>
    %193 = arith.truncf %192 : vector<2x128xf32> to vector<2x128xbf16>
    %c0_142 = arith.constant 0 : index
    %c0_143 = arith.constant 0 : index
    %194 = vector.load %arg11[%c0_142, %c0_143] : memref<128x128xbf16, #tpu.memory_space<vmem>>, vector<128x128xbf16>
    %cst_144 = arith.constant dense<0.000000e+00> : vector<2x128xf32>
    %195 = tpu.matmul %193, %194, %cst_144 {dimension_numbers = #tpu.dot_dimension_numbers<[1], [0], [0], [1], [0, 0, 1, 1], [], []>} : vector<2x128xbf16>, vector<128x128xbf16>, vector<2x128xf32> -> vector<2x128xf32>
    %c10 = arith.constant 10 : index
    %c0_145 = arith.constant 0 : index
    %c0_146 = arith.constant 0 : index
    %196 = vector.load %arg12[%c10, %c0_145, %c0_146] : memref<11x2x128xf32, #tpu.memory_space<vmem>>, vector<1x2x128xf32>
    %197 = vector.shape_cast %196 : vector<1x2x128xf32> to vector<2x128xf32>
    %198 = arith.mulf %195, %197 : vector<2x128xf32>
    %199 = arith.truncf %198 : vector<2x128xf32> to vector<2x128xbf16>
    %c10_147 = arith.constant 10 : index
    %c0_148 = arith.constant 0 : index
    %c0_149 = arith.constant 0 : index
    %200 = vector.load %arg13[%c10_147, %c0_148, %c0_149] : memref<11x128x128xbf16, #tpu.memory_space<vmem>>, vector<1x128x128xbf16>
    %201 = vector.shape_cast %200 : vector<1x128x128xbf16> to vector<128x128xbf16>
    %cst_150 = arith.constant dense<0.000000e+00> : vector<2x128xf32>
    %202 = tpu.matmul %199, %201, %cst_150 {dimension_numbers = #tpu.dot_dimension_numbers<[1], [0], [0], [1], [0, 0, 1, 1], [], []>} : vector<2x128xbf16>, vector<128x128xbf16>, vector<2x128xf32> -> vector<2x128xf32>
    %203 = arith.addf %178, %202 : vector<2x128xf32>
    %c0_151 = arith.constant 0 : index
    %c0_152 = arith.constant 0 : index
    %204 = vector.load %arg14[%c0_151, %c0_152] : memref<1x128xf32, #tpu.memory_space<vmem>>, vector<1x128xf32>
    %205 = vector.broadcast %204 : vector<1x128xf32> to vector<2x128xf32>
    %206 = arith.addf %203, %205 : vector<2x128xf32>
    %c0_153 = arith.constant 0 : index
    %c0_154 = arith.constant 0 : index
    %207 = vector.load %arg15[%c0_153, %c0_154] : memref<2x128xf32, #tpu.memory_space<vmem>>, vector<2x128xf32>
    tpu.vector_store %arg15[%c0_153, %c0_154], %206 {strides = array<i32>} : memref<2x128xf32, #tpu.memory_space<vmem>>, vector<2x128xf32>,
    return
  }
  func.func @transform_0(%arg0: i32) -> (i32, i32) {
    %c0_i32 = arith.constant 0 : i32
    %c0_i32_0 = arith.constant 0 : i32
    %c0_i32_1 = arith.constant 0 : i32
    return %c0_i32, %c0_i32_0 : i32, i32
  }
  func.func @transform_1(%arg0: i32) -> (i32, i32) {
    %c0_i32 = arith.constant 0 : i32
    %c0_i32_0 = arith.constant 0 : i32
    %c0_i32_1 = arith.constant 0 : i32
    return %c0_i32, %c0_i32_0 : i32, i32
  }
  func.func @transform_2(%arg0: i32) -> (i32, i32) {
    %c0_i32 = arith.constant 0 : i32
    %c0_i32_0 = arith.constant 0 : i32
    %c0_i32_1 = arith.constant 0 : i32
    return %c0_i32, %c0_i32_0 : i32, i32
  }
  func.func @transform_3(%arg0: i32) -> (i32, i32) {
    %c0_i32 = arith.constant 0 : i32
    %c0_i32_0 = arith.constant 0 : i32
    %c0_i32_1 = arith.constant 0 : i32
    return %c0_i32, %c0_i32_0 : i32, i32
  }
  func.func @transform_4(%arg0: i32) -> (i32, i32) {
    %c0_i32 = arith.constant 0 : i32
    %c0_i32_0 = arith.constant 0 : i32
    %c0_i32_1 = arith.constant 0 : i32
    return %c0_i32, %c0_i32_0 : i32, i32
  }
  func.func @transform_5(%arg0: i32) -> (i32, i32) {
    %c0_i32 = arith.constant 0 : i32
    %c0_i32_0 = arith.constant 0 : i32
    %c0_i32_1 = arith.constant 0 : i32
    return %c0_i32, %c0_i32_0 : i32, i32
  }
  func.func @transform_6(%arg0: i32) -> (i32, i32) {
    %c0_i32 = arith.constant 0 : i32
    %c0_i32_0 = arith.constant 0 : i32
    %c0_i32_1 = arith.constant 0 : i32
    return %c0_i32, %c0_i32_0 : i32, i32
  }
  func.func @transform_7(%arg0: i32) -> (i32, i32, i32) {
    %c0_i32 = arith.constant 0 : i32
    %c0_i32_0 = arith.constant 0 : i32
    %c0_i32_1 = arith.constant 0 : i32
    %c0_i32_2 = arith.constant 0 : i32
    return %c0_i32, %c0_i32_0, %c0_i32_1 : i32, i32, i32
  }
  func.func @transform_8(%arg0: i32) -> (i32, i32) {
    %c0_i32 = arith.constant 0 : i32
    %c0_i32_0 = arith.constant 0 : i32
    %c0_i32_1 = arith.constant 0 : i32
    return %c0_i32, %c0_i32_0 : i32, i32
  }
  func.func @transform_9(%arg0: i32) -> (i32, i32, i32) {
    %c0_i32 = arith.constant 0 : i32
    %c0_i32_0 = arith.constant 0 : i32
    %c0_i32_1 = arith.constant 0 : i32
    %c0_i32_2 = arith.constant 0 : i32
    return %c0_i32, %c0_i32_0, %c0_i32_1 : i32, i32, i32
  }
  func.func @transform_10(%arg0: i32) -> (i32, i32) {
    %c0_i32 = arith.constant 0 : i32
    %c0_i32_0 = arith.constant 0 : i32
    %c0_i32_1 = arith.constant 0 : i32
    return %c0_i32, %c0_i32_0 : i32, i32
  }
  func.func @transform_11(%arg0: i32) -> (i32, i32, i32) {
    %c0_i32 = arith.constant 0 : i32
    %c0_i32_0 = arith.constant 0 : i32
    %c0_i32_1 = arith.constant 0 : i32
    %c0_i32_2 = arith.constant 0 : i32
    return %c0_i32, %c0_i32_0, %c0_i32_1 : i32, i32, i32
  }
  func.func @transform_12(%arg0: i32) -> (i32, i32, i32) {
    %c0_i32 = arith.constant 0 : i32
    %c0_i32_0 = arith.constant 0 : i32
    %c0_i32_1 = arith.constant 0 : i32
    %c0_i32_2 = arith.constant 0 : i32
    return %c0_i32, %c0_i32_0, %c0_i32_1 : i32, i32, i32
  }
  func.func @transform_13(%arg0: i32) -> (i32, i32) {
    %c0_i32 = arith.constant 0 : i32
    %c0_i32_0 = arith.constant 0 : i32
    %c0_i32_1 = arith.constant 0 : i32
    return %c0_i32, %c0_i32_0 : i32, i32
  }
  func.func @transform_14(%arg0: i32) -> (i32, i32) {
    %c0_i32 = arith.constant 0 : i32
    %c0_i32_0 = arith.constant 0 : i32
    %c0_i32_1 = arith.constant 0 : i32
    return %c0_i32, %c0_i32_0 : i32, i32
  }
}

</mosaic_0001>

<llo_original>
// kernel: _forward_core.1
$region0: #{_forward_core.1}
  #allocation0 [shape = 'u32[]', space=smem, size = 0x4, offset = 0x4, fixed_abs, tag = 'smem constant byte address 0x4 - core index']
  #allocation1 [shape = 'u32[144,128]{1,0:T(1,128)}', space=vmem, size = 0x12000, scoped, tag = 'internal scratch']
  %s0 = inlined_call_operand.vmem [shape: bf16[512,128], index: 0, kind: input, shape index: {}]
  %s1 = inlined_call_operand.vmem [shape: bf16[128,128], index: 1, kind: input, shape index: {}]
  %s2 = inlined_call_operand.vmem [shape: f32[1,128], index: 2, kind: input, shape index: {}]
  %s3 = inlined_call_operand.vmem [shape: bf16[128,512], index: 3, kind: input, shape index: {}]
  %s4 = inlined_call_operand.vmem [shape: bf16[32,128], index: 4, kind: input, shape index: {}]
  %s5 = inlined_call_operand.vmem [shape: bf16[8,32], index: 5, kind: input, shape index: {}]
  %s6 = inlined_call_operand.vmem [shape: bf16[2,8], index: 6, kind: input, shape index: {}]
  %s7 = inlined_call_operand.vmem [shape: bf16[5,128,128], index: 7, kind: input, shape index: {}]
  %s8 = inlined_call_operand.vmem [shape: f32[5,128], index: 8, kind: input, shape index: {}]
  %s9 = inlined_call_operand.vmem [shape: s32[3,2,128], index: 9, kind: input, shape index: {}]
  %s10 = inlined_call_operand.vmem [shape: bf16[128,128], index: 10, kind: input, shape index: {}]
  %s11 = inlined_call_operand.vmem [shape: f32[11,2,128], index: 11, kind: input, shape index: {}]
  %s12 = inlined_call_operand.vmem [shape: bf16[11,128,128], index: 12, kind: input, shape index: {}]
  %s13 = inlined_call_operand.vmem [shape: f32[1,128], index: 13, kind: input, shape index: {}]
  %s14 = inlined_call_operand.hbm [shape: f32[2,128], index: 14, kind: output, shape index: {}]
  %s15 = sld [smem:[#allocation0]]
  $region66: #{_forward_core.1} parent=0
    _
  %s17 = ssub.s32 1, %s15
  %s18 = scalar_select 0, %s17, %s15
  $region1: #{_forward_core.1} parent=0
    #allocation2 [shape = 'u8[1024]{0}', space=vmem, size = 0x400, scoped, tag = 'output window, operand 0, single buffered']
    #allocation3 [shape = 's32[1]{0}', space=sflag, size = 0x4, scoped, tag = 'scoped memory for _forward_core.1']
    %19 = vsyncpa [#allocation3], 0
    // Predicated region
    $region2: #{_forward_core.1} parent=1 // pred_check
      _
    $region3: #{_forward_core.1} parent=1 // pred_check_branch
      %21 = sbr.rel (0) target = $region5
    $region4: #{_forward_core.1} parent=1 // pred_region
      _
    $region5: #{_forward_core.1} parent=1 // pred_fallthru
      _
    // Predicated region
    $region6: #{_forward_core.1} parent=1 // pred_check
      _
    $region7: #{_forward_core.1} parent=1 // pred_check_branch
      %23 = sbr.rel (0) target = $region9
    $region8: #{_forward_core.1} parent=1 // pred_region
      _
    $region9: #{_forward_core.1} parent=1 // pred_fallthru
      _
    // Predicated region
    $region10: #{_forward_core.1} parent=1 // pred_check
      _
    $region11: #{_forward_core.1} parent=1 // pred_check_branch
      %25 = sbr.rel (0) target = $region13
    $region12: #{_forward_core.1} parent=1 // pred_region
      _
    $region13: #{_forward_core.1} parent=1 // pred_fallthru
      _
    // Predicated region
    $region14: #{_forward_core.1} parent=1 // pred_check
      _
    $region15: #{_forward_core.1} parent=1 // pred_check_branch
      %27 = sbr.rel (0) target = $region17
    $region16: #{_forward_core.1} parent=1 // pred_region
      _
    $region17: #{_forward_core.1} parent=1 // pred_fallthru
      _
    // Predicated region
    $region18: #{_forward_core.1} parent=1 // pred_check
      _
    $region19: #{_forward_core.1} parent=1 // pred_check_branch
      %29 = sbr.rel (0) target = $region21
    $region20: #{_forward_core.1} parent=1 // pred_region
      _
    $region21: #{_forward_core.1} parent=1 // pred_fallthru
      _
    // Predicated region
    $region22: #{_forward_core.1} parent=1 // pred_check
      _
    $region23: #{_forward_core.1} parent=1 // pred_check_branch
      %31 = sbr.rel (0) target = $region25
    $region24: #{_forward_core.1} parent=1 // pred_region
      _
    $region25: #{_forward_core.1} parent=1 // pred_fallthru
      _
    // Predicated region
    $region26: #{_forward_core.1} parent=1 // pred_check
      _
    $region27: #{_forward_core.1} parent=1 // pred_check_branch
      %33 = sbr.rel (0) target = $region29
    $region28: #{_forward_core.1} parent=1 // pred_region
      _
    $region29: #{_forward_core.1} parent=1 // pred_fallthru
      _
    // Predicated region
    $region30: #{_forward_core.1} parent=1 // pred_check
      _
    $region31: #{_forward_core.1} parent=1 // pred_check_branch
      %35 = sbr.rel (0) target = $region33
    $region32: #{_forward_core.1} parent=1 // pred_region
      _
    $region33: #{_forward_core.1} parent=1 // pred_fallthru
      _
    // Predicated region
    $region34: #{_forward_core.1} parent=1 // pred_check
      _
    $region35: #{_forward_core.1} parent=1 // pred_check_branch
      %37 = sbr.rel (0) target = $region37
    $region36: #{_forward_core.1} parent=1 // pred_region
      _
    $region37: #{_forward_core.1} parent=1 // pred_fallthru
      _
    // Predicated region
    $region38: #{_forward_core.1} parent=1 // pred_check
      _
    $region39: #{_forward_core.1} parent=1 // pred_check_branch
      %39 = sbr.rel (0) target = $region41
    $region40: #{_forward_core.1} parent=1 // pred_region
      _
    $region41: #{_forward_core.1} parent=1 // pred_fallthru
      _
    // Predicated region
    $region42: #{_forward_core.1} parent=1 // pred_check
      _
    $region43: #{_forward_core.1} parent=1 // pred_check_branch
      %41 = sbr.rel (0) target = $region45
    $region44: #{_forward_core.1} parent=1 // pred_region
      _
    $region45: #{_forward_core.1} parent=1 // pred_fallthru
      _
    // Predicated region
    $region46: #{_forward_core.1} parent=1 // pred_check
      _
    $region47: #{_forward_core.1} parent=1 // pred_check_branch
      %43 = sbr.rel (0) target = $region49
    $region48: #{_forward_core.1} parent=1 // pred_region
      _
    $region49: #{_forward_core.1} parent=1 // pred_fallthru
      _
    // Predicated region
    $region50: #{_forward_core.1} parent=1 // pred_check
      _
    $region51: #{_forward_core.1} parent=1 // pred_check_branch
      %45 = sbr.rel (0) target = $region53
    $region52: #{_forward_core.1} parent=1 // pred_region
      _
    $region53: #{_forward_core.1} parent=1 // pred_fallthru
      _
    // Predicated region
    $region54: #{_forward_core.1} parent=1 // pred_check
      _
    $region55: #{_forward_core.1} parent=1 // pred_check_branch
      %47 = sbr.rel (0) target = $region57
    $region56: #{_forward_core.1} parent=1 // pred_region
      _
    $region57: #{_forward_core.1} parent=1 // pred_fallthru
      _
    %v49 = vld [vmem:[%s0] sm:$0xf]
    %v50 = vld [vmem:[%s0 + $0x4] sm:$0xf]
    %v51 = vld [vmem:[%s0 + $0x8] sm:$0xf]
    %v52 = vld [vmem:[%s0 + $0xc] sm:$0xf]
    %v53 = vld [vmem:[%s0 + $0x10] sm:$0xf]
    %v54 = vld [vmem:[%s0 + $0x14] sm:$0xf]
    %v55 = vld [vmem:[%s0 + $0x18] sm:$0xf]
    %v56 = vld [vmem:[%s0 + $0x1c] sm:$0xf]
    %v57 = vld [vmem:[%s0 + $0x20] sm:$0xf]
    %v58 = vld [vmem:[%s0 + $0x24] sm:$0xf]
    %v59 = vld [vmem:[%s0 + $0x28] sm:$0xf]
    %v60 = vld [vmem:[%s0 + $0x2c] sm:$0xf]
    %v61 = vld [vmem:[%s0 + $0x30] sm:$0xf]
    %v62 = vld [vmem:[%s0 + $0x34] sm:$0xf]
    %v63 = vld [vmem:[%s0 + $0x38] sm:$0xf]
    %v64 = vld [vmem:[%s0 + $0x3c] sm:$0xf]
    %v65 = vld [vmem:[%s0 + $0x40] sm:$0xf]
    %v66 = vld [vmem:[%s0 + $0x44] sm:$0xf]
    %v67 = vld [vmem:[%s0 + $0x48] sm:$0xf]
    %v68 = vld [vmem:[%s0 + $0x4c] sm:$0xf]
    %v69 = vld [vmem:[%s0 + $0x50] sm:$0xf]
    %v70 = vld [vmem:[%s0 + $0x54] sm:$0xf]
    %v71 = vld [vmem:[%s0 + $0x58] sm:$0xf]
    %v72 = vld [vmem:[%s0 + $0x5c] sm:$0xf]
    %v73 = vld [vmem:[%s0 + $0x60] sm:$0xf]
    %v74 = vld [vmem:[%s0 + $0x64] sm:$0xf]
    %v75 = vld [vmem:[%s0 + $0x68] sm:$0xf]
    %v76 = vld [vmem:[%s0 + $0x6c] sm:$0xf]
    %v77 = vld [vmem:[%s0 + $0x70] sm:$0xf]
    %v78 = vld [vmem:[%s0 + $0x74] sm:$0xf]
    %v79 = vld [vmem:[%s0 + $0x78] sm:$0xf]
    %v80 = vld [vmem:[%s0 + $0x7c] sm:$0xf]
    %v81 = vld [vmem:[%s0 + $0x80] sm:$0xf]
    %v82 = vld [vmem:[%s0 + $0x84] sm:$0xf]
    %v83 = vld [vmem:[%s0 + $0x88] sm:$0xf]
    %v84 = vld [vmem:[%s0 + $0x8c] sm:$0xf]
    %v85 = vld [vmem:[%s0 + $0x90] sm:$0xf]
    %v86 = vld [vmem:[%s0 + $0x94] sm:$0xf]
    %v87 = vld [vmem:[%s0 + $0x98] sm:$0xf]
    %v88 = vld [vmem:[%s0 + $0x9c] sm:$0xf]
    %v89 = vld [vmem:[%s0 + $0xa0] sm:$0xf]
    %v90 = vld [vmem:[%s0 + $0xa4] sm:$0xf]
    %v91 = vld [vmem:[%s0 + $0xa8] sm:$0xf]
    %v92 = vld [vmem:[%s0 + $0xac] sm:$0xf]
    %v93 = vld [vmem:[%s0 + $0xb0] sm:$0xf]
    %v94 = vld [vmem:[%s0 + $0xb4] sm:$0xf]
    %v95 = vld [vmem:[%s0 + $0xb8] sm:$0xf]
    %v96 = vld [vmem:[%s0 + $0xbc] sm:$0xf]
    %v97 = vld [vmem:[%s0 + $0xc0] sm:$0xf]
    %v98 = vld [vmem:[%s0 + $0xc4] sm:$0xf]
    %v99 = vld [vmem:[%s0 + $0xc8] sm:$0xf]
    %v100 = vld [vmem:[%s0 + $0xcc] sm:$0xf]
    %v101 = vld [vmem:[%s0 + $0xd0] sm:$0xf]
    %v102 = vld [vmem:[%s0 + $0xd4] sm:$0xf]
    %v103 = vld [vmem:[%s0 + $0xd8] sm:$0xf]
    %v104 = vld [vmem:[%s0 + $0xdc] sm:$0xf]
    %v105 = vld [vmem:[%s0 + $0xe0] sm:$0xf]
    %v106 = vld [vmem:[%s0 + $0xe4] sm:$0xf]
    %v107 = vld [vmem:[%s0 + $0xe8] sm:$0xf]
    %v108 = vld [vmem:[%s0 + $0xec] sm:$0xf]
    %v109 = vld [vmem:[%s0 + $0xf0] sm:$0xf]
    %v110 = vld [vmem:[%s0 + $0xf4] sm:$0xf]
    %v111 = vld [vmem:[%s0 + $0xf8] sm:$0xf]
    %v112 = vld [vmem:[%s0 + $0xfc] sm:$0xf]
    %v113 = vld [vmem:[%s1] sm:$0xf]
    %v114 = vld [vmem:[%s1 + $0x4] sm:$0xf]
    %v115 = vld [vmem:[%s1 + $0x8] sm:$0xf]
    %v116 = vld [vmem:[%s1 + $0xc] sm:$0xf]
    %v117 = vld [vmem:[%s1 + $0x10] sm:$0xf]
    %v118 = vld [vmem:[%s1 + $0x14] sm:$0xf]
    %v119 = vld [vmem:[%s1 + $0x18] sm:$0xf]
    %v120 = vld [vmem:[%s1 + $0x1c] sm:$0xf]
    %v121 = vld [vmem:[%s1 + $0x20] sm:$0xf]
    %v122 = vld [vmem:[%s1 + $0x24] sm:$0xf]
    %v123 = vld [vmem:[%s1 + $0x28] sm:$0xf]
    %v124 = vld [vmem:[%s1 + $0x2c] sm:$0xf]
    %v125 = vld [vmem:[%s1 + $0x30] sm:$0xf]
    %v126 = vld [vmem:[%s1 + $0x34] sm:$0xf]
    %v127 = vld [vmem:[%s1 + $0x38] sm:$0xf]
    %v128 = vld [vmem:[%s1 + $0x3c] sm:$0xf]
    %v129 = vld [vmem:[%s2] sm:$0x1]
    %v131 = vlaneseq
    %v132 = vshrl.u32 %v131, 7
    %v133 = vsub.s32 0, %v132
    %v134 = vrot.slane %v129, %v133
    %v200 = vunpack.c.l.b16 %v49
    %v201 = vunpack.c.l.b16 %v50
    %v202 = vunpack.c.l.b16 %v51
    %v203 = vunpack.c.l.b16 %v52
    %v204 = vunpack.c.l.b16 %v53
    %v205 = vunpack.c.l.b16 %v54
    %v206 = vunpack.c.l.b16 %v55
    %v207 = vunpack.c.l.b16 %v56
    %v208 = vunpack.c.l.b16 %v57
    %v209 = vunpack.c.l.b16 %v58
    %v210 = vunpack.c.l.b16 %v59
    %v211 = vunpack.c.l.b16 %v60
    %v212 = vunpack.c.l.b16 %v61
    %v213 = vunpack.c.l.b16 %v62
    %v214 = vunpack.c.l.b16 %v63
    %v215 = vunpack.c.l.b16 %v64
    %v216 = vunpack.c.l.b16 %v65
    %v217 = vunpack.c.l.b16 %v66
    %v218 = vunpack.c.l.b16 %v67
    %v219 = vunpack.c.l.b16 %v68
    %v220 = vunpack.c.l.b16 %v69
    %v221 = vunpack.c.l.b16 %v70
    %v222 = vunpack.c.l.b16 %v71
    %v223 = vunpack.c.l.b16 %v72
    %v224 = vunpack.c.l.b16 %v73
    %v225 = vunpack.c.l.b16 %v74
    %v226 = vunpack.c.l.b16 %v75
    %v227 = vunpack.c.l.b16 %v76
    %v228 = vunpack.c.l.b16 %v77
    %v229 = vunpack.c.l.b16 %v78
    %v230 = vunpack.c.l.b16 %v79
    %v231 = vunpack.c.l.b16 %v80
    %v232 = vunpack.c.l.b16 %v81
    %v233 = vunpack.c.l.b16 %v82
    %v234 = vunpack.c.l.b16 %v83
    %v235 = vunpack.c.l.b16 %v84
    %v236 = vunpack.c.l.b16 %v85
    %v237 = vunpack.c.l.b16 %v86
    %v238 = vunpack.c.l.b16 %v87
    %v239 = vunpack.c.l.b16 %v88
    %v240 = vunpack.c.l.b16 %v89
    %v241 = vunpack.c.l.b16 %v90
    %v242 = vunpack.c.l.b16 %v91
    %v243 = vunpack.c.l.b16 %v92
    %v244 = vunpack.c.l.b16 %v93
    %v245 = vunpack.c.l.b16 %v94
    %v246 = vunpack.c.l.b16 %v95
    %v247 = vunpack.c.l.b16 %v96
    %v248 = vunpack.c.l.b16 %v97
    %v249 = vunpack.c.l.b16 %v98
    %v250 = vunpack.c.l.b16 %v99
    %v251 = vunpack.c.l.b16 %v100
    %v252 = vunpack.c.l.b16 %v101
    %v253 = vunpack.c.l.b16 %v102
    %v254 = vunpack.c.l.b16 %v103
    %v255 = vunpack.c.l.b16 %v104
    %v256 = vunpack.c.l.b16 %v105
    %v257 = vunpack.c.l.b16 %v106
    %v258 = vunpack.c.l.b16 %v107
    %v259 = vunpack.c.l.b16 %v108
    %v260 = vunpack.c.l.b16 %v109
    %v261 = vunpack.c.l.b16 %v110
    %v262 = vunpack.c.l.b16 %v111
    %v263 = vunpack.c.l.b16 %v112
    %v264 = vpack.c.b16 %v201, %v200
    %v265 = vpack.c.b16 %v203, %v202
    %v266 = vpack.c.b16 %v205, %v204
    %v267 = vpack.c.b16 %v207, %v206
    %v268 = vpack.c.b16 %v209, %v208
    %v269 = vpack.c.b16 %v211, %v210
    %v270 = vpack.c.b16 %v213, %v212
    %v271 = vpack.c.b16 %v215, %v214
    %v272 = vpack.c.b16 %v217, %v216
    %v273 = vpack.c.b16 %v219, %v218
    %v274 = vpack.c.b16 %v221, %v220
    %v275 = vpack.c.b16 %v223, %v222
    %v276 = vpack.c.b16 %v225, %v224
    %v277 = vpack.c.b16 %v227, %v226
    %v278 = vpack.c.b16 %v229, %v228
    %v279 = vpack.c.b16 %v231, %v230
    %v280 = vpack.c.b16 %v233, %v232
    %v281 = vpack.c.b16 %v235, %v234
    %v282 = vpack.c.b16 %v237, %v236
    %v283 = vpack.c.b16 %v239, %v238
    %v284 = vpack.c.b16 %v241, %v240
    %v285 = vpack.c.b16 %v243, %v242
    %v286 = vpack.c.b16 %v245, %v244
    %v287 = vpack.c.b16 %v247, %v246
    %v288 = vpack.c.b16 %v249, %v248
    %v289 = vpack.c.b16 %v251, %v250
    %v290 = vpack.c.b16 %v253, %v252
    %v291 = vpack.c.b16 %v255, %v254
    %v292 = vpack.c.b16 %v257, %v256
    %v293 = vpack.c.b16 %v259, %v258
    %v294 = vpack.c.b16 %v261, %v260
    %v295 = vpack.c.b16 %v263, %v262
    %v344 = vunpack.c.l.b16 %v113
    %v345 = vunpack.c.l.b16 %v114
    %v346 = vunpack.c.l.b16 %v115
    %v347 = vunpack.c.l.b16 %v116
    %v348 = vunpack.c.l.b16 %v117
    %v349 = vunpack.c.l.b16 %v118
    %v350 = vunpack.c.l.b16 %v119
    %v351 = vunpack.c.l.b16 %v120
    %v352 = vunpack.c.l.b16 %v121
    %v353 = vunpack.c.l.b16 %v122
    %v354 = vunpack.c.l.b16 %v123
    %v355 = vunpack.c.l.b16 %v124
    %v356 = vunpack.c.l.b16 %v125
    %v357 = vunpack.c.l.b16 %v126
    %v358 = vunpack.c.l.b16 %v127
    %v359 = vunpack.c.l.b16 %v128
    %v360 = vpack.c.b16 %v345, %v344
    %v361 = vpack.c.b16 %v347, %v346
    %v362 = vpack.c.b16 %v349, %v348
    %v363 = vpack.c.b16 %v351, %v350
    %v364 = vpack.c.b16 %v353, %v352
    %v365 = vpack.c.b16 %v355, %v354
    %v366 = vpack.c.b16 %v357, %v356
    %v367 = vpack.c.b16 %v359, %v358
    %376 = vmatprep.subr.bf16.mxu0 0
    %377 = vmatpush1.bf16.msra.mxu0 %v360
    %378 = vmatprep.subr.bf16.mxu0 0
    %379 = vmatpush1.bf16.msra.mxu0 %v361
    %380 = vmatprep.subr.bf16.mxu0 0
    %381 = vmatpush1.bf16.msra.mxu0 %v362
    %382 = vmatprep.subr.bf16.mxu0 0
    %383 = vmatpush1.bf16.msra.mxu0 %v363
    %384 = vmatprep.subr.bf16.mxu0 0
    %385 = vmatpush1.bf16.msra.mxu0 %v364
    %386 = vmatprep.subr.bf16.mxu0 0
    %387 = vmatpush1.bf16.msra.mxu0 %v365
    %388 = vmatprep.subr.bf16.mxu0 0
    %389 = vmatpush1.bf16.msra.mxu0 %v366
    %390 = vmatprep.subr.bf16.mxu0 0
    %391 = vmatpush1.bf16.msra.mxu0 %v367
    %392 = vmatprep.subr.bf16.mxu0 0
    %393 = vmatpush1.bf16.msra.mxu0 0
    %394 = vmatprep.subr.bf16.mxu0 0
    %395 = vmatpush1.bf16.msra.mxu0 0
    %396 = vmatprep.subr.bf16.mxu0 0
    %397 = vmatpush1.bf16.msra.mxu0 0
    %398 = vmatprep.subr.bf16.mxu0 0
    %399 = vmatpush1.bf16.msra.mxu0 0
    %400 = vmatprep.subr.bf16.mxu0 0
    %401 = vmatpush1.bf16.msra.mxu0 0
    %402 = vmatprep.subr.bf16.mxu0 0
    %403 = vmatpush1.bf16.msra.mxu0 0
    %404 = vmatprep.subr.bf16.mxu0 0
    %405 = vmatpush1.bf16.msra.mxu0 0
    %406 = vmatprep.subr.bf16.mxu0 0
    %407 = vmatpush1.bf16.msra.mxu0 0
    %408 = vmatprep.mubr.bf16.mxu0 0
    %409 = vmatmul.mubr.bf16.gmra.mrb[0].mxu0 %v264
    %v410 = vpop.f32.mrb[0].mxu0
    %v411 = vadd.f32 %v134, %v410
    %v412 = vpop.f32.mrb[0].mxu0
    %v413 = vpop.f32.mrb[0].mxu0
    %v414 = vadd.f32 %v134, %v413
    %v415 = vpop.f32.mrb[0].mxu0
    %416 = vmatprep.mubr.bf16.mxu0 0
    %417 = vmatmul.mubr.bf16.gmra.mrb[0].mxu0 %v265
    %v418 = vpop.f32.mrb[0].mxu0
    %v419 = vadd.f32 %v134, %v418
    %v420 = vpop.f32.mrb[0].mxu0
    %v421 = vpop.f32.mrb[0].mxu0
    %v422 = vadd.f32 %v134, %v421
    %v423 = vpop.f32.mrb[0].mxu0
    %424 = vmatprep.mubr.bf16.mxu0 0
    %425 = vmatmul.mubr.bf16.gmra.mrb[0].mxu0 %v266
    %v426 = vpop.f32.mrb[0].mxu0
    %v427 = vadd.f32 %v134, %v426
    %v428 = vpop.f32.mrb[0].mxu0
    %v429 = vpop.f32.mrb[0].mxu0
    %v430 = vadd.f32 %v134, %v429
    %v431 = vpop.f32.mrb[0].mxu0
    %432 = vmatprep.mubr.bf16.mxu0 0
    %433 = vmatmul.mubr.bf16.gmra.mrb[0].mxu0 %v267
    %v434 = vpop.f32.mrb[0].mxu0
    %v435 = vadd.f32 %v134, %v434
    %v436 = vpop.f32.mrb[0].mxu0
    %v437 = vpop.f32.mrb[0].mxu0
    %v438 = vadd.f32 %v134, %v437
    %v439 = vpop.f32.mrb[0].mxu0
    %440 = vmatprep.mubr.bf16.mxu0 0
    %441 = vmatmul.mubr.bf16.gmra.mrb[0].mxu0 %v268
    %v442 = vpop.f32.mrb[0].mxu0
    %v443 = vadd.f32 %v134, %v442
    %v444 = vpop.f32.mrb[0].mxu0
    %v445 = vpop.f32.mrb[0].mxu0
    %v446 = vadd.f32 %v134, %v445
    %v447 = vpop.f32.mrb[0].mxu0
    %448 = vmatprep.mubr.bf16.mxu0 0
    %449 = vmatmul.mubr.bf16.gmra.mrb[0].mxu0 %v269
    %v450 = vpop.f32.mrb[0].mxu0
    %v451 = vadd.f32 %v134, %v450
    %v452 = vpop.f32.mrb[0].mxu0
    %v453 = vpop.f32.mrb[0].mxu0
    %v454 = vadd.f32 %v134, %v453
    %v455 = vpop.f32.mrb[0].mxu0
    %456 = vmatprep.mubr.bf16.mxu0 0
    %457 = vmatmul.mubr.bf16.gmra.mrb[0].mxu0 %v270
    %v458 = vpop.f32.mrb[0].mxu0
    %v459 = vadd.f32 %v134, %v458
    %v460 = vpop.f32.mrb[0].mxu0
    %v461 = vpop.f32.mrb[0].mxu0
    %v462 = vadd.f32 %v134, %v461
    %v463 = vpop.f32.mrb[0].mxu0
    %464 = vmatprep.mubr.bf16.mxu0 0
    %465 = vmatmul.mubr.bf16.gmra.mrb[0].mxu0 %v271
    %v466 = vpop.f32.mrb[0].mxu0
    %v467 = vadd.f32 %v134, %v466
    %v468 = vpop.f32.mrb[0].mxu0
    %v469 = vpop.f32.mrb[0].mxu0
    %v470 = vadd.f32 %v134, %v469
    %v471 = vpop.f32.mrb[0].mxu0
    %472 = vmatprep.mubr.bf16.mxu0 0
    %473 = vmatmul.mubr.bf16.gmra.mrb[0].mxu0 %v272
    %v474 = vpop.f32.mrb[0].mxu0
    %v475 = vadd.f32 %v134, %v474
    %v476 = vpop.f32.mrb[0].mxu0
    %v477 = vpop.f32.mrb[0].mxu0
    %v478 = vadd.f32 %v134, %v477
    %v479 = vpop.f32.mrb[0].mxu0
    %480 = vmatprep.mubr.bf16.mxu0 0
    %481 = vmatmul.mubr.bf16.gmra.mrb[0].mxu0 %v273
    %v482 = vpop.f32.mrb[0].mxu0
    %v483 = vadd.f32 %v134, %v482
    %v484 = vpop.f32.mrb[0].mxu0
    %v485 = vpop.f32.mrb[0].mxu0
    %v486 = vadd.f32 %v134, %v485
    %v487 = vpop.f32.mrb[0].mxu0
    %488 = vmatprep.mubr.bf16.mxu0 0
    %489 = vmatmul.mubr.bf16.gmra.mrb[0].mxu0 %v274
    %v490 = vpop.f32.mrb[0].mxu0
    %v491 = vadd.f32 %v134, %v490
    %v492 = vpop.f32.mrb[0].mxu0
    %v493 = vpop.f32.mrb[0].mxu0
    %v494 = vadd.f32 %v134, %v493
    %v495 = vpop.f32.mrb[0].mxu0
    %496 = vmatprep.mubr.bf16.mxu0 0
    %497 = vmatmul.mubr.bf16.gmra.mrb[0].mxu0 %v275
    %v498 = vpop.f32.mrb[0].mxu0
    %v499 = vadd.f32 %v134, %v498
    %v500 = vpop.f32.mrb[0].mxu0
    %v501 = vpop.f32.mrb[0].mxu0
    %v502 = vadd.f32 %v134, %v501
    %v503 = vpop.f32.mrb[0].mxu0
    %504 = vmatprep.mubr.bf16.mxu0 0
    %505 = vmatmul.mubr.bf16.gmra.mrb[0].mxu0 %v276
    %v506 = vpop.f32.mrb[0].mxu0
    %v507 = vadd.f32 %v134, %v506
    %v508 = vpop.f32.mrb[0].mxu0
    %v509 = vpop.f32.mrb[0].mxu0
    %v510 = vadd.f32 %v134, %v509
    %v511 = vpop.f32.mrb[0].mxu0
    %512 = vmatprep.mubr.bf16.mxu0 0
    %513 = vmatmul.mubr.bf16.gmra.mrb[0].mxu0 %v277
    %v514 = vpop.f32.mrb[0].mxu0
    %v515 = vadd.f32 %v134, %v514
    %v516 = vpop.f32.mrb[0].mxu0
    %v517 = vpop.f32.mrb[0].mxu0
    %v518 = vadd.f32 %v134, %v517
    %v519 = vpop.f32.mrb[0].mxu0
    %520 = vmatprep.mubr.bf16.mxu0 0
    %521 = vmatmul.mubr.bf16.gmra.mrb[0].mxu0 %v278
    %v522 = vpop.f32.mrb[0].mxu0
    %v523 = vadd.f32 %v134, %v522
    %v524 = vpop.f32.mrb[0].mxu0
    %v525 = vpop.f32.mrb[0].mxu0
    %v526 = vadd.f32 %v134, %v525
    %v527 = vpop.f32.mrb[0].mxu0
    %528 = vmatprep.mubr.bf16.mxu0 0
    %529 = vmatmul.mubr.bf16.gmra.mrb[0].mxu0 %v279
    %v530 = vpop.f32.mrb[0].mxu0
    %v531 = vadd.f32 %v134, %v530
    %v532 = vpop.f32.mrb[0].mxu0
    %v533 = vpop.f32.mrb[0].mxu0
    %v534 = vadd.f32 %v134, %v533
    %v535 = vpop.f32.mrb[0].mxu0
    %536 = vmatprep.mubr.bf16.mxu0 0
    %537 = vmatmul.mubr.bf16.gmra.mrb[0].mxu0 %v280
    %v538 = vpop.f32.mrb[0].mxu0
    %v539 = vadd.f32 %v134, %v538
    %v540 = vpop.f32.mrb[0].mxu0
    %v541 = vpop.f32.mrb[0].mxu0
    %v542 = vadd.f32 %v134, %v541
    %v543 = vpop.f32.mrb[0].mxu0
    %544 = vmatprep.mubr.bf16.mxu0 0
    %545 = vmatmul.mubr.bf16.gmra.mrb[0].mxu0 %v281
    %v546 = vpop.f32.mrb[0].mxu0
    %v547 = vadd.f32 %v134, %v546
    %v548 = vpop.f32.mrb[0].mxu0
    %v549 = vpop.f32.mrb[0].mxu0
    %v550 = vadd.f32 %v134, %v549
    %v551 = vpop.f32.mrb[0].mxu0
    %552 = vmatprep.mubr.bf16.mxu0 0
    %553 = vmatmul.mubr.bf16.gmra.mrb[0].mxu0 %v282
    %v554 = vpop.f32.mrb[0].mxu0
    %v555 = vadd.f32 %v134, %v554
    %v556 = vpop.f32.mrb[0].mxu0
    %v557 = vpop.f32.mrb[0].mxu0
    %v558 = vadd.f32 %v134, %v557
    %v559 = vpop.f32.mrb[0].mxu0
    %560 = vmatprep.mubr.bf16.mxu0 0
    %561 = vmatmul.mubr.bf16.gmra.mrb[0].mxu0 %v283
    %v562 = vpop.f32.mrb[0].mxu0
    %v563 = vadd.f32 %v134, %v562
    %v564 = vpop.f32.mrb[0].mxu0
    %v565 = vpop.f32.mrb[0].mxu0
    %v566 = vadd.f32 %v134, %v565
    %v567 = vpop.f32.mrb[0].mxu0
    %568 = vmatprep.mubr.bf16.mxu0 0
    %569 = vmatmul.mubr.bf16.gmra.mrb[0].mxu0 %v284
    %v570 = vpop.f32.mrb[0].mxu0
    %v571 = vadd.f32 %v134, %v570
    %v572 = vpop.f32.mrb[0].mxu0
    %v573 = vpop.f32.mrb[0].mxu0
    %v574 = vadd.f32 %v134, %v573
    %v575 = vpop.f32.mrb[0].mxu0
    %576 = vmatprep.mubr.bf16.mxu0 0
    %577 = vmatmul.mubr.bf16.gmra.mrb[0].mxu0 %v285
    %v578 = vpop.f32.mrb[0].mxu0
    %v579 = vadd.f32 %v134, %v578
    %v580 = vpop.f32.mrb[0].mxu0
    %v581 = vpop.f32.mrb[0].mxu0
    %v582 = vadd.f32 %v134, %v581
    %v583 = vpop.f32.mrb[0].mxu0
    %584 = vmatprep.mubr.bf16.mxu0 0
    %585 = vmatmul.mubr.bf16.gmra.mrb[0].mxu0 %v286
    %v586 = vpop.f32.mrb[0].mxu0
    %v587 = vadd.f32 %v134, %v586
    %v588 = vpop.f32.mrb[0].mxu0
    %v589 = vpop.f32.mrb[0].mxu0
    %v590 = vadd.f32 %v134, %v589
    %v591 = vpop.f32.mrb[0].mxu0
    %592 = vmatprep.mubr.bf16.mxu0 0
    %593 = vmatmul.mubr.bf16.gmra.mrb[0].mxu0 %v287
    %v594 = vpop.f32.mrb[0].mxu0
    %v595 = vadd.f32 %v134, %v594
    %v596 = vpop.f32.mrb[0].mxu0
    %v597 = vpop.f32.mrb[0].mxu0
    %v598 = vadd.f32 %v134, %v597
    %v599 = vpop.f32.mrb[0].mxu0
    %600 = vmatprep.mubr.bf16.mxu0 0
    %601 = vmatmul.mubr.bf16.gmra.mrb[0].mxu0 %v288
    %v602 = vpop.f32.mrb[0].mxu0
    %v603 = vadd.f32 %v134, %v602
    %v604 = vpop.f32.mrb[0].mxu0
    %v605 = vpop.f32.mrb[0].mxu0
    %v606 = vadd.f32 %v134, %v605
    %v607 = vpop.f32.mrb[0].mxu0
    %608 = vmatprep.mubr.bf16.mxu0 0
    %609 = vmatmul.mubr.bf16.gmra.mrb[0].mxu0 %v289
    %v610 = vpop.f32.mrb[0].mxu0
    %v611 = vadd.f32 %v134, %v610
    %v612 = vpop.f32.mrb[0].mxu0
    %v613 = vpop.f32.mrb[0].mxu0
    %v614 = vadd.f32 %v134, %v613
    %v615 = vpop.f32.mrb[0].mxu0
    %616 = vmatprep.mubr.bf16.mxu0 0
    %617 = vmatmul.mubr.bf16.gmra.mrb[0].mxu0 %v290
    %v618 = vpop.f32.mrb[0].mxu0
    %v619 = vadd.f32 %v134, %v618
    %v620 = vpop.f32.mrb[0].mxu0
    %v621 = vpop.f32.mrb[0].mxu0
    %v622 = vadd.f32 %v134, %v621
    %v623 = vpop.f32.mrb[0].mxu0
    %624 = vmatprep.mubr.bf16.mxu0 0
    %625 = vmatmul.mubr.bf16.gmra.mrb[0].mxu0 %v291
    %v626 = vpop.f32.mrb[0].mxu0
    %v627 = vadd.f32 %v134, %v626
    %v628 = vpop.f32.mrb[0].mxu0
    %v629 = vpop.f32.mrb[0].mxu0
    %v630 = vadd.f32 %v134, %v629
    %v631 = vpop.f32.mrb[0].mxu0
    %632 = vmatprep.mubr.bf16.mxu0 0
    %633 = vmatmul.mubr.bf16.gmra.mrb[0].mxu0 %v292
    %v634 = vpop.f32.mrb[0].mxu0
    %v635 = vadd.f32 %v134, %v634
    %v636 = vpop.f32.mrb[0].mxu0
    %v637 = vpop.f32.mrb[0].mxu0
    %v638 = vadd.f32 %v134, %v637
    %v639 = vpop.f32.mrb[0].mxu0
    %640 = vmatprep.mubr.bf16.mxu0 0
    %641 = vmatmul.mubr.bf16.gmra.mrb[0].mxu0 %v293
    %v642 = vpop.f32.mrb[0].mxu0
    %v643 = vadd.f32 %v134, %v642
    %v644 = vpop.f32.mrb[0].mxu0
    %v645 = vpop.f32.mrb[0].mxu0
    %v646 = vadd.f32 %v134, %v645
    %v647 = vpop.f32.mrb[0].mxu0
    %648 = vmatprep.mubr.bf16.mxu0 0
    %649 = vmatmul.mubr.bf16.gmra.mrb[0].mxu0 %v294
    %v650 = vpop.f32.mrb[0].mxu0
    %v651 = vadd.f32 %v134, %v650
    %v652 = vpop.f32.mrb[0].mxu0
    %v653 = vpop.f32.mrb[0].mxu0
    %v654 = vadd.f32 %v134, %v653
    %v655 = vpop.f32.mrb[0].mxu0
    %656 = vmatprep.mubr.bf16.mxu0 0
    %657 = vmatmul.mubr.bf16.gmra.mrb[0].mxu0 %v295
    %v658 = vpop.f32.mrb[0].mxu0
    %v659 = vadd.f32 %v134, %v658
    %v660 = vpop.f32.mrb[0].mxu0
    %v661 = vpop.f32.mrb[0].mxu0
    %v662 = vadd.f32 %v134, %v661
    %v663 = vpop.f32.mrb[0].mxu0
    %664 = vdwg.mxu0
    %v665 = vmax.f32 %v411, 0.0
    %v666 = vmax.f32 %v414, 0.0
    %v667 = vmax.f32 %v419, 0.0
    %v668 = vmax.f32 %v422, 0.0
    %v669 = vmax.f32 %v427, 0.0
    %v670 = vmax.f32 %v430, 0.0
    %v671 = vmax.f32 %v435, 0.0
    %v672 = vmax.f32 %v438, 0.0
    %v673 = vmax.f32 %v443, 0.0
    %v674 = vmax.f32 %v446, 0.0
    %v675 = vmax.f32 %v451, 0.0
    %v676 = vmax.f32 %v454, 0.0
    %v677 = vmax.f32 %v459, 0.0
    %v678 = vmax.f32 %v462, 0.0
    %v679 = vmax.f32 %v467, 0.0
    %v680 = vmax.f32 %v470, 0.0
    %v681 = vmax.f32 %v475, 0.0
    %v682 = vmax.f32 %v478, 0.0
    %v683 = vmax.f32 %v483, 0.0
    %v684 = vmax.f32 %v486, 0.0
    %v685 = vmax.f32 %v491, 0.0
    %v686 = vmax.f32 %v494, 0.0
    %v687 = vmax.f32 %v499, 0.0
    %v688 = vmax.f32 %v502, 0.0
    %v689 = vmax.f32 %v507, 0.0
    %v690 = vmax.f32 %v510, 0.0
    %v691 = vmax.f32 %v515, 0.0
    %v692 = vmax.f32 %v518, 0.0
    %v693 = vmax.f32 %v523, 0.0
    %v694 = vmax.f32 %v526, 0.0
    %v695 = vmax.f32 %v531, 0.0
    %v696 = vmax.f32 %v534, 0.0
    %v697 = vmax.f32 %v539, 0.0
    %v698 = vmax.f32 %v542, 0.0
    %v699 = vmax.f32 %v547, 0.0
    %v700 = vmax.f32 %v550, 0.0
    %v701 = vmax.f32 %v555, 0.0
    %v702 = vmax.f32 %v558, 0.0
    %v703 = vmax.f32 %v563, 0.0
    %v704 = vmax.f32 %v566, 0.0
    %v705 = vmax.f32 %v571, 0.0
    %v706 = vmax.f32 %v574, 0.0
    %v707 = vmax.f32 %v579, 0.0
    %v708 = vmax.f32 %v582, 0.0
    %v709 = vmax.f32 %v587, 0.0
    %v710 = vmax.f32 %v590, 0.0
    %v711 = vmax.f32 %v595, 0.0
    %v712 = vmax.f32 %v598, 0.0
    %v713 = vmax.f32 %v603, 0.0
    %v714 = vmax.f32 %v606, 0.0
    %v715 = vmax.f32 %v611, 0.0
    %v716 = vmax.f32 %v614, 0.0
    %v717 = vmax.f32 %v619, 0.0
    %v718 = vmax.f32 %v622, 0.0
    %v719 = vmax.f32 %v627, 0.0
    %v720 = vmax.f32 %v630, 0.0
    %v721 = vmax.f32 %v635, 0.0
    %v722 = vmax.f32 %v638, 0.0
    %v723 = vmax.f32 %v643, 0.0
    %v724 = vmax.f32 %v646, 0.0
    %v725 = vmax.f32 %v651, 0.0
    %v726 = vmax.f32 %v654, 0.0
    %v727 = vmax.f32 %v659, 0.0
    %v728 = vmax.f32 %v662, 0.0
    %v729 = vpack.c.bf16 %v666, %v665
    %v730 = vpack.c.bf16 %v668, %v667
    %v731 = vpack.c.bf16 %v670, %v669
    %v732 = vpack.c.bf16 %v672, %v671
    %v733 = vpack.c.bf16 %v674, %v673
    %v734 = vpack.c.bf16 %v676, %v675
    %v735 = vpack.c.bf16 %v678, %v677
    %v736 = vpack.c.bf16 %v680, %v679
    %v737 = vpack.c.bf16 %v682, %v681
    %v738 = vpack.c.bf16 %v684, %v683
    %v739 = vpack.c.bf16 %v686, %v685
    %v740 = vpack.c.bf16 %v688, %v687
    %v741 = vpack.c.bf16 %v690, %v689
    %v742 = vpack.c.bf16 %v692, %v691
    %v743 = vpack.c.bf16 %v694, %v693
    %v744 = vpack.c.bf16 %v696, %v695
    %v745 = vpack.c.bf16 %v698, %v697
    %v746 = vpack.c.bf16 %v700, %v699
    %v747 = vpack.c.bf16 %v702, %v701
    %v748 = vpack.c.bf16 %v704, %v703
    %v749 = vpack.c.bf16 %v706, %v705
    %v750 = vpack.c.bf16 %v708, %v707
    %v751 = vpack.c.bf16 %v710, %v709
    %v752 = vpack.c.bf16 %v712, %v711
    %v753 = vpack.c.bf16 %v714, %v713
    %v754 = vpack.c.bf16 %v716, %v715
    %v755 = vpack.c.bf16 %v718, %v717
    %v756 = vpack.c.bf16 %v720, %v719
    %v757 = vpack.c.bf16 %v722, %v721
    %v758 = vpack.c.bf16 %v724, %v723
    %v759 = vpack.c.bf16 %v726, %v725
    %v760 = vpack.c.bf16 %v728, %v727
    %v761 = vld [vmem:[%s7] sm:$0xf]
    %v762 = vld [vmem:[%s7 + $0x4] sm:$0xf]
    %v763 = vld [vmem:[%s7 + $0x8] sm:$0xf]
    %v764 = vld [vmem:[%s7 + $0xc] sm:$0xf]
    %v765 = vld [vmem:[%s7 + $0x10] sm:$0xf]
    %v766 = vld [vmem:[%s7 + $0x14] sm:$0xf]
    %v767 = vld [vmem:[%s7 + $0x18] sm:$0xf]
    %v768 = vld [vmem:[%s7 + $0x1c] sm:$0xf]
    %v769 = vld [vmem:[%s7 + $0x20] sm:$0xf]
    %v770 = vld [vmem:[%s7 + $0x24] sm:$0xf]
    %v771 = vld [vmem:[%s7 + $0x28] sm:$0xf]
    %v772 = vld [vmem:[%s7 + $0x2c] sm:$0xf]
    %v773 = vld [vmem:[%s7 + $0x30] sm:$0xf]
    %v774 = vld [vmem:[%s7 + $0x34] sm:$0xf]
    %v775 = vld [vmem:[%s7 + $0x38] sm:$0xf]
    %v776 = vld [vmem:[%s7 + $0x3c] sm:$0xf]
    %v777 = vld [vmem:[%s8] sm:$0x1]
    %v778 = vlaneseq
    %v779 = vshrl.u32 %v778, 7
    %v780 = vsub.s32 0, %v779
    %v781 = vrot.slane %v777, %v780
    %v798 = vunpack.c.l.b16 %v761
    %v799 = vunpack.c.l.b16 %v762
    %v800 = vunpack.c.l.b16 %v763
    %v801 = vunpack.c.l.b16 %v764
    %v802 = vunpack.c.l.b16 %v765
    %v803 = vunpack.c.l.b16 %v766
    %v804 = vunpack.c.l.b16 %v767
    %v805 = vunpack.c.l.b16 %v768
    %v806 = vunpack.c.l.b16 %v769
    %v807 = vunpack.c.l.b16 %v770
    %v808 = vunpack.c.l.b16 %v771
    %v809 = vunpack.c.l.b16 %v772
    %v810 = vunpack.c.l.b16 %v773
    %v811 = vunpack.c.l.b16 %v774
    %v812 = vunpack.c.l.b16 %v775
    %v813 = vunpack.c.l.b16 %v776
    %v814 = vpack.c.b16 %v799, %v798
    %v815 = vpack.c.b16 %v801, %v800
    %v816 = vpack.c.b16 %v803, %v802
    %v817 = vpack.c.b16 %v805, %v804
    %v818 = vpack.c.b16 %v807, %v806
    %v819 = vpack.c.b16 %v809, %v808
    %v820 = vpack.c.b16 %v811, %v810
    %v821 = vpack.c.b16 %v813, %v812
    %830 = vmatprep.subr.bf16.mxu0 0
    %831 = vmatpush1.bf16.msra.mxu0 %v814
    %832 = vmatprep.subr.bf16.mxu0 0
    %833 = vmatpush1.bf16.msra.mxu0 %v815
    %834 = vmatprep.subr.bf16.mxu0 0
    %835 = vmatpush1.bf16.msra.mxu0 %v816
    %836 = vmatprep.subr.bf16.mxu0 0
    %837 = vmatpush1.bf16.msra.mxu0 %v817
    %838 = vmatprep.subr.bf16.mxu0 0
    %839 = vmatpush1.bf16.msra.mxu0 %v818
    %840 = vmatprep.subr.bf16.mxu0 0
    %841 = vmatpush1.bf16.msra.mxu0 %v819
    %842 = vmatprep.subr.bf16.mxu0 0
    %843 = vmatpush1.bf16.msra.mxu0 %v820
    %844 = vmatprep.subr.bf16.mxu0 0
    %845 = vmatpush1.bf16.msra.mxu0 %v821
    %846 = vmatprep.subr.bf16.mxu0 0
    %847 = vmatpush1.bf16.msra.mxu0 0
    %848 = vmatprep.subr.bf16.mxu0 0
    %849 = vmatpush1.bf16.msra.mxu0 0
    %850 = vmatprep.subr.bf16.mxu0 0
    %851 = vmatpush1.bf16.msra.mxu0 0
    %852 = vmatprep.subr.bf16.mxu0 0
    %853 = vmatpush1.bf16.msra.mxu0 0
    %854 = vmatprep.subr.bf16.mxu0 0
    %855 = vmatpush1.bf16.msra.mxu0 0
    %856 = vmatprep.subr.bf16.mxu0 0
    %857 = vmatpush1.bf16.msra.mxu0 0
    %858 = vmatprep.subr.bf16.mxu0 0
    %859 = vmatpush1.bf16.msra.mxu0 0
    %860 = vmatprep.subr.bf16.mxu0 0
    %861 = vmatpush1.bf16.msra.mxu0 0
    %862 = vmatprep.mubr.bf16.mxu0 0
    %863 = vmatmul.mubr.bf16.gmra.mrb[0].mxu0 %v729
    %v864 = vpop.f32.mrb[0].mxu0
    %v865 = vadd.f32 %v781, %v864
    %v866 = vpop.f32.mrb[0].mxu0
    %v867 = vpop.f32.mrb[0].mxu0
    %v868 = vadd.f32 %v781, %v867
    %v869 = vpop.f32.mrb[0].mxu0
    %870 = vmatprep.mubr.bf16.mxu0 0
    %871 = vmatmul.mubr.bf16.gmra.mrb[0].mxu0 %v730
    %v872 = vpop.f32.mrb[0].mxu0
    %v873 = vadd.f32 %v781, %v872
    %v874 = vpop.f32.mrb[0].mxu0
    %v875 = vpop.f32.mrb[0].mxu0
    %v876 = vadd.f32 %v781, %v875
    %v877 = vpop.f32.mrb[0].mxu0
    %878 = vmatprep.mubr.bf16.mxu0 0
    %879 = vmatmul.mubr.bf16.gmra.mrb[0].mxu0 %v731
    %v880 = vpop.f32.mrb[0].mxu0
    %v881 = vadd.f32 %v781, %v880
    %v882 = vpop.f32.mrb[0].mxu0
    %v883 = vpop.f32.mrb[0].mxu0
    %v884 = vadd.f32 %v781, %v883
    %v885 = vpop.f32.mrb[0].mxu0
    %886 = vmatprep.mubr.bf16.mxu0 0
    %887 = vmatmul.mubr.bf16.gmra.mrb[0].mxu0 %v732
    %v888 = vpop.f32.mrb[0].mxu0
    %v889 = vadd.f32 %v781, %v888
    %v890 = vpop.f32.mrb[0].mxu0
    %v891 = vpop.f32.mrb[0].mxu0
    %v892 = vadd.f32 %v781, %v891
    %v893 = vpop.f32.mrb[0].mxu0
    %894 = vmatprep.mubr.bf16.mxu0 0
    %895 = vmatmul.mubr.bf16.gmra.mrb[0].mxu0 %v733
    %v896 = vpop.f32.mrb[0].mxu0
    %v897 = vadd.f32 %v781, %v896
    %v898 = vpop.f32.mrb[0].mxu0
    %v899 = vpop.f32.mrb[0].mxu0
    %v900 = vadd.f32 %v781, %v899
    %v901 = vpop.f32.mrb[0].mxu0
    %902 = vmatprep.mubr.bf16.mxu0 0
    %903 = vmatmul.mubr.bf16.gmra.mrb[0].mxu0 %v734
    %v904 = vpop.f32.mrb[0].mxu0
    %v905 = vadd.f32 %v781, %v904
    %v906 = vpop.f32.mrb[0].mxu0
    %v907 = vpop.f32.mrb[0].mxu0
    %v908 = vadd.f32 %v781, %v907
    %v909 = vpop.f32.mrb[0].mxu0
    %910 = vmatprep.mubr.bf16.mxu0 0
    %911 = vmatmul.mubr.bf16.gmra.mrb[0].mxu0 %v735
    %v912 = vpop.f32.mrb[0].mxu0
    %v913 = vadd.f32 %v781, %v912
    %v914 = vpop.f32.mrb[0].mxu0
    %v915 = vpop.f32.mrb[0].mxu0
    %v916 = vadd.f32 %v781, %v915
    %v917 = vpop.f32.mrb[0].mxu0
    %918 = vmatprep.mubr.bf16.mxu0 0
    %919 = vmatmul.mubr.bf16.gmra.mrb[0].mxu0 %v736
    %v920 = vpop.f32.mrb[0].mxu0
    %v921 = vadd.f32 %v781, %v920
    %v922 = vpop.f32.mrb[0].mxu0
    %v923 = vpop.f32.mrb[0].mxu0
    %v924 = vadd.f32 %v781, %v923
    %v925 = vpop.f32.mrb[0].mxu0
    %926 = vmatprep.mubr.bf16.mxu0 0
    %927 = vmatmul.mubr.bf16.gmra.mrb[0].mxu0 %v737
    %v928 = vpop.f32.mrb[0].mxu0
    %v929 = vadd.f32 %v781, %v928
    %v930 = vpop.f32.mrb[0].mxu0
    %v931 = vpop.f32.mrb[0].mxu0
    %v932 = vadd.f32 %v781, %v931
    %v933 = vpop.f32.mrb[0].mxu0
    %934 = vmatprep.mubr.bf16.mxu0 0
    %935 = vmatmul.mubr.bf16.gmra.mrb[0].mxu0 %v738
    %v936 = vpop.f32.mrb[0].mxu0
    %v937 = vadd.f32 %v781, %v936
    %v938 = vpop.f32.mrb[0].mxu0
    %v939 = vpop.f32.mrb[0].mxu0
    %v940 = vadd.f32 %v781, %v939
    %v941 = vpop.f32.mrb[0].mxu0
    %942 = vmatprep.mubr.bf16.mxu0 0
    %943 = vmatmul.mubr.bf16.gmra.mrb[0].mxu0 %v739
    %v944 = vpop.f32.mrb[0].mxu0
    %v945 = vadd.f32 %v781, %v944
    %v946 = vpop.f32.mrb[0].mxu0
    %v947 = vpop.f32.mrb[0].mxu0
    %v948 = vadd.f32 %v781, %v947
    %v949 = vpop.f32.mrb[0].mxu0
    %950 = vmatprep.mubr.bf16.mxu0 0
    %951 = vmatmul.mubr.bf16.gmra.mrb[0].mxu0 %v740
    %v952 = vpop.f32.mrb[0].mxu0
    %v953 = vadd.f32 %v781, %v952
    %v954 = vpop.f32.mrb[0].mxu0
    %v955 = vpop.f32.mrb[0].mxu0
    %v956 = vadd.f32 %v781, %v955
    %v957 = vpop.f32.mrb[0].mxu0
    %958 = vmatprep.mubr.bf16.mxu0 0
    %959 = vmatmul.mubr.bf16.gmra.mrb[0].mxu0 %v741
    %v960 = vpop.f32.mrb[0].mxu0
    %v961 = vadd.f32 %v781, %v960
    %v962 = vpop.f32.mrb[0].mxu0
    %v963 = vpop.f32.mrb[0].mxu0
    %v964 = vadd.f32 %v781, %v963
    %v965 = vpop.f32.mrb[0].mxu0
    %966 = vmatprep.mubr.bf16.mxu0 0
    %967 = vmatmul.mubr.bf16.gmra.mrb[0].mxu0 %v742
    %v968 = vpop.f32.mrb[0].mxu0
    %v969 = vadd.f32 %v781, %v968
    %v970 = vpop.f32.mrb[0].mxu0
    %v971 = vpop.f32.mrb[0].mxu0
    %v972 = vadd.f32 %v781, %v971
    %v973 = vpop.f32.mrb[0].mxu0
    %974 = vmatprep.mubr.bf16.mxu0 0
    %975 = vmatmul.mubr.bf16.gmra.mrb[0].mxu0 %v743
    %v976 = vpop.f32.mrb[0].mxu0
    %v977 = vadd.f32 %v781, %v976
    %v978 = vpop.f32.mrb[0].mxu0
    %v979 = vpop.f32.mrb[0].mxu0
    %v980 = vadd.f32 %v781, %v979
    %v981 = vpop.f32.mrb[0].mxu0
    %982 = vmatprep.mubr.bf16.mxu0 0
    %983 = vmatmul.mubr.bf16.gmra.mrb[0].mxu0 %v744
    %v984 = vpop.f32.mrb[0].mxu0
    %v985 = vadd.f32 %v781, %v984
    %v986 = vpop.f32.mrb[0].mxu0
    %v987 = vpop.f32.mrb[0].mxu0
    %v988 = vadd.f32 %v781, %v987
    %v989 = vpop.f32.mrb[0].mxu0
    %990 = vmatprep.mubr.bf16.mxu0 0
    %991 = vmatmul.mubr.bf16.gmra.mrb[0].mxu0 %v745
    %v992 = vpop.f32.mrb[0].mxu0
    %v993 = vadd.f32 %v781, %v992
    %v994 = vpop.f32.mrb[0].mxu0
    %v995 = vpop.f32.mrb[0].mxu0
    %v996 = vadd.f32 %v781, %v995
    %v997 = vpop.f32.mrb[0].mxu0
    %998 = vmatprep.mubr.bf16.mxu0 0
    %999 = vmatmul.mubr.bf16.gmra.mrb[0].mxu0 %v746
    %v1000 = vpop.f32.mrb[0].mxu0
    %v1001 = vadd.f32 %v781, %v1000
    %v1002 = vpop.f32.mrb[0].mxu0
    %v1003 = vpop.f32.mrb[0].mxu0
    %v1004 = vadd.f32 %v781, %v1003
    %v1005 = vpop.f32.mrb[0].mxu0
    %1006 = vmatprep.mubr.bf16.mxu0 0
    %1007 = vmatmul.mubr.bf16.gmra.mrb[0].mxu0 %v747
    %v1008 = vpop.f32.mrb[0].mxu0
    %v1009 = vadd.f32 %v781, %v1008
    %v1010 = vpop.f32.mrb[0].mxu0
    %v1011 = vpop.f32.mrb[0].mxu0
    %v1012 = vadd.f32 %v781, %v1011
    %v1013 = vpop.f32.mrb[0].mxu0
    %1014 = vmatprep.mubr.bf16.mxu0 0
    %1015 = vmatmul.mubr.bf16.gmra.mrb[0].mxu0 %v748
    %v1016 = vpop.f32.mrb[0].mxu0
    %v1017 = vadd.f32 %v781, %v1016
    %v1018 = vpop.f32.mrb[0].mxu0
    %v1019 = vpop.f32.mrb[0].mxu0
    %v1020 = vadd.f32 %v781, %v1019
    %v1021 = vpop.f32.mrb[0].mxu0
    %1022 = vmatprep.mubr.bf16.mxu0 0
    %1023 = vmatmul.mubr.bf16.gmra.mrb[0].mxu0 %v749
    %v1024 = vpop.f32.mrb[0].mxu0
    %v1025 = vadd.f32 %v781, %v1024
    %v1026 = vpop.f32.mrb[0].mxu0
    %v1027 = vpop.f32.mrb[0].mxu0
    %v1028 = vadd.f32 %v781, %v1027
    %v1029 = vpop.f32.mrb[0].mxu0
    %1030 = vmatprep.mubr.bf16.mxu0 0
    %1031 = vmatmul.mubr.bf16.gmra.mrb[0].mxu0 %v750
    %v1032 = vpop.f32.mrb[0].mxu0
    %v1033 = vadd.f32 %v781, %v1032
    %v1034 = vpop.f32.mrb[0].mxu0
    %v1035 = vpop.f32.mrb[0].mxu0
    %v1036 = vadd.f32 %v781, %v1035
    %v1037 = vpop.f32.mrb[0].mxu0
    %1038 = vmatprep.mubr.bf16.mxu0 0
    %1039 = vmatmul.mubr.bf16.gmra.mrb[0].mxu0 %v751
    %v1040 = vpop.f32.mrb[0].mxu0
    %v1041 = vadd.f32 %v781, %v1040
    %v1042 = vpop.f32.mrb[0].mxu0
    %v1043 = vpop.f32.mrb[0].mxu0
    %v1044 = vadd.f32 %v781, %v1043
    %v1045 = vpop.f32.mrb[0].mxu0
    %1046 = vmatprep.mubr.bf16.mxu0 0
    %1047 = vmatmul.mubr.bf16.gmra.mrb[0].mxu0 %v752
    %v1048 = vpop.f32.mrb[0].mxu0
    %v1049 = vadd.f32 %v781, %v1048
    %v1050 = vpop.f32.mrb[0].mxu0
    %v1051 = vpop.f32.mrb[0].mxu0
    %v1052 = vadd.f32 %v781, %v1051
    %v1053 = vpop.f32.mrb[0].mxu0
    %1054 = vmatprep.mubr.bf16.mxu0 0
    %1055 = vmatmul.mubr.bf16.gmra.mrb[0].mxu0 %v753
    %v1056 = vpop.f32.mrb[0].mxu0
    %v1057 = vadd.f32 %v781, %v1056
    %v1058 = vpop.f32.mrb[0].mxu0
    %v1059 = vpop.f32.mrb[0].mxu0
    %v1060 = vadd.f32 %v781, %v1059
    %v1061 = vpop.f32.mrb[0].mxu0
    %1062 = vmatprep.mubr.bf16.mxu0 0
    %1063 = vmatmul.mubr.bf16.gmra.mrb[0].mxu0 %v754
    %v1064 = vpop.f32.mrb[0].mxu0
    %v1065 = vadd.f32 %v781, %v1064
    %v1066 = vpop.f32.mrb[0].mxu0
    %v1067 = vpop.f32.mrb[0].mxu0
    %v1068 = vadd.f32 %v781, %v1067
    %v1069 = vpop.f32.mrb[0].mxu0
    %1070 = vmatprep.mubr.bf16.mxu0 0
    %1071 = vmatmul.mubr.bf16.gmra.mrb[0].mxu0 %v755
    %v1072 = vpop.f32.mrb[0].mxu0
    %v1073 = vadd.f32 %v781, %v1072
    %v1074 = vpop.f32.mrb[0].mxu0
    %v1075 = vpop.f32.mrb[0].mxu0
    %v1076 = vadd.f32 %v781, %v1075
    %v1077 = vpop.f32.mrb[0].mxu0
    %1078 = vmatprep.mubr.bf16.mxu0 0
    %1079 = vmatmul.mubr.bf16.gmra.mrb[0].mxu0 %v756
    %v1080 = vpop.f32.mrb[0].mxu0
    %v1081 = vadd.f32 %v781, %v1080
    %v1082 = vpop.f32.mrb[0].mxu0
    %v1083 = vpop.f32.mrb[0].mxu0
    %v1084 = vadd.f32 %v781, %v1083
    %v1085 = vpop.f32.mrb[0].mxu0
    %1086 = vmatprep.mubr.bf16.mxu0 0
    %1087 = vmatmul.mubr.bf16.gmra.mrb[0].mxu0 %v757
    %v1088 = vpop.f32.mrb[0].mxu0
    %v1089 = vadd.f32 %v781, %v1088
    %v1090 = vpop.f32.mrb[0].mxu0
    %v1091 = vpop.f32.mrb[0].mxu0
    %v1092 = vadd.f32 %v781, %v1091
    %v1093 = vpop.f32.mrb[0].mxu0
    %1094 = vmatprep.mubr.bf16.mxu0 0
    %1095 = vmatmul.mubr.bf16.gmra.mrb[0].mxu0 %v758
    %v1096 = vpop.f32.mrb[0].mxu0
    %v1097 = vadd.f32 %v781, %v1096
    %v1098 = vpop.f32.mrb[0].mxu0
    %v1099 = vpop.f32.mrb[0].mxu0
    %v1100 = vadd.f32 %v781, %v1099
    %v1101 = vpop.f32.mrb[0].mxu0
    %1102 = vmatprep.mubr.bf16.mxu0 0
    %1103 = vmatmul.mubr.bf16.gmra.mrb[0].mxu0 %v759
    %v1104 = vpop.f32.mrb[0].mxu0
    %v1105 = vadd.f32 %v781, %v1104
    %v1106 = vpop.f32.mrb[0].mxu0
    %v1107 = vpop.f32.mrb[0].mxu0
    %v1108 = vadd.f32 %v781, %v1107
    %v1109 = vpop.f32.mrb[0].mxu0
    %1110 = vmatprep.mubr.bf16.mxu0 0
    %1111 = vmatmul.mubr.bf16.gmra.mrb[0].mxu0 %v760
    %v1112 = vpop.f32.mrb[0].mxu0
    %v1113 = vadd.f32 %v781, %v1112
    %v1114 = vpop.f32.mrb[0].mxu0
    %v1115 = vpop.f32.mrb[0].mxu0
    %v1116 = vadd.f32 %v781, %v1115
    %v1117 = vpop.f32.mrb[0].mxu0
    %1118 = vdwg.mxu0
    %v1119 = vmax.f32 %v865, 0.0
    %v1120 = vmax.f32 %v868, 0.0
    %v1121 = vmax.f32 %v873, 0.0
    %v1122 = vmax.f32 %v876, 0.0
    %v1123 = vmax.f32 %v881, 0.0
    %v1124 = vmax.f32 %v884, 0.0
    %v1125 = vmax.f32 %v889, 0.0
    %v1126 = vmax.f32 %v892, 0.0
    %v1127 = vmax.f32 %v897, 0.0
    %v1128 = vmax.f32 %v900, 0.0
    %v1129 = vmax.f32 %v905, 0.0
    %v1130 = vmax.f32 %v908, 0.0
    %v1131 = vmax.f32 %v913, 0.0
    %v1132 = vmax.f32 %v916, 0.0
    %v1133 = vmax.f32 %v921, 0.0
    %v1134 = vmax.f32 %v924, 0.0
    %v1135 = vmax.f32 %v929, 0.0
    %v1136 = vmax.f32 %v932, 0.0
    %v1137 = vmax.f32 %v937, 0.0
    %v1138 = vmax.f32 %v940, 0.0
    %v1139 = vmax.f32 %v945, 0.0
    %v1140 = vmax.f32 %v948, 0.0
    %v1141 = vmax.f32 %v953, 0.0
    %v1142 = vmax.f32 %v956, 0.0
    %v1143 = vmax.f32 %v961, 0.0
    %v1144 = vmax.f32 %v964, 0.0
    %v1145 = vmax.f32 %v969, 0.0
    %v1146 = vmax.f32 %v972, 0.0
    %v1147 = vmax.f32 %v977, 0.0
    %v1148 = vmax.f32 %v980, 0.0
    %v1149 = vmax.f32 %v985, 0.0
    %v1150 = vmax.f32 %v988, 0.0
    %v1151 = vmax.f32 %v993, 0.0
    %v1152 = vmax.f32 %v996, 0.0
    %v1153 = vmax.f32 %v1001, 0.0
    %v1154 = vmax.f32 %v1004, 0.0
    %v1155 = vmax.f32 %v1009, 0.0
    %v1156 = vmax.f32 %v1012, 0.0
    %v1157 = vmax.f32 %v1017, 0.0
    %v1158 = vmax.f32 %v1020, 0.0
    %v1159 = vmax.f32 %v1025, 0.0
    %v1160 = vmax.f32 %v1028, 0.0
    %v1161 = vmax.f32 %v1033, 0.0
    %v1162 = vmax.f32 %v1036, 0.0
    %v1163 = vmax.f32 %v1041, 0.0
    %v1164 = vmax.f32 %v1044, 0.0
    %v1165 = vmax.f32 %v1049, 0.0
    %v1166 = vmax.f32 %v1052, 0.0
    %v1167 = vmax.f32 %v1057, 0.0
    %v1168 = vmax.f32 %v1060, 0.0
    %v1169 = vmax.f32 %v1065, 0.0
    %v1170 = vmax.f32 %v1068, 0.0
    %v1171 = vmax.f32 %v1073, 0.0
    %v1172 = vmax.f32 %v1076, 0.0
    %v1173 = vmax.f32 %v1081, 0.0
    %v1174 = vmax.f32 %v1084, 0.0
    %v1175 = vmax.f32 %v1089, 0.0
    %v1176 = vmax.f32 %v1092, 0.0
    %v1177 = vmax.f32 %v1097, 0.0
    %v1178 = vmax.f32 %v1100, 0.0
    %v1179 = vmax.f32 %v1105, 0.0
    %v1180 = vmax.f32 %v1108, 0.0
    %v1181 = vmax.f32 %v1113, 0.0
    %v1182 = vmax.f32 %v1116, 0.0
    %v1183 = vmax.f32 %v1119, %v1121
    %v1184 = vmax.f32 %v1120, %v1122
    %v1185 = vmax.f32 %v1183, %v1123
    %v1186 = vmax.f32 %v1184, %v1124
    %v1187 = vmax.f32 %v1185, %v1125
    %v1188 = vmax.f32 %v1186, %v1126
    %v1189 = vmax.f32 %v1187, %v1188
    %v1190 = vrot.slane %v1189, 4
    %v1191 = vmax.f32 %v1189, %v1190
    %v1192 = vrot.slane %v1191, 2
    %v1193 = vmax.f32 %v1191, %v1192
    %v1194 = vrot.slane %v1193, 1
    %v1195 = vmax.f32 %v1193, %v1194
    %v1196 = vmax.f32 %v1151, %v1153
    %v1197 = vmax.f32 %v1152, %v1154
    %v1198 = vmax.f32 %v1196, %v1155
    %v1199 = vmax.f32 %v1197, %v1156
    %v1200 = vmax.f32 %v1198, %v1157
    %v1201 = vmax.f32 %v1199, %v1158
    %v1202 = vmax.f32 %v1200, %v1201
    %v1203 = vrot.slane %v1202, 4
    %v1204 = vmax.f32 %v1202, %v1203
    %v1205 = vrot.slane %v1204, 2
    %v1206 = vmax.f32 %v1204, %v1205
    %v1207 = vrot.slane %v1206, 1
    %v1208 = vmax.f32 %v1206, %v1207
    %v1209 = vadd.f32 %v1119, %v1120
    %v1210 = vadd.f32 %v1209, %v1121
    %v1211 = vadd.f32 %v1210, %v1122
    %v1212 = vadd.f32 %v1211, %v1123
    %v1213 = vadd.f32 %v1212, %v1124
    %v1214 = vadd.f32 %v1213, %v1125
    %v1215 = vadd.f32 %v1214, %v1126
    %v1216 = vrot.slane %v1215, 4
    %v1217 = vadd.f32 %v1215, %v1216
    %v1218 = vrot.slane %v1217, 2
    %v1219 = vadd.f32 %v1217, %v1218
    %v1220 = vrot.slane %v1219, 1
    %v1221 = vadd.f32 %v1219, %v1220
    %v1222 = vadd.f32 %v1151, %v1152
    %v1223 = vadd.f32 %v1222, %v1153
    %v1224 = vadd.f32 %v1223, %v1154
    %v1225 = vadd.f32 %v1224, %v1155
    %v1226 = vadd.f32 %v1225, %v1156
    %v1227 = vadd.f32 %v1226, %v1157
    %v1228 = vadd.f32 %v1227, %v1158
    %v1229 = vrot.slane %v1228, 4
    %v1230 = vadd.f32 %v1228, %v1229
    %v1231 = vrot.slane %v1230, 2
    %v1232 = vadd.f32 %v1230, %v1231
    %v1233 = vrot.slane %v1232, 1
    %v1234 = vadd.f32 %v1232, %v1233
    %v1235 = vmax.f32 %v1127, %v1129
    %v1236 = vmax.f32 %v1128, %v1130
    %v1237 = vmax.f32 %v1235, %v1131
    %v1238 = vmax.f32 %v1236, %v1132
    %v1239 = vmax.f32 %v1237, %v1133
    %v1240 = vmax.f32 %v1238, %v1134
    %v1241 = vmax.f32 %v1239, %v1240
    %v1242 = vrot.slane %v1241, 4
    %v1243 = vmax.f32 %v1241, %v1242
    %v1244 = vrot.slane %v1243, 2
    %v1245 = vmax.f32 %v1243, %v1244
    %v1246 = vrot.slane %v1245, 1
    %v1247 = vmax.f32 %v1245, %v1246
    %v1248 = vmax.f32 %v1159, %v1161
    %v1249 = vmax.f32 %v1160, %v1162
    %v1250 = vmax.f32 %v1248, %v1163
    %v1251 = vmax.f32 %v1249, %v1164
    %v1252 = vmax.f32 %v1250, %v1165
    %v1253 = vmax.f32 %v1251, %v1166
    %v1254 = vmax.f32 %v1252, %v1253
    %v1255 = vrot.slane %v1254, 4
    %v1256 = vmax.f32 %v1254, %v1255
    %v1257 = vrot.slane %v1256, 2
    %v1258 = vmax.f32 %v1256, %v1257
    %v1259 = vrot.slane %v1258, 1
    %v1260 = vmax.f32 %v1258, %v1259
    %v1261 = vmax.f32 %v1195, %v1247
    %v1262 = vmax.f32 %v1208, %v1260
    %v1263 = vadd.f32 %v1127, %v1128
    %v1264 = vadd.f32 %v1263, %v1129
    %v1265 = vadd.f32 %v1264, %v1130
    %v1266 = vadd.f32 %v1265, %v1131
    %v1267 = vadd.f32 %v1266, %v1132
    %v1268 = vadd.f32 %v1267, %v1133
    %v1269 = vadd.f32 %v1268, %v1134
    %v1270 = vrot.slane %v1269, 4
    %v1271 = vadd.f32 %v1269, %v1270
    %v1272 = vrot.slane %v1271, 2
    %v1273 = vadd.f32 %v1271, %v1272
    %v1274 = vrot.slane %v1273, 1
    %v1275 = vadd.f32 %v1273, %v1274
    %v1276 = vadd.f32 %v1159, %v1160
    %v1277 = vadd.f32 %v1276, %v1161
    %v1278 = vadd.f32 %v1277, %v1162
    %v1279 = vadd.f32 %v1278, %v1163
    %v1280 = vadd.f32 %v1279, %v1164
    %v1281 = vadd.f32 %v1280, %v1165
    %v1282 = vadd.f32 %v1281, %v1166
    %v1283 = vrot.slane %v1282, 4
    %v1284 = vadd.f32 %v1282, %v1283
    %v1285 = vrot.slane %v1284, 2
    %v1286 = vadd.f32 %v1284, %v1285
    %v1287 = vrot.slane %v1286, 1
    %v1288 = vadd.f32 %v1286, %v1287
    %v1289 = vadd.f32 %v1221, %v1275
    %v1290 = vadd.f32 %v1234, %v1288
    %v1291 = vmax.f32 %v1135, %v1137
    %v1292 = vmax.f32 %v1136, %v1138
    %v1293 = vmax.f32 %v1291, %v1139
    %v1294 = vmax.f32 %v1292, %v1140
    %v1295 = vmax.f32 %v1293, %v1141
    %v1296 = vmax.f32 %v1294, %v1142
    %v1297 = vmax.f32 %v1295, %v1296
    %v1298 = vrot.slane %v1297, 4
    %v1299 = vmax.f32 %v1297, %v1298
    %v1300 = vrot.slane %v1299, 2
    %v1301 = vmax.f32 %v1299, %v1300
    %v1302 = vrot.slane %v1301, 1
    %v1303 = vmax.f32 %v1301, %v1302
    %v1304 = vmax.f32 %v1167, %v1169
    %v1305 = vmax.f32 %v1168, %v1170
    %v1306 = vmax.f32 %v1304, %v1171
    %v1307 = vmax.f32 %v1305, %v1172
    %v1308 = vmax.f32 %v1306, %v1173
    %v1309 = vmax.f32 %v1307, %v1174
    %v1310 = vmax.f32 %v1308, %v1309
    %v1311 = vrot.slane %v1310, 4
    %v1312 = vmax.f32 %v1310, %v1311
    %v1313 = vrot.slane %v1312, 2
    %v1314 = vmax.f32 %v1312, %v1313
    %v1315 = vrot.slane %v1314, 1
    %v1316 = vmax.f32 %v1314, %v1315
    %v1317 = vmax.f32 %v1261, %v1303
    %v1318 = vmax.f32 %v1262, %v1316
    %v1319 = vadd.f32 %v1135, %v1136
    %v1320 = vadd.f32 %v1319, %v1137
    %v1321 = vadd.f32 %v1320, %v1138
    %v1322 = vadd.f32 %v1321, %v1139
    %v1323 = vadd.f32 %v1322, %v1140
    %v1324 = vadd.f32 %v1323, %v1141
    %v1325 = vadd.f32 %v1324, %v1142
    %v1326 = vrot.slane %v1325, 4
    %v1327 = vadd.f32 %v1325, %v1326
    %v1328 = vrot.slane %v1327, 2
    %v1329 = vadd.f32 %v1327, %v1328
    %v1330 = vrot.slane %v1329, 1
    %v1331 = vadd.f32 %v1329, %v1330
    %v1332 = vadd.f32 %v1167, %v1168
    %v1333 = vadd.f32 %v1332, %v1169
    %v1334 = vadd.f32 %v1333, %v1170
    %v1335 = vadd.f32 %v1334, %v1171
    %v1336 = vadd.f32 %v1335, %v1172
    %v1337 = vadd.f32 %v1336, %v1173
    %v1338 = vadd.f32 %v1337, %v1174
    %v1339 = vrot.slane %v1338, 4
    %v1340 = vadd.f32 %v1338, %v1339
    %v1341 = vrot.slane %v1340, 2
    %v1342 = vadd.f32 %v1340, %v1341
    %v1343 = vrot.slane %v1342, 1
    %v1344 = vadd.f32 %v1342, %v1343
    %v1345 = vadd.f32 %v1289, %v1331
    %v1346 = vadd.f32 %v1290, %v1344
    %v1347 = vmax.f32 %v1143, %v1145
    %v1348 = vmax.f32 %v1144, %v1146
    %v1349 = vmax.f32 %v1347, %v1147
    %v1350 = vmax.f32 %v1348, %v1148
    %v1351 = vmax.f32 %v1349, %v1149
    %v1352 = vmax.f32 %v1350, %v1150
    %v1353 = vmax.f32 %v1351, %v1352
    %v1354 = vrot.slane %v1353, 4
    %v1355 = vmax.f32 %v1353, %v1354
    %v1356 = vrot.slane %v1355, 2
    %v1357 = vmax.f32 %v1355, %v1356
    %v1358 = vrot.slane %v1357, 1
    %v1359 = vmax.f32 %v1357, %v1358
    %v1360 = vmax.f32 %v1175, %v1177
    %v1361 = vmax.f32 %v1176, %v1178
    %v1362 = vmax.f32 %v1360, %v1179
    %v1363 = vmax.f32 %v1361, %v1180
    %v1364 = vmax.f32 %v1362, %v1181
    %v1365 = vmax.f32 %v1363, %v1182
    %v1366 = vmax.f32 %v1364, %v1365
    %v1367 = vrot.slane %v1366, 4
    %v1368 = vmax.f32 %v1366, %v1367
    %v1369 = vrot.slane %v1368, 2
    %v1370 = vmax.f32 %v1368, %v1369
    %v1371 = vrot.slane %v1370, 1
    %v1372 = vmax.f32 %v1370, %v1371
    %v1373 = vmax.f32 %v1317, %v1359
    %v1374 = vmax.f32 %v1318, %v1372
    %v1375 = vadd.f32 %v1143, %v1144
    %v1376 = vadd.f32 %v1375, %v1145
    %v1377 = vadd.f32 %v1376, %v1146
    %v1378 = vadd.f32 %v1377, %v1147
    %v1379 = vadd.f32 %v1378, %v1148
    %v1380 = vadd.f32 %v1379, %v1149
    %v1381 = vadd.f32 %v1380, %v1150
    %v1382 = vrot.slane %v1381, 4
    %v1383 = vadd.f32 %v1381, %v1382
    %v1384 = vrot.slane %v1383, 2
    %v1385 = vadd.f32 %v1383, %v1384
    %v1386 = vrot.slane %v1385, 1
    %v1387 = vadd.f32 %v1385, %v1386
    %v1388 = vadd.f32 %v1175, %v1176
    %v1389 = vadd.f32 %v1388, %v1177
    %v1390 = vadd.f32 %v1389, %v1178
    %v1391 = vadd.f32 %v1390, %v1179
    %v1392 = vadd.f32 %v1391, %v1180
    %v1393 = vadd.f32 %v1392, %v1181
    %v1394 = vadd.f32 %v1393, %v1182
    %v1395 = vrot.slane %v1394, 4
    %v1396 = vadd.f32 %v1394, %v1395
    %v1397 = vrot.slane %v1396, 2
    %v1398 = vadd.f32 %v1396, %v1397
    %v1399 = vrot.slane %v1398, 1
    %v1400 = vadd.f32 %v1398, %v1399
    %v1401 = vadd.f32 %v1345, %v1387
    %v1402 = vadd.f32 %v1346, %v1400
    %v1403 = vmul.f32 %v1401, 0.00390625
    %v1404 = vmul.f32 %v1402, 0.00390625
    %v1405 = vld [vmem:[%s11] sm:$0x3]
    %v1407 = vrot.slane %v1405, 1
    %v1410 = vmul.f32 %v1373, %v1405
    %v1411 = vmul.f32 %v1374, %v1407
    %v1412 = vpack.c.bf16 %v1410, %v1410
    %v1413 = vpack.c.bf16 %v1411, %v1411
    %v1414 = vld [vmem:[%s12] sm:$0xf]
    %v1415 = vld [vmem:[%s12 + $0x4] sm:$0xf]
    %v1416 = vld [vmem:[%s12 + $0x8] sm:$0xf]
    %v1417 = vld [vmem:[%s12 + $0xc] sm:$0xf]
    %v1418 = vld [vmem:[%s12 + $0x10] sm:$0xf]
    %v1419 = vld [vmem:[%s12 + $0x14] sm:$0xf]
    %v1420 = vld [vmem:[%s12 + $0x18] sm:$0xf]
    %v1421 = vld [vmem:[%s12 + $0x1c] sm:$0xf]
    %v1422 = vld [vmem:[%s12 + $0x20] sm:$0xf]
    %v1423 = vld [vmem:[%s12 + $0x24] sm:$0xf]
    %v1424 = vld [vmem:[%s12 + $0x28] sm:$0xf]
    %v1425 = vld [vmem:[%s12 + $0x2c] sm:$0xf]
    %v1426 = vld [vmem:[%s12 + $0x30] sm:$0xf]
    %v1427 = vld [vmem:[%s12 + $0x34] sm:$0xf]
    %v1428 = vld [vmem:[%s12 + $0x38] sm:$0xf]
    %v1429 = vld [vmem:[%s12 + $0x3c] sm:$0xf]
    %s1430 = scalar_lea.vmem %s11, 2
    %v1431 = vld [vmem:[%s1430] sm:$0x3]
    %v1433 = vrot.slane %v1431, 1
    %v1436 = vmul.f32 %v1403, %v1431
    %v1437 = vmul.f32 %v1404, %v1433
    %v1438 = vpack.c.bf16 %v1436, %v1436
    %v1439 = vpack.c.bf16 %v1437, %v1437
    %s1440 = scalar_lea.vmem %s12, 64
    %v1441 = vld [vmem:[%s1440] sm:$0xf]
    %v1442 = vld [vmem:[%s1440 + $0x4] sm:$0xf]
    %v1443 = vld [vmem:[%s1440 + $0x8] sm:$0xf]
    %v1444 = vld [vmem:[%s1440 + $0xc] sm:$0xf]
    %v1445 = vld [vmem:[%s1440 + $0x10] sm:$0xf]
    %v1446 = vld [vmem:[%s1440 + $0x14] sm:$0xf]
    %v1447 = vld [vmem:[%s1440 + $0x18] sm:$0xf]
    %v1448 = vld [vmem:[%s1440 + $0x1c] sm:$0xf]
    %v1449 = vld [vmem:[%s1440 + $0x20] sm:$0xf]
    %v1450 = vld [vmem:[%s1440 + $0x24] sm:$0xf]
    %v1451 = vld [vmem:[%s1440 + $0x28] sm:$0xf]
    %v1452 = vld [vmem:[%s1440 + $0x2c] sm:$0xf]
    %v1453 = vld [vmem:[%s1440 + $0x30] sm:$0xf]
    %v1454 = vld [vmem:[%s1440 + $0x34] sm:$0xf]
    %v1455 = vld [vmem:[%s1440 + $0x38] sm:$0xf]
    %v1456 = vld [vmem:[%s1440 + $0x3c] sm:$0xf]
    %v1459 = vunpack.c.l.b16 %v1438
    %v1460 = vunpack.c.l.b16 %v1439
    %v1461 = vrot.slane %v1460, 7
    %vm1462 = vcmask 1041409
    %v1463 = vsel %vm1462, %v1461, %v1459
    %v1464 = vpack.c.b16 %v1463, %v1463
    %v1482 = vunpack.c.l.b16 %v1441
    %v1483 = vunpack.c.l.b16 %v1442
    %v1484 = vunpack.c.l.b16 %v1443
    %v1485 = vunpack.c.l.b16 %v1444
    %v1486 = vunpack.c.l.b16 %v1445
    %v1487 = vunpack.c.l.b16 %v1446
    %v1488 = vunpack.c.l.b16 %v1447
    %v1489 = vunpack.c.l.b16 %v1448
    %v1490 = vunpack.c.l.b16 %v1449
    %v1491 = vunpack.c.l.b16 %v1450
    %v1492 = vunpack.c.l.b16 %v1451
    %v1493 = vunpack.c.l.b16 %v1452
    %v1494 = vunpack.c.l.b16 %v1453
    %v1495 = vunpack.c.l.b16 %v1454
    %v1496 = vunpack.c.l.b16 %v1455
    %v1497 = vunpack.c.l.b16 %v1456
    %v1498 = vpack.c.b16 %v1483, %v1482
    %v1499 = vpack.c.b16 %v1485, %v1484
    %v1500 = vpack.c.b16 %v1487, %v1486
    %v1501 = vpack.c.b16 %v1489, %v1488
    %v1502 = vpack.c.b16 %v1491, %v1490
    %v1503 = vpack.c.b16 %v1493, %v1492
    %v1504 = vpack.c.b16 %v1495, %v1494
    %v1505 = vpack.c.b16 %v1497, %v1496
    %1514 = vmatprep.subr.bf16.mxu0 0
    %1515 = vmatpush1.bf16.msra.mxu0 %v1498
    %1516 = vmatprep.subr.bf16.mxu0 0
    %1517 = vmatpush1.bf16.msra.mxu0 %v1499
    %1518 = vmatprep.subr.bf16.mxu0 0
    %1519 = vmatpush1.bf16.msra.mxu0 %v1500
    %1520 = vmatprep.subr.bf16.mxu0 0
    %1521 = vmatpush1.bf16.msra.mxu0 %v1501
    %1522 = vmatprep.subr.bf16.mxu0 0
    %1523 = vmatpush1.bf16.msra.mxu0 %v1502
    %1524 = vmatprep.subr.bf16.mxu0 0
    %1525 = vmatpush1.bf16.msra.mxu0 %v1503
    %1526 = vmatprep.subr.bf16.mxu0 0
    %1527 = vmatpush1.bf16.msra.mxu0 %v1504
    %1528 = vmatprep.subr.bf16.mxu0 0
    %1529 = vmatpush1.bf16.msra.mxu0 %v1505
    %1530 = vmatprep.subr.bf16.mxu0 0
    %1531 = vmatpush1.bf16.msra.mxu0 0
    %1532 = vmatprep.subr.bf16.mxu0 0
    %1533 = vmatpush1.bf16.msra.mxu0 0
    %1534 = vmatprep.subr.bf16.mxu0 0
    %1535 = vmatpush1.bf16.msra.mxu0 0
    %1536 = vmatprep.subr.bf16.mxu0 0
    %1537 = vmatpush1.bf16.msra.mxu0 0
    %1538 = vmatprep.subr.bf16.mxu0 0
    %1539 = vmatpush1.bf16.msra.mxu0 0
    %1540 = vmatprep.subr.bf16.mxu0 0
    %1541 = vmatpush1.bf16.msra.mxu0 0
    %1542 = vmatprep.subr.bf16.mxu0 0
    %1543 = vmatpush1.bf16.msra.mxu0 0
    %1544 = vmatprep.subr.bf16.mxu0 0
    %1545 = vmatpush1.bf16.msra.mxu0 0
    %1546 = vmatprep.mubr.bf16.mxu0 0
    %1547 = vmatmul.mubr.bf16.gmra.mrb[0].mxu0 %v1464
    %v1548 = vpop.f32.mrb[0].mxu0
    %v1549 = vadd.f32 0.0, %v1548
    %v1550 = vpop.f32.mrb[0].mxu0
    %v1551 = vpop.f32.mrb[0].mxu0
    %v1552 = vpop.f32.mrb[0].mxu0
    %1553 = vdwg.mxu0
    %v1556 = vunpack.c.l.b16 %v1412
    %v1557 = vunpack.c.l.b16 %v1413
    %v1558 = vrot.slane %v1557, 7
    %v1559 = vsel %vm1462, %v1558, %v1556
    %v1560 = vpack.c.b16 %v1559, %v1559
    %v1578 = vunpack.c.l.b16 %v1414
    %v1579 = vunpack.c.l.b16 %v1415
    %v1580 = vunpack.c.l.b16 %v1416
    %v1581 = vunpack.c.l.b16 %v1417
    %v1582 = vunpack.c.l.b16 %v1418
    %v1583 = vunpack.c.l.b16 %v1419
    %v1584 = vunpack.c.l.b16 %v1420
    %v1585 = vunpack.c.l.b16 %v1421
    %v1586 = vunpack.c.l.b16 %v1422
    %v1587 = vunpack.c.l.b16 %v1423
    %v1588 = vunpack.c.l.b16 %v1424
    %v1589 = vunpack.c.l.b16 %v1425
    %v1590 = vunpack.c.l.b16 %v1426
    %v1591 = vunpack.c.l.b16 %v1427
    %v1592 = vunpack.c.l.b16 %v1428
    %v1593 = vunpack.c.l.b16 %v1429
    %v1594 = vpack.c.b16 %v1579, %v1578
    %v1595 = vpack.c.b16 %v1581, %v1580
    %v1596 = vpack.c.b16 %v1583, %v1582
    %v1597 = vpack.c.b16 %v1585, %v1584
    %v1598 = vpack.c.b16 %v1587, %v1586
    %v1599 = vpack.c.b16 %v1589, %v1588
    %v1600 = vpack.c.b16 %v1591, %v1590
    %v1601 = vpack.c.b16 %v1593, %v1592
    %1610 = vmatprep.subr.bf16.mxu0 0
    %1611 = vmatpush1.bf16.msra.mxu0 %v1594
    %1612 = vmatprep.subr.bf16.mxu0 0
    %1613 = vmatpush1.bf16.msra.mxu0 %v1595
    %1614 = vmatprep.subr.bf16.mxu0 0
    %1615 = vmatpush1.bf16.msra.mxu0 %v1596
    %1616 = vmatprep.subr.bf16.mxu0 0
    %1617 = vmatpush1.bf16.msra.mxu0 %v1597
    %1618 = vmatprep.subr.bf16.mxu0 0
    %1619 = vmatpush1.bf16.msra.mxu0 %v1598
    %1620 = vmatprep.subr.bf16.mxu0 0
    %1621 = vmatpush1.bf16.msra.mxu0 %v1599
    %1622 = vmatprep.subr.bf16.mxu0 0
    %1623 = vmatpush1.bf16.msra.mxu0 %v1600
    %1624 = vmatprep.subr.bf16.mxu0 0
    %1625 = vmatpush1.bf16.msra.mxu0 %v1601
    %1626 = vmatprep.subr.bf16.mxu0 0
    %1627 = vmatpush1.bf16.msra.mxu0 0
    %1628 = vmatprep.subr.bf16.mxu0 0
    %1629 = vmatpush1.bf16.msra.mxu0 0
    %1630 = vmatprep.subr.bf16.mxu0 0
    %1631 = vmatpush1.bf16.msra.mxu0 0
    %1632 = vmatprep.subr.bf16.mxu0 0
    %1633 = vmatpush1.bf16.msra.mxu0 0
    %1634 = vmatprep.subr.bf16.mxu0 0
    %1635 = vmatpush1.bf16.msra.mxu0 0
    %1636 = vmatprep.subr.bf16.mxu0 0
    %1637 = vmatpush1.bf16.msra.mxu0 0
    %1638 = vmatprep.subr.bf16.mxu0 0
    %1639 = vmatpush1.bf16.msra.mxu0 0
    %1640 = vmatprep.subr.bf16.mxu0 0
    %1641 = vmatpush1.bf16.msra.mxu0 0
    %1642 = vmatprep.mubr.bf16.mxu0 0
    %1643 = vmatmul.mubr.bf16.gmra.mrb[0].mxu0 %v1560
    %v1644 = vpop.f32.mrb[0].mxu0
    %v1645 = vadd.f32 %v1549, %v1644
    %v1646 = vpop.f32.mrb[0].mxu0
    %v1647 = vpop.f32.mrb[0].mxu0
    %v1648 = vpop.f32.mrb[0].mxu0
    %1649 = vdwg.mxu0
    %v1650 = vld [vmem:[%s3] sm:$0xff]
    %v1651 = vld [vmem:[%s3 + $0x8] sm:$0xff]
    %v1652 = vld [vmem:[%s3 + $0x10] sm:$0xff]
    %v1653 = vld [vmem:[%s3 + $0x18] sm:$0xff]
    %v1654 = vld [vmem:[%s3 + $0x20] sm:$0xff]
    %v1655 = vld [vmem:[%s3 + $0x28] sm:$0xff]
    %v1656 = vld [vmem:[%s3 + $0x30] sm:$0xff]
    %v1657 = vld [vmem:[%s3 + $0x38] sm:$0xff]
    %v1658 = vld [vmem:[%s3 + $0x40] sm:$0xff]
    %v1659 = vld [vmem:[%s3 + $0x48] sm:$0xff]
    %v1660 = vld [vmem:[%s3 + $0x50] sm:$0xff]
    %v1661 = vld [vmem:[%s3 + $0x58] sm:$0xff]
    %v1662 = vld [vmem:[%s3 + $0x60] sm:$0xff]
    %v1663 = vld [vmem:[%s3 + $0x68] sm:$0xff]
    %v1664 = vld [vmem:[%s3 + $0x70] sm:$0xff]
    %v1665 = vld [vmem:[%s3 + $0x78] sm:$0xff]
    %v1666 = vld [vmem:[%s3 + $0x80] sm:$0xff]
    %v1667 = vld [vmem:[%s3 + $0x88] sm:$0xff]
    %v1668 = vld [vmem:[%s3 + $0x90] sm:$0xff]
    %v1669 = vld [vmem:[%s3 + $0x98] sm:$0xff]
    %v1670 = vld [vmem:[%s3 + $0xa0] sm:$0xff]
    %v1671 = vld [vmem:[%s3 + $0xa8] sm:$0xff]
    %v1672 = vld [vmem:[%s3 + $0xb0] sm:$0xff]
    %v1673 = vld [vmem:[%s3 + $0xb8] sm:$0xff]
    %v1674 = vld [vmem:[%s3 + $0xc0] sm:$0xff]
    %v1675 = vld [vmem:[%s3 + $0xc8] sm:$0xff]
    %v1676 = vld [vmem:[%s3 + $0xd0] sm:$0xff]
    %v1677 = vld [vmem:[%s3 + $0xd8] sm:$0xff]
    %v1678 = vld [vmem:[%s3 + $0xe0] sm:$0xff]
    %v1679 = vld [vmem:[%s3 + $0xe8] sm:$0xff]
    %v1680 = vld [vmem:[%s3 + $0xf0] sm:$0xff]
    %v1681 = vld [vmem:[%s3 + $0xf8] sm:$0xff]
    %v1714 = vunpack.c.l.b16 %v1650
    %v1715 = vunpack.c.h.b16 %v1650
    %v1716 = vunpack.c.l.b16 %v1651
    %v1717 = vunpack.c.h.b16 %v1651
    %v1718 = vunpack.c.l.b16 %v1652
    %v1719 = vunpack.c.h.b16 %v1652
    %v1720 = vunpack.c.l.b16 %v1653
    %v1721 = vunpack.c.h.b16 %v1653
    %v1722 = vunpack.c.l.b16 %v1654
    %v1723 = vunpack.c.h.b16 %v1654
    %v1724 = vunpack.c.l.b16 %v1655
    %v1725 = vunpack.c.h.b16 %v1655
    %v1726 = vunpack.c.l.b16 %v1656
    %v1727 = vunpack.c.h.b16 %v1656
    %v1728 = vunpack.c.l.b16 %v1657
    %v1729 = vunpack.c.h.b16 %v1657
    %v1730 = vunpack.c.l.b16 %v1658
    %v1731 = vunpack.c.h.b16 %v1658
    %v1732 = vunpack.c.l.b16 %v1659
    %v1733 = vunpack.c.h.b16 %v1659
    %v1734 = vunpack.c.l.b16 %v1660
    %v1735 = vunpack.c.h.b16 %v1660
    %v1736 = vunpack.c.l.b16 %v1661
    %v1737 = vunpack.c.h.b16 %v1661
    %v1738 = vunpack.c.l.b16 %v1662
    %v1739 = vunpack.c.h.b16 %v1662
    %v1740 = vunpack.c.l.b16 %v1663
    %v1741 = vunpack.c.h.b16 %v1663
    %v1742 = vunpack.c.l.b16 %v1664
    %v1743 = vunpack.c.h.b16 %v1664
    %v1744 = vunpack.c.l.b16 %v1665
    %v1745 = vunpack.c.h.b16 %v1665
    %v1746 = vunpack.c.l.b16 %v1666
    %v1747 = vunpack.c.h.b16 %v1666
    %v1748 = vunpack.c.l.b16 %v1667
    %v1749 = vunpack.c.h.b16 %v1667
    %v1750 = vunpack.c.l.b16 %v1668
    %v1751 = vunpack.c.h.b16 %v1668
    %v1752 = vunpack.c.l.b16 %v1669
    %v1753 = vunpack.c.h.b16 %v1669
    %v1754 = vunpack.c.l.b16 %v1670
    %v1755 = vunpack.c.h.b16 %v1670
    %v1756 = vunpack.c.l.b16 %v1671
    %v1757 = vunpack.c.h.b16 %v1671
    %v1758 = vunpack.c.l.b16 %v1672
    %v1759 = vunpack.c.h.b16 %v1672
    %v1760 = vunpack.c.l.b16 %v1673
    %v1761 = vunpack.c.h.b16 %v1673
    %v1762 = vunpack.c.l.b16 %v1674
    %v1763 = vunpack.c.h.b16 %v1674
    %v1764 = vunpack.c.l.b16 %v1675
    %v1765 = vunpack.c.h.b16 %v1675
    %v1766 = vunpack.c.l.b16 %v1676
    %v1767 = vunpack.c.h.b16 %v1676
    %v1768 = vunpack.c.l.b16 %v1677
    %v1769 = vunpack.c.h.b16 %v1677
    %v1770 = vunpack.c.l.b16 %v1678
    %v1771 = vunpack.c.h.b16 %v1678
    %v1772 = vunpack.c.l.b16 %v1679
    %v1773 = vunpack.c.h.b16 %v1679
    %v1774 = vunpack.c.l.b16 %v1680
    %v1775 = vunpack.c.h.b16 %v1680
    %v1776 = vunpack.c.l.b16 %v1681
    %v1777 = vunpack.c.h.b16 %v1681
    %v1778 = vpack.c.b16 %v1718, %v1714
    %v1779 = vpack.c.b16 %v1719, %v1715
    %v1780 = vpack.c.b16 %v1720, %v1716
    %v1781 = vpack.c.b16 %v1721, %v1717
    %v1782 = vpack.c.b16 %v1726, %v1722
    %v1783 = vpack.c.b16 %v1727, %v1723
    %v1784 = vpack.c.b16 %v1728, %v1724
    %v1785 = vpack.c.b16 %v1729, %v1725
    %v1786 = vpack.c.b16 %v1734, %v1730
    %v1787 = vpack.c.b16 %v1735, %v1731
    %v1788 = vpack.c.b16 %v1736, %v1732
    %v1789 = vpack.c.b16 %v1737, %v1733
    %v1790 = vpack.c.b16 %v1742, %v1738
    %v1791 = vpack.c.b16 %v1743, %v1739
    %v1792 = vpack.c.b16 %v1744, %v1740
    %v1793 = vpack.c.b16 %v1745, %v1741
    %v1794 = vpack.c.b16 %v1750, %v1746
    %v1795 = vpack.c.b16 %v1751, %v1747
    %v1796 = vpack.c.b16 %v1752, %v1748
    %v1797 = vpack.c.b16 %v1753, %v1749
    %v1798 = vpack.c.b16 %v1758, %v1754
    %v1799 = vpack.c.b16 %v1759, %v1755
    %v1800 = vpack.c.b16 %v1760, %v1756
    %v1801 = vpack.c.b16 %v1761, %v1757
    %v1802 = vpack.c.b16 %v1766, %v1762
    %v1803 = vpack.c.b16 %v1767, %v1763
    %v1804 = vpack.c.b16 %v1768, %v1764
    %v1805 = vpack.c.b16 %v1769, %v1765
    %v1806 = vpack.c.b16 %v1774, %v1770
    %v1807 = vpack.c.b16 %v1775, %v1771
    %v1808 = vpack.c.b16 %v1776, %v1772
    %v1809 = vpack.c.b16 %v1777, %v1773
    %1842 = vmatprep.subr.bf16.mxu0 0
    %1843 = vmatpush1.bf16.msra.mxu0 %v729
    %1844 = vmatprep.subr.bf16.mxu0 0
    %1845 = vmatpush1.bf16.msra.mxu0 %v730
    %1846 = vmatprep.subr.bf16.mxu0 0
    %1847 = vmatpush1.bf16.msra.mxu0 %v731
    %1848 = vmatprep.subr.bf16.mxu0 0
    %1849 = vmatpush1.bf16.msra.mxu0 %v732
    %1850 = vmatprep.subr.bf16.mxu0 0
    %1851 = vmatpush1.bf16.msra.mxu0 %v733
    %1852 = vmatprep.subr.bf16.mxu0 0
    %1853 = vmatpush1.bf16.msra.mxu0 %v734
    %1854 = vmatprep.subr.bf16.mxu0 0
    %1855 = vmatpush1.bf16.msra.mxu0 %v735
    %1856 = vmatprep.subr.bf16.mxu0 0
    %1857 = vmatpush1.bf16.msra.mxu0 %v736
    %1858 = vmatprep.subr.bf16.mxu0 0
    %1859 = vmatpush1.bf16.msra.mxu0 %v737
    %1860 = vmatprep.subr.bf16.mxu0 0
    %1861 = vmatpush1.bf16.msra.mxu0 %v738
    %1862 = vmatprep.subr.bf16.mxu0 0
    %1863 = vmatpush1.bf16.msra.mxu0 %v739
    %1864 = vmatprep.subr.bf16.mxu0 0
    %1865 = vmatpush1.bf16.msra.mxu0 %v740
    %1866 = vmatprep.subr.bf16.mxu0 0
    %1867 = vmatpush1.bf16.msra.mxu0 %v741
    %1868 = vmatprep.subr.bf16.mxu0 0
    %1869 = vmatpush1.bf16.msra.mxu0 %v742
    %1870 = vmatprep.subr.bf16.mxu0 0
    %1871 = vmatpush1.bf16.msra.mxu0 %v743
    %1872 = vmatprep.subr.bf16.mxu0 0
    %1873 = vmatpush1.bf16.msra.mxu0 %v744
    %1874 = vmatprep.mubr.bf16.mxu0 %v1779
    %1875 = vmatmul.mubr.bf16.gmra.mrb[0].mxu0 %v1778
    %v1876 = vpop.f32.mrb[0].mxu0
    %v1877 = vadd.f32 0.0, %v1876
    %v1878 = vpop.f32.mrb[0].mxu0
    %v1879 = vpop.f32.mrb[0].mxu0
    %v1880 = vadd.f32 0.0, %v1879
    %v1881 = vpop.f32.mrb[0].mxu0
    %1882 = vmatprep.mubr.bf16.mxu0 %v1783
    %1883 = vmatmul.mubr.bf16.gmra.mrb[0].mxu0 %v1782
    %v1884 = vpop.f32.mrb[0].mxu0
    %v1885 = vadd.f32 0.0, %v1884
    %v1886 = vpop.f32.mrb[0].mxu0
    %v1887 = vpop.f32.mrb[0].mxu0
    %v1888 = vadd.f32 0.0, %v1887
    %v1889 = vpop.f32.mrb[0].mxu0
    %1890 = vmatprep.mubr.bf16.mxu0 %v1787
    %1891 = vmatmul.mubr.bf16.gmra.mrb[0].mxu0 %v1786
    %v1892 = vpop.f32.mrb[0].mxu0
    %v1893 = vadd.f32 0.0, %v1892
    %v1894 = vpop.f32.mrb[0].mxu0
    %v1895 = vpop.f32.mrb[0].mxu0
    %v1896 = vadd.f32 0.0, %v1895
    %v1897 = vpop.f32.mrb[0].mxu0
    %1898 = vmatprep.mubr.bf16.mxu0 %v1791
    %1899 = vmatmul.mubr.bf16.gmra.mrb[0].mxu0 %v1790
    %v1900 = vpop.f32.mrb[0].mxu0
    %v1901 = vadd.f32 0.0, %v1900
    %v1902 = vpop.f32.mrb[0].mxu0
    %v1903 = vpop.f32.mrb[0].mxu0
    %v1904 = vadd.f32 0.0, %v1903
    %v1905 = vpop.f32.mrb[0].mxu0
    %1906 = vmatprep.mubr.bf16.mxu0 %v1795
    %1907 = vmatmul.mubr.bf16.gmra.mrb[0].mxu0 %v1794
    %v1908 = vpop.f32.mrb[0].mxu0
    %v1909 = vadd.f32 0.0, %v1908
    %v1910 = vpop.f32.mrb[0].mxu0
    %v1911 = vpop.f32.mrb[0].mxu0
    %v1912 = vadd.f32 0.0, %v1911
    %v1913 = vpop.f32.mrb[0].mxu0
    %1914 = vmatprep.mubr.bf16.mxu0 %v1799
    %1915 = vmatmul.mubr.bf16.gmra.mrb[0].mxu0 %v1798
    %v1916 = vpop.f32.mrb[0].mxu0
    %v1917 = vadd.f32 0.0, %v1916
    %v1918 = vpop.f32.mrb[0].mxu0
    %v1919 = vpop.f32.mrb[0].mxu0
    %v1920 = vadd.f32 0.0, %v1919
    %v1921 = vpop.f32.mrb[0].mxu0
    %1922 = vmatprep.mubr.bf16.mxu0 %v1803
    %1923 = vmatmul.mubr.bf16.gmra.mrb[0].mxu0 %v1802
    %v1924 = vpop.f32.mrb[0].mxu0
    %v1925 = vadd.f32 0.0, %v1924
    %v1926 = vpop.f32.mrb[0].mxu0
    %v1927 = vpop.f32.mrb[0].mxu0
    %v1928 = vadd.f32 0.0, %v1927
    %v1929 = vpop.f32.mrb[0].mxu0
    %1930 = vmatprep.mubr.bf16.mxu0 %v1807
    %1931 = vmatmul.mubr.bf16.gmra.mrb[0].mxu0 %v1806
    %v1932 = vpop.f32.mrb[0].mxu0
    %v1933 = vadd.f32 0.0, %v1932
    %v1934 = vpop.f32.mrb[0].mxu0
    %v1935 = vpop.f32.mrb[0].mxu0
    %v1936 = vadd.f32 0.0, %v1935
    %v1937 = vpop.f32.mrb[0].mxu0
    %1938 = vdwg.mxu0
    %1939 = vmatprep.subr.bf16.mxu0 0
    %1940 = vmatpush1.bf16.msra.mxu0 %v745
    %1941 = vmatprep.subr.bf16.mxu0 0
    %1942 = vmatpush1.bf16.msra.mxu0 %v746
    %1943 = vmatprep.subr.bf16.mxu0 0
    %1944 = vmatpush1.bf16.msra.mxu0 %v747
    %1945 = vmatprep.subr.bf16.mxu0 0
    %1946 = vmatpush1.bf16.msra.mxu0 %v748
    %1947 = vmatprep.subr.bf16.mxu0 0
    %1948 = vmatpush1.bf16.msra.mxu0 %v749
    %1949 = vmatprep.subr.bf16.mxu0 0
    %1950 = vmatpush1.bf16.msra.mxu0 %v750
    %1951 = vmatprep.subr.bf16.mxu0 0
    %1952 = vmatpush1.bf16.msra.mxu0 %v751
    %1953 = vmatprep.subr.bf16.mxu0 0
    %1954 = vmatpush1.bf16.msra.mxu0 %v752
    %1955 = vmatprep.subr.bf16.mxu0 0
    %1956 = vmatpush1.bf16.msra.mxu0 %v753
    %1957 = vmatprep.subr.bf16.mxu0 0
    %1958 = vmatpush1.bf16.msra.mxu0 %v754
    %1959 = vmatprep.subr.bf16.mxu0 0
    %1960 = vmatpush1.bf16.msra.mxu0 %v755
    %1961 = vmatprep.subr.bf16.mxu0 0
    %1962 = vmatpush1.bf16.msra.mxu0 %v756
    %1963 = vmatprep.subr.bf16.mxu0 0
    %1964 = vmatpush1.bf16.msra.mxu0 %v757
    %1965 = vmatprep.subr.bf16.mxu0 0
    %1966 = vmatpush1.bf16.msra.mxu0 %v758
    %1967 = vmatprep.subr.bf16.mxu0 0
    %1968 = vmatpush1.bf16.msra.mxu0 %v759
    %1969 = vmatprep.subr.bf16.mxu0 0
    %1970 = vmatpush1.bf16.msra.mxu0 %v760
    %1971 = vmatprep.mubr.bf16.mxu0 %v1781
    %1972 = vmatmul.mubr.bf16.gmra.mrb[0].mxu0 %v1780
    %v1973 = vpop.f32.mrb[0].mxu0
    %v1974 = vadd.f32 %v1877, %v1973
    %v1975 = vpop.f32.mrb[0].mxu0
    %v1976 = vpop.f32.mrb[0].mxu0
    %v1977 = vadd.f32 %v1880, %v1976
    %v1978 = vpop.f32.mrb[0].mxu0
    %1979 = vmatprep.mubr.bf16.mxu0 %v1785
    %1980 = vmatmul.mubr.bf16.gmra.mrb[0].mxu0 %v1784
    %v1981 = vpop.f32.mrb[0].mxu0
    %v1982 = vadd.f32 %v1885, %v1981
    %v1983 = vpop.f32.mrb[0].mxu0
    %v1984 = vpop.f32.mrb[0].mxu0
    %v1985 = vadd.f32 %v1888, %v1984
    %v1986 = vpop.f32.mrb[0].mxu0
    %1987 = vmatprep.mubr.bf16.mxu0 %v1789
    %1988 = vmatmul.mubr.bf16.gmra.mrb[0].mxu0 %v1788
    %v1989 = vpop.f32.mrb[0].mxu0
    %v1990 = vadd.f32 %v1893, %v1989
    %v1991 = vpop.f32.mrb[0].mxu0
    %v1992 = vpop.f32.mrb[0].mxu0
    %v1993 = vadd.f32 %v1896, %v1992
    %v1994 = vpop.f32.mrb[0].mxu0
    %1995 = vmatprep.mubr.bf16.mxu0 %v1793
    %1996 = vmatmul.mubr.bf16.gmra.mrb[0].mxu0 %v1792
    %v1997 = vpop.f32.mrb[0].mxu0
    %v1998 = vadd.f32 %v1901, %v1997
    %v1999 = vpop.f32.mrb[0].mxu0
    %v2000 = vpop.f32.mrb[0].mxu0
    %v2001 = vadd.f32 %v1904, %v2000
    %v2002 = vpop.f32.mrb[0].mxu0
    %2003 = vmatprep.mubr.bf16.mxu0 %v1797
    %2004 = vmatmul.mubr.bf16.gmra.mrb[0].mxu0 %v1796
    %v2005 = vpop.f32.mrb[0].mxu0
    %v2006 = vadd.f32 %v1909, %v2005
    %v2007 = vpop.f32.mrb[0].mxu0
    %v2008 = vpop.f32.mrb[0].mxu0
    %v2009 = vadd.f32 %v1912, %v2008
    %v2010 = vpop.f32.mrb[0].mxu0
    %2011 = vmatprep.mubr.bf16.mxu0 %v1801
    %2012 = vmatmul.mubr.bf16.gmra.mrb[0].mxu0 %v1800
    %v2013 = vpop.f32.mrb[0].mxu0
    %v2014 = vadd.f32 %v1917, %v2013
    %v2015 = vpop.f32.mrb[0].mxu0
    %v2016 = vpop.f32.mrb[0].mxu0
    %v2017 = vadd.f32 %v1920, %v2016
    %v2018 = vpop.f32.mrb[0].mxu0
    %2019 = vmatprep.mubr.bf16.mxu0 %v1805
    %2020 = vmatmul.mubr.bf16.gmra.mrb[0].mxu0 %v1804
    %v2021 = vpop.f32.mrb[0].mxu0
    %v2022 = vadd.f32 %v1925, %v2021
    %v2023 = vpop.f32.mrb[0].mxu0
    %v2024 = vpop.f32.mrb[0].mxu0
    %v2025 = vadd.f32 %v1928, %v2024
    %v2026 = vpop.f32.mrb[0].mxu0
    %2027 = vmatprep.mubr.bf16.mxu0 %v1809
    %2028 = vmatmul.mubr.bf16.gmra.mrb[0].mxu0 %v1808
    %v2029 = vpop.f32.mrb[0].mxu0
    %v2030 = vadd.f32 %v1933, %v2029
    %v2031 = vpop.f32.mrb[0].mxu0
    %v2032 = vpop.f32.mrb[0].mxu0
    %v2033 = vadd.f32 %v1936, %v2032
    %v2034 = vpop.f32.mrb[0].mxu0
    %2035 = vdwg.mxu0
    %v2036 = vpack.c.bf16 %v1977, %v1974
    %v2037 = vpack.c.bf16 %v1985, %v1982
    %v2038 = vpack.c.bf16 %v1993, %v1990
    %v2039 = vpack.c.bf16 %v2001, %v1998
    %v2040 = vpack.c.bf16 %v2009, %v2006
    %v2041 = vpack.c.bf16 %v2017, %v2014
    %v2042 = vpack.c.bf16 %v2025, %v2022
    %v2043 = vpack.c.bf16 %v2033, %v2030
    %s2044 = scalar_lea.vmem %s7, 64
    %v2045 = vld [vmem:[%s2044] sm:$0xf]
    %v2046 = vld [vmem:[%s2044 + $0x4] sm:$0xf]
    %v2047 = vld [vmem:[%s2044 + $0x8] sm:$0xf]
    %v2048 = vld [vmem:[%s2044 + $0xc] sm:$0xf]
    %v2049 = vld [vmem:[%s2044 + $0x10] sm:$0xf]
    %v2050 = vld [vmem:[%s2044 + $0x14] sm:$0xf]
    %v2051 = vld [vmem:[%s2044 + $0x18] sm:$0xf]
    %v2052 = vld [vmem:[%s2044 + $0x1c] sm:$0xf]
    %v2053 = vld [vmem:[%s2044 + $0x20] sm:$0xf]
    %v2054 = vld [vmem:[%s2044 + $0x24] sm:$0xf]
    %v2055 = vld [vmem:[%s2044 + $0x28] sm:$0xf]
    %v2056 = vld [vmem:[%s2044 + $0x2c] sm:$0xf]
    %v2057 = vld [vmem:[%s2044 + $0x30] sm:$0xf]
    %v2058 = vld [vmem:[%s2044 + $0x34] sm:$0xf]
    %v2059 = vld [vmem:[%s2044 + $0x38] sm:$0xf]
    %v2060 = vld [vmem:[%s2044 + $0x3c] sm:$0xf]
    %v2061 = vld [vmem:[%s8 + $0x1] sm:$0x1]
    %v2062 = vlaneseq
    %v2063 = vshrl.u32 %v2062, 7
    %v2064 = vsub.s32 0, %v2063
    %v2065 = vrot.slane %v2061, %v2064
    %v2082 = vunpack.c.l.b16 %v2045
    %v2083 = vunpack.c.l.b16 %v2046
    %v2084 = vunpack.c.l.b16 %v2047
    %v2085 = vunpack.c.l.b16 %v2048
    %v2086 = vunpack.c.l.b16 %v2049
    %v2087 = vunpack.c.l.b16 %v2050
    %v2088 = vunpack.c.l.b16 %v2051
    %v2089 = vunpack.c.l.b16 %v2052
    %v2090 = vunpack.c.l.b16 %v2053
    %v2091 = vunpack.c.l.b16 %v2054
    %v2092 = vunpack.c.l.b16 %v2055
    %v2093 = vunpack.c.l.b16 %v2056
    %v2094 = vunpack.c.l.b16 %v2057
    %v2095 = vunpack.c.l.b16 %v2058
    %v2096 = vunpack.c.l.b16 %v2059
    %v2097 = vunpack.c.l.b16 %v2060
    %v2098 = vpack.c.b16 %v2083, %v2082
    %v2099 = vpack.c.b16 %v2085, %v2084
    %v2100 = vpack.c.b16 %v2087, %v2086
    %v2101 = vpack.c.b16 %v2089, %v2088
    %v2102 = vpack.c.b16 %v2091, %v2090
    %v2103 = vpack.c.b16 %v2093, %v2092
    %v2104 = vpack.c.b16 %v2095, %v2094
    %v2105 = vpack.c.b16 %v2097, %v2096
    %2114 = vmatprep.subr.bf16.mxu0 0
    %2115 = vmatpush1.bf16.msra.mxu0 %v2098
    %2116 = vmatprep.subr.bf16.mxu0 0
    %2117 = vmatpush1.bf16.msra.mxu0 %v2099
    %2118 = vmatprep.subr.bf16.mxu0 0
    %2119 = vmatpush1.bf16.msra.mxu0 %v2100
    %2120 = vmatprep.subr.bf16.mxu0 0
    %2121 = vmatpush1.bf16.msra.mxu0 %v2101
    %2122 = vmatprep.subr.bf16.mxu0 0
    %2123 = vmatpush1.bf16.msra.mxu0 %v2102
    %2124 = vmatprep.subr.bf16.mxu0 0
    %2125 = vmatpush1.bf16.msra.mxu0 %v2103
    %2126 = vmatprep.subr.bf16.mxu0 0
    %2127 = vmatpush1.bf16.msra.mxu0 %v2104
    %2128 = vmatprep.subr.bf16.mxu0 0
    %2129 = vmatpush1.bf16.msra.mxu0 %v2105
    %2130 = vmatprep.subr.bf16.mxu0 0
    %2131 = vmatpush1.bf16.msra.mxu0 0
    %2132 = vmatprep.subr.bf16.mxu0 0
    %2133 = vmatpush1.bf16.msra.mxu0 0
    %2134 = vmatprep.subr.bf16.mxu0 0
    %2135 = vmatpush1.bf16.msra.mxu0 0
    %2136 = vmatprep.subr.bf16.mxu0 0
    %2137 = vmatpush1.bf16.msra.mxu0 0
    %2138 = vmatprep.subr.bf16.mxu0 0
    %2139 = vmatpush1.bf16.msra.mxu0 0
    %2140 = vmatprep.subr.bf16.mxu0 0
    %2141 = vmatpush1.bf16.msra.mxu0 0
    %2142 = vmatprep.subr.bf16.mxu0 0
    %2143 = vmatpush1.bf16.msra.mxu0 0
    %2144 = vmatprep.subr.bf16.mxu0 0
    %2145 = vmatpush1.bf16.msra.mxu0 0
    %2146 = vmatprep.mubr.bf16.mxu0 0
    %2147 = vmatmul.mubr.bf16.gmra.mrb[0].mxu0 %v2036
    %v2148 = vpop.f32.mrb[0].mxu0
    %v2149 = vadd.f32 %v2065, %v2148
    %v2150 = vpop.f32.mrb[0].mxu0
    %v2151 = vpop.f32.mrb[0].mxu0
    %v2152 = vadd.f32 %v2065, %v2151
    %v2153 = vpop.f32.mrb[0].mxu0
    %2154 = vmatprep.mubr.bf16.mxu0 0
    %2155 = vmatmul.mubr.bf16.gmra.mrb[0].mxu0 %v2037
    %v2156 = vpop.f32.mrb[0].mxu0
    %v2157 = vadd.f32 %v2065, %v2156
    %v2158 = vpop.f32.mrb[0].mxu0
    %v2159 = vpop.f32.mrb[0].mxu0
    %v2160 = vadd.f32 %v2065, %v2159
    %v2161 = vpop.f32.mrb[0].mxu0
    %2162 = vmatprep.mubr.bf16.mxu0 0
    %2163 = vmatmul.mubr.bf16.gmra.mrb[0].mxu0 %v2038
    %v2164 = vpop.f32.mrb[0].mxu0
    %v2165 = vadd.f32 %v2065, %v2164
    %v2166 = vpop.f32.mrb[0].mxu0
    %v2167 = vpop.f32.mrb[0].mxu0
    %v2168 = vadd.f32 %v2065, %v2167
    %v2169 = vpop.f32.mrb[0].mxu0
    %2170 = vmatprep.mubr.bf16.mxu0 0
    %2171 = vmatmul.mubr.bf16.gmra.mrb[0].mxu0 %v2039
    %v2172 = vpop.f32.mrb[0].mxu0
    %v2173 = vadd.f32 %v2065, %v2172
    %v2174 = vpop.f32.mrb[0].mxu0
    %v2175 = vpop.f32.mrb[0].mxu0
    %v2176 = vadd.f32 %v2065, %v2175
    %v2177 = vpop.f32.mrb[0].mxu0
    %2178 = vmatprep.mubr.bf16.mxu0 0
    %2179 = vmatmul.mubr.bf16.gmra.mrb[0].mxu0 %v2040
    %v2180 = vpop.f32.mrb[0].mxu0
    %v2181 = vadd.f32 %v2065, %v2180
    %v2182 = vpop.f32.mrb[0].mxu0
    %v2183 = vpop.f32.mrb[0].mxu0
    %v2184 = vadd.f32 %v2065, %v2183
    %v2185 = vpop.f32.mrb[0].mxu0
    %2186 = vmatprep.mubr.bf16.mxu0 0
    %2187 = vmatmul.mubr.bf16.gmra.mrb[0].mxu0 %v2041
    %v2188 = vpop.f32.mrb[0].mxu0
    %v2189 = vadd.f32 %v2065, %v2188
    %v2190 = vpop.f32.mrb[0].mxu0
    %v2191 = vpop.f32.mrb[0].mxu0
    %v2192 = vadd.f32 %v2065, %v2191
    %v2193 = vpop.f32.mrb[0].mxu0
    %2194 = vmatprep.mubr.bf16.mxu0 0
    %2195 = vmatmul.mubr.bf16.gmra.mrb[0].mxu0 %v2042
    %v2196 = vpop.f32.mrb[0].mxu0
    %v2197 = vadd.f32 %v2065, %v2196
    %v2198 = vpop.f32.mrb[0].mxu0
    %v2199 = vpop.f32.mrb[0].mxu0
    %v2200 = vadd.f32 %v2065, %v2199
    %v2201 = vpop.f32.mrb[0].mxu0
    %2202 = vmatprep.mubr.bf16.mxu0 0
    %2203 = vmatmul.mubr.bf16.gmra.mrb[0].mxu0 %v2043
    %v2204 = vpop.f32.mrb[0].mxu0
    %v2205 = vadd.f32 %v2065, %v2204
    %v2206 = vpop.f32.mrb[0].mxu0
    %v2207 = vpop.f32.mrb[0].mxu0
    %v2208 = vadd.f32 %v2065, %v2207
    %v2209 = vpop.f32.mrb[0].mxu0
    %2210 = vdwg.mxu0
    %v2211 = vmax.f32 %v2149, 0.0
    %v2212 = vmax.f32 %v2152, 0.0
    %v2213 = vmax.f32 %v2157, 0.0
    %v2214 = vmax.f32 %v2160, 0.0
    %v2215 = vmax.f32 %v2165, 0.0
    %v2216 = vmax.f32 %v2168, 0.0
    %v2217 = vmax.f32 %v2173, 0.0
    %v2218 = vmax.f32 %v2176, 0.0
    %v2219 = vmax.f32 %v2181, 0.0
    %v2220 = vmax.f32 %v2184, 0.0
    %v2221 = vmax.f32 %v2189, 0.0
    %v2222 = vmax.f32 %v2192, 0.0
    %v2223 = vmax.f32 %v2197, 0.0
    %v2224 = vmax.f32 %v2200, 0.0
    %v2225 = vmax.f32 %v2205, 0.0
    %v2226 = vmax.f32 %v2208, 0.0
    %v2227 = vmax.f32 %v2211, %v2213
    %v2228 = vmax.f32 %v2212, %v2214
    %v2229 = vmax.f32 %v2227, %v2215
    %v2230 = vmax.f32 %v2228, %v2216
    %v2231 = vmax.f32 %v2229, %v2217
    %v2232 = vmax.f32 %v2230, %v2218
    %v2233 = vmax.f32 %v2231, %v2232
    %v2234 = vrot.slane %v2233, 4
    %v2235 = vmax.f32 %v2233, %v2234
    %v2236 = vrot.slane %v2235, 2
    %v2237 = vmax.f32 %v2235, %v2236
    %v2238 = vrot.slane %v2237, 1
    %v2239 = vmax.f32 %v2237, %v2238
    %v2240 = vmax.f32 %v2219, %v2221
    %v2241 = vmax.f32 %v2220, %v2222
    %v2242 = vmax.f32 %v2240, %v2223
    %v2243 = vmax.f32 %v2241, %v2224
    %v2244 = vmax.f32 %v2242, %v2225
    %v2245 = vmax.f32 %v2243, %v2226
    %v2246 = vmax.f32 %v2244, %v2245
    %v2247 = vrot.slane %v2246, 4
    %v2248 = vmax.f32 %v2246, %v2247
    %v2249 = vrot.slane %v2248, 2
    %v2250 = vmax.f32 %v2248, %v2249
    %v2251 = vrot.slane %v2250, 1
    %v2252 = vmax.f32 %v2250, %v2251
    %v2253 = vadd.f32 %v2211, %v2212
    %v2254 = vadd.f32 %v2253, %v2213
    %v2255 = vadd.f32 %v2254, %v2214
    %v2256 = vadd.f32 %v2255, %v2215
    %v2257 = vadd.f32 %v2256, %v2216
    %v2258 = vadd.f32 %v2257, %v2217
    %v2259 = vadd.f32 %v2258, %v2218
    %v2260 = vrot.slane %v2259, 4
    %v2261 = vadd.f32 %v2259, %v2260
    %v2262 = vrot.slane %v2261, 2
    %v2263 = vadd.f32 %v2261, %v2262
    %v2264 = vrot.slane %v2263, 1
    %v2265 = vadd.f32 %v2263, %v2264
    %v2266 = vadd.f32 %v2219, %v2220
    %v2267 = vadd.f32 %v2266, %v2221
    %v2268 = vadd.f32 %v2267, %v2222
    %v2269 = vadd.f32 %v2268, %v2223
    %v2270 = vadd.f32 %v2269, %v2224
    %v2271 = vadd.f32 %v2270, %v2225
    %v2272 = vadd.f32 %v2271, %v2226
    %v2273 = vrot.slane %v2272, 4
    %v2274 = vadd.f32 %v2272, %v2273
    %v2275 = vrot.slane %v2274, 2
    %v2276 = vadd.f32 %v2274, %v2275
    %v2277 = vrot.slane %v2276, 1
    %v2278 = vadd.f32 %v2276, %v2277
    %v2279 = vmul.f32 %v2265, 0.015625
    %v2280 = vmul.f32 %v2278, 0.015625
    %s2281 = scalar_lea.vmem %s11, 4
    %v2282 = vld [vmem:[%s2281] sm:$0x3]
    %v2284 = vrot.slane %v2282, 1
    %v2287 = vmul.f32 %v2239, %v2282
    %v2288 = vmul.f32 %v2252, %v2284
    %v2289 = vpack.c.bf16 %v2287, %v2287
    %v2290 = vpack.c.bf16 %v2288, %v2288
    %s2291 = scalar_lea.vmem %s12, 128
    %v2292 = vld [vmem:[%s2291] sm:$0xf]
    %v2293 = vld [vmem:[%s2291 + $0x4] sm:$0xf]
    %v2294 = vld [vmem:[%s2291 + $0x8] sm:$0xf]
    %v2295 = vld [vmem:[%s2291 + $0xc] sm:$0xf]
    %v2296 = vld [vmem:[%s2291 + $0x10] sm:$0xf]
    %v2297 = vld [vmem:[%s2291 + $0x14] sm:$0xf]
    %v2298 = vld [vmem:[%s2291 + $0x18] sm:$0xf]
    %v2299 = vld [vmem:[%s2291 + $0x1c] sm:$0xf]
    %v2300 = vld [vmem:[%s2291 + $0x20] sm:$0xf]
    %v2301 = vld [vmem:[%s2291 + $0x24] sm:$0xf]
    %v2302 = vld [vmem:[%s2291 + $0x28] sm:$0xf]
    %v2303 = vld [vmem:[%s2291 + $0x2c] sm:$0xf]
    %v2304 = vld [vmem:[%s2291 + $0x30] sm:$0xf]
    %v2305 = vld [vmem:[%s2291 + $0x34] sm:$0xf]
    %v2306 = vld [vmem:[%s2291 + $0x38] sm:$0xf]
    %v2307 = vld [vmem:[%s2291 + $0x3c] sm:$0xf]
    %v2310 = vunpack.c.l.b16 %v2289
    %v2311 = vunpack.c.l.b16 %v2290
    %v2312 = vrot.slane %v2311, 7
    %v2313 = vsel %vm1462, %v2312, %v2310
    %v2314 = vpack.c.b16 %v2313, %v2313
    %v2332 = vunpack.c.l.b16 %v2292
    %v2333 = vunpack.c.l.b16 %v2293
    %v2334 = vunpack.c.l.b16 %v2294
    %v2335 = vunpack.c.l.b16 %v2295
    %v2336 = vunpack.c.l.b16 %v2296
    %v2337 = vunpack.c.l.b16 %v2297
    %v2338 = vunpack.c.l.b16 %v2298
    %v2339 = vunpack.c.l.b16 %v2299
    %v2340 = vunpack.c.l.b16 %v2300
    %v2341 = vunpack.c.l.b16 %v2301
    %v2342 = vunpack.c.l.b16 %v2302
    %v2343 = vunpack.c.l.b16 %v2303
    %v2344 = vunpack.c.l.b16 %v2304
    %v2345 = vunpack.c.l.b16 %v2305
    %v2346 = vunpack.c.l.b16 %v2306
    %v2347 = vunpack.c.l.b16 %v2307
    %v2348 = vpack.c.b16 %v2333, %v2332
    %v2349 = vpack.c.b16 %v2335, %v2334
    %v2350 = vpack.c.b16 %v2337, %v2336
    %v2351 = vpack.c.b16 %v2339, %v2338
    %v2352 = vpack.c.b16 %v2341, %v2340
    %v2353 = vpack.c.b16 %v2343, %v2342
    %v2354 = vpack.c.b16 %v2345, %v2344
    %v2355 = vpack.c.b16 %v2347, %v2346
    %2364 = vmatprep.subr.bf16.mxu0 0
    %2365 = vmatpush1.bf16.msra.mxu0 %v2348
    %2366 = vmatprep.subr.bf16.mxu0 0
    %2367 = vmatpush1.bf16.msra.mxu0 %v2349
    %2368 = vmatprep.subr.bf16.mxu0 0
    %2369 = vmatpush1.bf16.msra.mxu0 %v2350
    %2370 = vmatprep.subr.bf16.mxu0 0
    %2371 = vmatpush1.bf16.msra.mxu0 %v2351
    %2372 = vmatprep.subr.bf16.mxu0 0
    %2373 = vmatpush1.bf16.msra.mxu0 %v2352
    %2374 = vmatprep.subr.bf16.mxu0 0
    %2375 = vmatpush1.bf16.msra.mxu0 %v2353
    %2376 = vmatprep.subr.bf16.mxu0 0
    %2377 = vmatpush1.bf16.msra.mxu0 %v2354
    %2378 = vmatprep.subr.bf16.mxu0 0
    %2379 = vmatpush1.bf16.msra.mxu0 %v2355
    %2380 = vmatprep.subr.bf16.mxu0 0
    %2381 = vmatpush1.bf16.msra.mxu0 0
    %2382 = vmatprep.subr.bf16.mxu0 0
    %2383 = vmatpush1.bf16.msra.mxu0 0
    %2384 = vmatprep.subr.bf16.mxu0 0
    %2385 = vmatpush1.bf16.msra.mxu0 0
    %2386 = vmatprep.subr.bf16.mxu0 0
    %2387 = vmatpush1.bf16.msra.mxu0 0
    %2388 = vmatprep.subr.bf16.mxu0 0
    %2389 = vmatpush1.bf16.msra.mxu0 0
    %2390 = vmatprep.subr.bf16.mxu0 0
    %2391 = vmatpush1.bf16.msra.mxu0 0
    %2392 = vmatprep.subr.bf16.mxu0 0
    %2393 = vmatpush1.bf16.msra.mxu0 0
    %2394 = vmatprep.subr.bf16.mxu0 0
    %2395 = vmatpush1.bf16.msra.mxu0 0
    %2396 = vmatprep.mubr.bf16.mxu0 0
    %2397 = vmatmul.mubr.bf16.gmra.mrb[0].mxu0 %v2314
    %v2398 = vpop.f32.mrb[0].mxu0
    %v2399 = vadd.f32 0.0, %v2398
    %v2400 = vpop.f32.mrb[0].mxu0
    %v2401 = vpop.f32.mrb[0].mxu0
    %v2402 = vpop.f32.mrb[0].mxu0
    %2403 = vdwg.mxu0
    %v2404 = vadd.f32 %v1645, %v2399
    %s2405 = scalar_lea.vmem %s11, 6
    %v2406 = vld [vmem:[%s2405] sm:$0x3]
    %v2408 = vrot.slane %v2406, 1
    %v2411 = vmul.f32 %v2279, %v2406
    %v2412 = vmul.f32 %v2280, %v2408
    %v2413 = vpack.c.bf16 %v2411, %v2411
    %v2414 = vpack.c.bf16 %v2412, %v2412
    %s2415 = scalar_lea.vmem %s12, 192
    %v2416 = vld [vmem:[%s2415] sm:$0xf]
    %v2417 = vld [vmem:[%s2415 + $0x4] sm:$0xf]
    %v2418 = vld [vmem:[%s2415 + $0x8] sm:$0xf]
    %v2419 = vld [vmem:[%s2415 + $0xc] sm:$0xf]
    %v2420 = vld [vmem:[%s2415 + $0x10] sm:$0xf]
    %v2421 = vld [vmem:[%s2415 + $0x14] sm:$0xf]
    %v2422 = vld [vmem:[%s2415 + $0x18] sm:$0xf]
    %v2423 = vld [vmem:[%s2415 + $0x1c] sm:$0xf]
    %v2424 = vld [vmem:[%s2415 + $0x20] sm:$0xf]
    %v2425 = vld [vmem:[%s2415 + $0x24] sm:$0xf]
    %v2426 = vld [vmem:[%s2415 + $0x28] sm:$0xf]
    %v2427 = vld [vmem:[%s2415 + $0x2c] sm:$0xf]
    %v2428 = vld [vmem:[%s2415 + $0x30] sm:$0xf]
    %v2429 = vld [vmem:[%s2415 + $0x34] sm:$0xf]
    %v2430 = vld [vmem:[%s2415 + $0x38] sm:$0xf]
    %v2431 = vld [vmem:[%s2415 + $0x3c] sm:$0xf]
    %v2434 = vunpack.c.l.b16 %v2413
    %v2435 = vunpack.c.l.b16 %v2414
    %v2436 = vrot.slane %v2435, 7
    %v2437 = vsel %vm1462, %v2436, %v2434
    %v2438 = vpack.c.b16 %v2437, %v2437
    %v2456 = vunpack.c.l.b16 %v2416
    %v2457 = vunpack.c.l.b16 %v2417
    %v2458 = vunpack.c.l.b16 %v2418
    %v2459 = vunpack.c.l.b16 %v2419
    %v2460 = vunpack.c.l.b16 %v2420
    %v2461 = vunpack.c.l.b16 %v2421
    %v2462 = vunpack.c.l.b16 %v2422
    %v2463 = vunpack.c.l.b16 %v2423
    %v2464 = vunpack.c.l.b16 %v2424
    %v2465 = vunpack.c.l.b16 %v2425
    %v2466 = vunpack.c.l.b16 %v2426
    %v2467 = vunpack.c.l.b16 %v2427
    %v2468 = vunpack.c.l.b16 %v2428
    %v2469 = vunpack.c.l.b16 %v2429
    %v2470 = vunpack.c.l.b16 %v2430
    %v2471 = vunpack.c.l.b16 %v2431
    %v2472 = vpack.c.b16 %v2457, %v2456
    %v2473 = vpack.c.b16 %v2459, %v2458
    %v2474 = vpack.c.b16 %v2461, %v2460
    %v2475 = vpack.c.b16 %v2463, %v2462
    %v2476 = vpack.c.b16 %v2465, %v2464
    %v2477 = vpack.c.b16 %v2467, %v2466
    %v2478 = vpack.c.b16 %v2469, %v2468
    %v2479 = vpack.c.b16 %v2471, %v2470
    %2488 = vmatprep.subr.bf16.mxu0 0
    %2489 = vmatpush1.bf16.msra.mxu0 %v2472
    %2490 = vmatprep.subr.bf16.mxu0 0
    %2491 = vmatpush1.bf16.msra.mxu0 %v2473
    %2492 = vmatprep.subr.bf16.mxu0 0
    %2493 = vmatpush1.bf16.msra.mxu0 %v2474
    %2494 = vmatprep.subr.bf16.mxu0 0
    %2495 = vmatpush1.bf16.msra.mxu0 %v2475
    %2496 = vmatprep.subr.bf16.mxu0 0
    %2497 = vmatpush1.bf16.msra.mxu0 %v2476
    %2498 = vmatprep.subr.bf16.mxu0 0
    %2499 = vmatpush1.bf16.msra.mxu0 %v2477
    %2500 = vmatprep.subr.bf16.mxu0 0
    %2501 = vmatpush1.bf16.msra.mxu0 %v2478
    %2502 = vmatprep.subr.bf16.mxu0 0
    %2503 = vmatpush1.bf16.msra.mxu0 %v2479
    %2504 = vmatprep.subr.bf16.mxu0 0
    %2505 = vmatpush1.bf16.msra.mxu0 0
    %2506 = vmatprep.subr.bf16.mxu0 0
    %2507 = vmatpush1.bf16.msra.mxu0 0
    %2508 = vmatprep.subr.bf16.mxu0 0
    %2509 = vmatpush1.bf16.msra.mxu0 0
    %2510 = vmatprep.subr.bf16.mxu0 0
    %2511 = vmatpush1.bf16.msra.mxu0 0
    %2512 = vmatprep.subr.bf16.mxu0 0
    %2513 = vmatpush1.bf16.msra.mxu0 0
    %2514 = vmatprep.subr.bf16.mxu0 0
    %2515 = vmatpush1.bf16.msra.mxu0 0
    %2516 = vmatprep.subr.bf16.mxu0 0
    %2517 = vmatpush1.bf16.msra.mxu0 0
    %2518 = vmatprep.subr.bf16.mxu0 0
    %2519 = vmatpush1.bf16.msra.mxu0 0
    %2520 = vmatprep.mubr.bf16.mxu0 0
    %2521 = vmatmul.mubr.bf16.gmra.mrb[0].mxu0 %v2438
    %v2522 = vpop.f32.mrb[0].mxu0
    %v2523 = vadd.f32 0.0, %v2522
    %v2524 = vpop.f32.mrb[0].mxu0
    %v2525 = vpop.f32.mrb[0].mxu0
    %v2526 = vpop.f32.mrb[0].mxu0
    %2527 = vdwg.mxu0
    %v2528 = vadd.f32 %v2404, %v2523
    %v2529 = vld [vmem:[%s4] sm:$0xf]
    %v2530 = vld [vmem:[%s4 + $0x4] sm:$0xf]
    %v2531 = vld [vmem:[%s4 + $0x8] sm:$0xf]
    %v2532 = vld [vmem:[%s4 + $0xc] sm:$0xf]
    %v2537 = vunpack.c.l.b16 %v2529
    %v2538 = vunpack.c.l.b16 %v2530
    %v2539 = vunpack.c.l.b16 %v2531
    %v2540 = vunpack.c.l.b16 %v2532
    %v2541 = vpack.c.b16 %v2538, %v2537
    %v2542 = vpack.c.b16 %v2540, %v2539
    %2545 = vmatprep.subr.bf16.mxu0 0
    %2546 = vmatpush1.bf16.msra.mxu0 %v2036
    %2547 = vmatprep.subr.bf16.mxu0 0
    %2548 = vmatpush1.bf16.msra.mxu0 %v2037
    %2549 = vmatprep.subr.bf16.mxu0 0
    %2550 = vmatpush1.bf16.msra.mxu0 %v2038
    %2551 = vmatprep.subr.bf16.mxu0 0
    %2552 = vmatpush1.bf16.msra.mxu0 %v2039
    %2553 = vmatprep.subr.bf16.mxu0 0
    %2554 = vmatpush1.bf16.msra.mxu0 %v2040
    %2555 = vmatprep.subr.bf16.mxu0 0
    %2556 = vmatpush1.bf16.msra.mxu0 %v2041
    %2557 = vmatprep.subr.bf16.mxu0 0
    %2558 = vmatpush1.bf16.msra.mxu0 %v2042
    %2559 = vmatprep.subr.bf16.mxu0 0
    %2560 = vmatpush1.bf16.msra.mxu0 %v2043
    %2561 = vmatprep.subr.bf16.mxu0 0
    %2562 = vmatpush1.bf16.msra.mxu0 0
    %2563 = vmatprep.subr.bf16.mxu0 0
    %2564 = vmatpush1.bf16.msra.mxu0 0
    %2565 = vmatprep.subr.bf16.mxu0 0
    %2566 = vmatpush1.bf16.msra.mxu0 0
    %2567 = vmatprep.subr.bf16.mxu0 0
    %2568 = vmatpush1.bf16.msra.mxu0 0
    %2569 = vmatprep.subr.bf16.mxu0 0
    %2570 = vmatpush1.bf16.msra.mxu0 0
    %2571 = vmatprep.subr.bf16.mxu0 0
    %2572 = vmatpush1.bf16.msra.mxu0 0
    %2573 = vmatprep.subr.bf16.mxu0 0
    %2574 = vmatpush1.bf16.msra.mxu0 0
    %2575 = vmatprep.subr.bf16.mxu0 0
    %2576 = vmatpush1.bf16.msra.mxu0 0
    %2577 = vmatprep.mubr.bf16.mxu0 0
    %2578 = vmatmul.mubr.bf16.gmra.mrb[0].mxu0 %v2541
    %v2579 = vpop.f32.mrb[0].mxu0
    %v2580 = vadd.f32 0.0, %v2579
    %v2581 = vpop.f32.mrb[0].mxu0
    %v2582 = vpop.f32.mrb[0].mxu0
    %v2583 = vadd.f32 0.0, %v2582
    %v2584 = vpop.f32.mrb[0].mxu0
    %2585 = vmatprep.mubr.bf16.mxu0 0
    %2586 = vmatmul.mubr.bf16.gmra.mrb[0].mxu0 %v2542
    %v2587 = vpop.f32.mrb[0].mxu0
    %v2588 = vadd.f32 0.0, %v2587
    %v2589 = vpop.f32.mrb[0].mxu0
    %v2590 = vpop.f32.mrb[0].mxu0
    %v2591 = vadd.f32 0.0, %v2590
    %v2592 = vpop.f32.mrb[0].mxu0
    %2593 = vdwg.mxu0
    %v2594 = vpack.c.bf16 %v2583, %v2580
    %v2595 = vpack.c.bf16 %v2591, %v2588
    %s2596 = scalar_lea.vmem %s7, 128
    %v2597 = vld [vmem:[%s2596] sm:$0xf]
    %v2598 = vld [vmem:[%s2596 + $0x4] sm:$0xf]
    %v2599 = vld [vmem:[%s2596 + $0x8] sm:$0xf]
    %v2600 = vld [vmem:[%s2596 + $0xc] sm:$0xf]
    %v2601 = vld [vmem:[%s2596 + $0x10] sm:$0xf]
    %v2602 = vld [vmem:[%s2596 + $0x14] sm:$0xf]
    %v2603 = vld [vmem:[%s2596 + $0x18] sm:$0xf]
    %v2604 = vld [vmem:[%s2596 + $0x1c] sm:$0xf]
    %v2605 = vld [vmem:[%s2596 + $0x20] sm:$0xf]
    %v2606 = vld [vmem:[%s2596 + $0x24] sm:$0xf]
    %v2607 = vld [vmem:[%s2596 + $0x28] sm:$0xf]
    %v2608 = vld [vmem:[%s2596 + $0x2c] sm:$0xf]
    %v2609 = vld [vmem:[%s2596 + $0x30] sm:$0xf]
    %v2610 = vld [vmem:[%s2596 + $0x34] sm:$0xf]
    %v2611 = vld [vmem:[%s2596 + $0x38] sm:$0xf]
    %v2612 = vld [vmem:[%s2596 + $0x3c] sm:$0xf]
    %v2613 = vld [vmem:[%s8 + $0x2] sm:$0x1]
    %v2614 = vlaneseq
    %v2615 = vshrl.u32 %v2614, 7
    %v2616 = vsub.s32 0, %v2615
    %v2617 = vrot.slane %v2613, %v2616
    %v2634 = vunpack.c.l.b16 %v2597
    %v2635 = vunpack.c.l.b16 %v2598
    %v2636 = vunpack.c.l.b16 %v2599
    %v2637 = vunpack.c.l.b16 %v2600
    %v2638 = vunpack.c.l.b16 %v2601
    %v2639 = vunpack.c.l.b16 %v2602
    %v2640 = vunpack.c.l.b16 %v2603
    %v2641 = vunpack.c.l.b16 %v2604
    %v2642 = vunpack.c.l.b16 %v2605
    %v2643 = vunpack.c.l.b16 %v2606
    %v2644 = vunpack.c.l.b16 %v2607
    %v2645 = vunpack.c.l.b16 %v2608
    %v2646 = vunpack.c.l.b16 %v2609
    %v2647 = vunpack.c.l.b16 %v2610
    %v2648 = vunpack.c.l.b16 %v2611
    %v2649 = vunpack.c.l.b16 %v2612
    %v2650 = vpack.c.b16 %v2635, %v2634
    %v2651 = vpack.c.b16 %v2637, %v2636
    %v2652 = vpack.c.b16 %v2639, %v2638
    %v2653 = vpack.c.b16 %v2641, %v2640
    %v2654 = vpack.c.b16 %v2643, %v2642
    %v2655 = vpack.c.b16 %v2645, %v2644
    %v2656 = vpack.c.b16 %v2647, %v2646
    %v2657 = vpack.c.b16 %v2649, %v2648
    %2666 = vmatprep.subr.bf16.mxu0 0
    %2667 = vmatpush1.bf16.msra.mxu0 %v2650
    %2668 = vmatprep.subr.bf16.mxu0 0
    %2669 = vmatpush1.bf16.msra.mxu0 %v2651
    %2670 = vmatprep.subr.bf16.mxu0 0
    %2671 = vmatpush1.bf16.msra.mxu0 %v2652
    %2672 = vmatprep.subr.bf16.mxu0 0
    %2673 = vmatpush1.bf16.msra.mxu0 %v2653
    %2674 = vmatprep.subr.bf16.mxu0 0
    %2675 = vmatpush1.bf16.msra.mxu0 %v2654
    %2676 = vmatprep.subr.bf16.mxu0 0
    %2677 = vmatpush1.bf16.msra.mxu0 %v2655
    %2678 = vmatprep.subr.bf16.mxu0 0
    %2679 = vmatpush1.bf16.msra.mxu0 %v2656
    %2680 = vmatprep.subr.bf16.mxu0 0
    %2681 = vmatpush1.bf16.msra.mxu0 %v2657
    %2682 = vmatprep.subr.bf16.mxu0 0
    %2683 = vmatpush1.bf16.msra.mxu0 0
    %2684 = vmatprep.subr.bf16.mxu0 0
    %2685 = vmatpush1.bf16.msra.mxu0 0
    %2686 = vmatprep.subr.bf16.mxu0 0
    %2687 = vmatpush1.bf16.msra.mxu0 0
    %2688 = vmatprep.subr.bf16.mxu0 0
    %2689 = vmatpush1.bf16.msra.mxu0 0
    %2690 = vmatprep.subr.bf16.mxu0 0
    %2691 = vmatpush1.bf16.msra.mxu0 0
    %2692 = vmatprep.subr.bf16.mxu0 0
    %2693 = vmatpush1.bf16.msra.mxu0 0
    %2694 = vmatprep.subr.bf16.mxu0 0
    %2695 = vmatpush1.bf16.msra.mxu0 0
    %2696 = vmatprep.subr.bf16.mxu0 0
    %2697 = vmatpush1.bf16.msra.mxu0 0
    %2698 = vmatprep.mubr.bf16.mxu0 0
    %2699 = vmatmul.mubr.bf16.gmra.mrb[0].mxu0 %v2594
    %v2700 = vpop.f32.mrb[0].mxu0
    %v2701 = vadd.f32 %v2617, %v2700
    %v2702 = vpop.f32.mrb[0].mxu0
    %v2703 = vpop.f32.mrb[0].mxu0
    %v2704 = vadd.f32 %v2617, %v2703
    %v2705 = vpop.f32.mrb[0].mxu0
    %2706 = vmatprep.mubr.bf16.mxu0 0
    %2707 = vmatmul.mubr.bf16.gmra.mrb[0].mxu0 %v2595
    %v2708 = vpop.f32.mrb[0].mxu0
    %v2709 = vadd.f32 %v2617, %v2708
    %v2710 = vpop.f32.mrb[0].mxu0
    %v2711 = vpop.f32.mrb[0].mxu0
    %v2712 = vadd.f32 %v2617, %v2711
    %v2713 = vpop.f32.mrb[0].mxu0
    %2714 = vdwg.mxu0
    %v2715 = vmax.f32 %v2701, 0.0
    %v2716 = vmax.f32 %v2704, 0.0
    %v2717 = vmax.f32 %v2709, 0.0
    %v2718 = vmax.f32 %v2712, 0.0
    %v2719 = vmax.f32 %v2715, %v2716
    %v2720 = vrot.slane %v2719, 4
    %v2721 = vmax.f32 %v2719, %v2720
    %v2722 = vrot.slane %v2721, 2
    %v2723 = vmax.f32 %v2721, %v2722
    %v2724 = vrot.slane %v2723, 1
    %v2725 = vmax.f32 %v2723, %v2724
    %v2726 = vmax.f32 %v2717, %v2718
    %v2727 = vrot.slane %v2726, 4
    %v2728 = vmax.f32 %v2726, %v2727
    %v2729 = vrot.slane %v2728, 2
    %v2730 = vmax.f32 %v2728, %v2729
    %v2731 = vrot.slane %v2730, 1
    %v2732 = vmax.f32 %v2730, %v2731
    %v2733 = vadd.f32 %v2715, %v2716
    %v2734 = vrot.slane %v2733, 4
    %v2735 = vadd.f32 %v2733, %v2734
    %v2736 = vrot.slane %v2735, 2
    %v2737 = vadd.f32 %v2735, %v2736
    %v2738 = vrot.slane %v2737, 1
    %v2739 = vadd.f32 %v2737, %v2738
    %v2740 = vadd.f32 %v2717, %v2718
    %v2741 = vrot.slane %v2740, 4
    %v2742 = vadd.f32 %v2740, %v2741
    %v2743 = vrot.slane %v2742, 2
    %v2744 = vadd.f32 %v2742, %v2743
    %v2745 = vrot.slane %v2744, 1
    %v2746 = vadd.f32 %v2744, %v2745
    %v2747 = vmul.f32 %v2739, 0.0625
    %v2748 = vmul.f32 %v2746, 0.0625
    %s2749 = scalar_lea.vmem %s11, 8
    %v2750 = vld [vmem:[%s2749] sm:$0x3]
    %v2752 = vrot.slane %v2750, 1
    %v2755 = vmul.f32 %v2725, %v2750
    %v2756 = vmul.f32 %v2732, %v2752
    %v2757 = vpack.c.bf16 %v2755, %v2755
    %v2758 = vpack.c.bf16 %v2756, %v2756
    %s2759 = scalar_lea.vmem %s12, 256
    %v2760 = vld [vmem:[%s2759] sm:$0xf]
    %v2761 = vld [vmem:[%s2759 + $0x4] sm:$0xf]
    %v2762 = vld [vmem:[%s2759 + $0x8] sm:$0xf]
    %v2763 = vld [vmem:[%s2759 + $0xc] sm:$0xf]
    %v2764 = vld [vmem:[%s2759 + $0x10] sm:$0xf]
    %v2765 = vld [vmem:[%s2759 + $0x14] sm:$0xf]
    %v2766 = vld [vmem:[%s2759 + $0x18] sm:$0xf]
    %v2767 = vld [vmem:[%s2759 + $0x1c] sm:$0xf]
    %v2768 = vld [vmem:[%s2759 + $0x20] sm:$0xf]
    %v2769 = vld [vmem:[%s2759 + $0x24] sm:$0xf]
    %v2770 = vld [vmem:[%s2759 + $0x28] sm:$0xf]
    %v2771 = vld [vmem:[%s2759 + $0x2c] sm:$0xf]
    %v2772 = vld [vmem:[%s2759 + $0x30] sm:$0xf]
    %v2773 = vld [vmem:[%s2759 + $0x34] sm:$0xf]
    %v2774 = vld [vmem:[%s2759 + $0x38] sm:$0xf]
    %v2775 = vld [vmem:[%s2759 + $0x3c] sm:$0xf]
    %v2778 = vunpack.c.l.b16 %v2757
    %v2779 = vunpack.c.l.b16 %v2758
    %v2780 = vrot.slane %v2779, 7
    %v2781 = vsel %vm1462, %v2780, %v2778
    %v2782 = vpack.c.b16 %v2781, %v2781
    %v2800 = vunpack.c.l.b16 %v2760
    %v2801 = vunpack.c.l.b16 %v2761
    %v2802 = vunpack.c.l.b16 %v2762
    %v2803 = vunpack.c.l.b16 %v2763
    %v2804 = vunpack.c.l.b16 %v2764
    %v2805 = vunpack.c.l.b16 %v2765
    %v2806 = vunpack.c.l.b16 %v2766
    %v2807 = vunpack.c.l.b16 %v2767
    %v2808 = vunpack.c.l.b16 %v2768
    %v2809 = vunpack.c.l.b16 %v2769
    %v2810 = vunpack.c.l.b16 %v2770
    %v2811 = vunpack.c.l.b16 %v2771
    %v2812 = vunpack.c.l.b16 %v2772
    %v2813 = vunpack.c.l.b16 %v2773
    %v2814 = vunpack.c.l.b16 %v2774
    %v2815 = vunpack.c.l.b16 %v2775
    %v2816 = vpack.c.b16 %v2801, %v2800
    %v2817 = vpack.c.b16 %v2803, %v2802
    %v2818 = vpack.c.b16 %v2805, %v2804
    %v2819 = vpack.c.b16 %v2807, %v2806
    %v2820 = vpack.c.b16 %v2809, %v2808
    %v2821 = vpack.c.b16 %v2811, %v2810
    %v2822 = vpack.c.b16 %v2813, %v2812
    %v2823 = vpack.c.b16 %v2815, %v2814
    %2832 = vmatprep.subr.bf16.mxu0 0
    %2833 = vmatpush1.bf16.msra.mxu0 %v2816
    %2834 = vmatprep.subr.bf16.mxu0 0
    %2835 = vmatpush1.bf16.msra.mxu0 %v2817
    %2836 = vmatprep.subr.bf16.mxu0 0
    %2837 = vmatpush1.bf16.msra.mxu0 %v2818
    %2838 = vmatprep.subr.bf16.mxu0 0
    %2839 = vmatpush1.bf16.msra.mxu0 %v2819
    %2840 = vmatprep.subr.bf16.mxu0 0
    %2841 = vmatpush1.bf16.msra.mxu0 %v2820
    %2842 = vmatprep.subr.bf16.mxu0 0
    %2843 = vmatpush1.bf16.msra.mxu0 %v2821
    %2844 = vmatprep.subr.bf16.mxu0 0
    %2845 = vmatpush1.bf16.msra.mxu0 %v2822
    %2846 = vmatprep.subr.bf16.mxu0 0
    %2847 = vmatpush1.bf16.msra.mxu0 %v2823
    %2848 = vmatprep.subr.bf16.mxu0 0
    %2849 = vmatpush1.bf16.msra.mxu0 0
    %2850 = vmatprep.subr.bf16.mxu0 0
    %2851 = vmatpush1.bf16.msra.mxu0 0
    %2852 = vmatprep.subr.bf16.mxu0 0
    %2853 = vmatpush1.bf16.msra.mxu0 0
    %2854 = vmatprep.subr.bf16.mxu0 0
    %2855 = vmatpush1.bf16.msra.mxu0 0
    %2856 = vmatprep.subr.bf16.mxu0 0
    %2857 = vmatpush1.bf16.msra.mxu0 0
    %2858 = vmatprep.subr.bf16.mxu0 0
    %2859 = vmatpush1.bf16.msra.mxu0 0
    %2860 = vmatprep.subr.bf16.mxu0 0
    %2861 = vmatpush1.bf16.msra.mxu0 0
    %2862 = vmatprep.subr.bf16.mxu0 0
    %2863 = vmatpush1.bf16.msra.mxu0 0
    %2864 = vmatprep.mubr.bf16.mxu0 0
    %2865 = vmatmul.mubr.bf16.gmra.mrb[0].mxu0 %v2782
    %v2866 = vpop.f32.mrb[0].mxu0
    %v2867 = vadd.f32 0.0, %v2866
    %v2868 = vpop.f32.mrb[0].mxu0
    %v2869 = vpop.f32.mrb[0].mxu0
    %v2870 = vpop.f32.mrb[0].mxu0
    %2871 = vdwg.mxu0
    %v2872 = vadd.f32 %v2528, %v2867
    %s2873 = scalar_lea.vmem %s11, 10
    %v2874 = vld [vmem:[%s2873] sm:$0x3]
    %v2876 = vrot.slane %v2874, 1
    %v2879 = vmul.f32 %v2747, %v2874
    %v2880 = vmul.f32 %v2748, %v2876
    %v2881 = vpack.c.bf16 %v2879, %v2879
    %v2882 = vpack.c.bf16 %v2880, %v2880
    %s2883 = scalar_lea.vmem %s12, 320
    %v2884 = vld [vmem:[%s2883] sm:$0xf]
    %v2885 = vld [vmem:[%s2883 + $0x4] sm:$0xf]
    %v2886 = vld [vmem:[%s2883 + $0x8] sm:$0xf]
    %v2887 = vld [vmem:[%s2883 + $0xc] sm:$0xf]
    %v2888 = vld [vmem:[%s2883 + $0x10] sm:$0xf]
    %v2889 = vld [vmem:[%s2883 + $0x14] sm:$0xf]
    %v2890 = vld [vmem:[%s2883 + $0x18] sm:$0xf]
    %v2891 = vld [vmem:[%s2883 + $0x1c] sm:$0xf]
    %v2892 = vld [vmem:[%s2883 + $0x20] sm:$0xf]
    %v2893 = vld [vmem:[%s2883 + $0x24] sm:$0xf]
    %v2894 = vld [vmem:[%s2883 + $0x28] sm:$0xf]
    %v2895 = vld [vmem:[%s2883 + $0x2c] sm:$0xf]
    %v2896 = vld [vmem:[%s2883 + $0x30] sm:$0xf]
    %v2897 = vld [vmem:[%s2883 + $0x34] sm:$0xf]
    %v2898 = vld [vmem:[%s2883 + $0x38] sm:$0xf]
    %v2899 = vld [vmem:[%s2883 + $0x3c] sm:$0xf]
    %v2902 = vunpack.c.l.b16 %v2881
    %v2903 = vunpack.c.l.b16 %v2882
    %v2904 = vrot.slane %v2903, 7
    %v2905 = vsel %vm1462, %v2904, %v2902
    %v2906 = vpack.c.b16 %v2905, %v2905
    %v2924 = vunpack.c.l.b16 %v2884
    %v2925 = vunpack.c.l.b16 %v2885
    %v2926 = vunpack.c.l.b16 %v2886
    %v2927 = vunpack.c.l.b16 %v2887
    %v2928 = vunpack.c.l.b16 %v2888
    %v2929 = vunpack.c.l.b16 %v2889
    %v2930 = vunpack.c.l.b16 %v2890
    %v2931 = vunpack.c.l.b16 %v2891
    %v2932 = vunpack.c.l.b16 %v2892
    %v2933 = vunpack.c.l.b16 %v2893
    %v2934 = vunpack.c.l.b16 %v2894
    %v2935 = vunpack.c.l.b16 %v2895
    %v2936 = vunpack.c.l.b16 %v2896
    %v2937 = vunpack.c.l.b16 %v2897
    %v2938 = vunpack.c.l.b16 %v2898
    %v2939 = vunpack.c.l.b16 %v2899
    %v2940 = vpack.c.b16 %v2925, %v2924
    %v2941 = vpack.c.b16 %v2927, %v2926
    %v2942 = vpack.c.b16 %v2929, %v2928
    %v2943 = vpack.c.b16 %v2931, %v2930
    %v2944 = vpack.c.b16 %v2933, %v2932
    %v2945 = vpack.c.b16 %v2935, %v2934
    %v2946 = vpack.c.b16 %v2937, %v2936
    %v2947 = vpack.c.b16 %v2939, %v2938
    %2956 = vmatprep.subr.bf16.mxu0 0
    %2957 = vmatpush1.bf16.msra.mxu0 %v2940
    %2958 = vmatprep.subr.bf16.mxu0 0
    %2959 = vmatpush1.bf16.msra.mxu0 %v2941
    %2960 = vmatprep.subr.bf16.mxu0 0
    %2961 = vmatpush1.bf16.msra.mxu0 %v2942
    %2962 = vmatprep.subr.bf16.mxu0 0
    %2963 = vmatpush1.bf16.msra.mxu0 %v2943
    %2964 = vmatprep.subr.bf16.mxu0 0
    %2965 = vmatpush1.bf16.msra.mxu0 %v2944
    %2966 = vmatprep.subr.bf16.mxu0 0
    %2967 = vmatpush1.bf16.msra.mxu0 %v2945
    %2968 = vmatprep.subr.bf16.mxu0 0
    %2969 = vmatpush1.bf16.msra.mxu0 %v2946
    %2970 = vmatprep.subr.bf16.mxu0 0
    %2971 = vmatpush1.bf16.msra.mxu0 %v2947
    %2972 = vmatprep.subr.bf16.mxu0 0
    %2973 = vmatpush1.bf16.msra.mxu0 0
    %2974 = vmatprep.subr.bf16.mxu0 0
    %2975 = vmatpush1.bf16.msra.mxu0 0
    %2976 = vmatprep.subr.bf16.mxu0 0
    %2977 = vmatpush1.bf16.msra.mxu0 0
    %2978 = vmatprep.subr.bf16.mxu0 0
    %2979 = vmatpush1.bf16.msra.mxu0 0
    %2980 = vmatprep.subr.bf16.mxu0 0
    %2981 = vmatpush1.bf16.msra.mxu0 0
    %2982 = vmatprep.subr.bf16.mxu0 0
    %2983 = vmatpush1.bf16.msra.mxu0 0
    %2984 = vmatprep.subr.bf16.mxu0 0
    %2985 = vmatpush1.bf16.msra.mxu0 0
    %2986 = vmatprep.subr.bf16.mxu0 0
    %2987 = vmatpush1.bf16.msra.mxu0 0
    %2988 = vmatprep.mubr.bf16.mxu0 0
    %2989 = vmatmul.mubr.bf16.gmra.mrb[0].mxu0 %v2906
    %v2990 = vpop.f32.mrb[0].mxu0
    %v2991 = vadd.f32 0.0, %v2990
    %v2992 = vpop.f32.mrb[0].mxu0
    %v2993 = vpop.f32.mrb[0].mxu0
    %v2994 = vpop.f32.mrb[0].mxu0
    %2995 = vdwg.mxu0
    %v2996 = vadd.f32 %v2872, %v2991
    %v2997 = vld [vmem:[%s5] sm:$0xf]
    %vm2998 = vcmask 261120
    %v3000 = vsel %vm2998, %v2997, 0
    %3002 = vmatprep.subr.bf16.mxu0 0
    %3003 = vmatpush1.bf16.msra.mxu0 %v2594
    %3004 = vmatprep.subr.bf16.mxu0 0
    %3005 = vmatpush1.bf16.msra.mxu0 %v2595
    %3006 = vmatprep.subr.bf16.mxu0 0
    %3007 = vmatpush1.bf16.msra.mxu0 0
    %3008 = vmatprep.subr.bf16.mxu0 0
    %3009 = vmatpush1.bf16.msra.mxu0 0
    %3010 = vmatprep.subr.bf16.mxu0 0
    %3011 = vmatpush1.bf16.msra.mxu0 0
    %3012 = vmatprep.subr.bf16.mxu0 0
    %3013 = vmatpush1.bf16.msra.mxu0 0
    %3014 = vmatprep.subr.bf16.mxu0 0
    %3015 = vmatpush1.bf16.msra.mxu0 0
    %3016 = vmatprep.subr.bf16.mxu0 0
    %3017 = vmatpush1.bf16.msra.mxu0 0
    %3018 = vmatprep.subr.bf16.mxu0 0
    %3019 = vmatpush1.bf16.msra.mxu0 0
    %3020 = vmatprep.subr.bf16.mxu0 0
    %3021 = vmatpush1.bf16.msra.mxu0 0
    %3022 = vmatprep.subr.bf16.mxu0 0
    %3023 = vmatpush1.bf16.msra.mxu0 0
    %3024 = vmatprep.subr.bf16.mxu0 0
    %3025 = vmatpush1.bf16.msra.mxu0 0
    %3026 = vmatprep.subr.bf16.mxu0 0
    %3027 = vmatpush1.bf16.msra.mxu0 0
    %3028 = vmatprep.subr.bf16.mxu0 0
    %3029 = vmatpush1.bf16.msra.mxu0 0
    %3030 = vmatprep.subr.bf16.mxu0 0
    %3031 = vmatpush1.bf16.msra.mxu0 0
    %3032 = vmatprep.subr.bf16.mxu0 0
    %3033 = vmatpush1.bf16.msra.mxu0 0
    %3034 = vmatprep.mubr.bf16.mxu0 0
    %3035 = vmatmul.mubr.bf16.gmra.mrb[0].mxu0 %v3000
    %v3036 = vpop.f32.mrb[0].mxu0
    %v3037 = vadd.f32 0.0, %v3036
    %v3038 = vpop.f32.mrb[0].mxu0
    %v3039 = vpop.f32.mrb[0].mxu0
    %v3040 = vpop.f32.mrb[0].mxu0
    %3041 = vdwg.mxu0
    %v3042 = vpack.c.bf16 %v3037, %v3037
    %s3043 = scalar_lea.vmem %s7, 192
    %v3044 = vld [vmem:[%s3043] sm:$0xf]
    %v3045 = vld [vmem:[%s3043 + $0x4] sm:$0xf]
    %v3046 = vld [vmem:[%s3043 + $0x8] sm:$0xf]
    %v3047 = vld [vmem:[%s3043 + $0xc] sm:$0xf]
    %v3048 = vld [vmem:[%s3043 + $0x10] sm:$0xf]
    %v3049 = vld [vmem:[%s3043 + $0x14] sm:$0xf]
    %v3050 = vld [vmem:[%s3043 + $0x18] sm:$0xf]
    %v3051 = vld [vmem:[%s3043 + $0x1c] sm:$0xf]
    %v3052 = vld [vmem:[%s3043 + $0x20] sm:$0xf]
    %v3053 = vld [vmem:[%s3043 + $0x24] sm:$0xf]
    %v3054 = vld [vmem:[%s3043 + $0x28] sm:$0xf]
    %v3055 = vld [vmem:[%s3043 + $0x2c] sm:$0xf]
    %v3056 = vld [vmem:[%s3043 + $0x30] sm:$0xf]
    %v3057 = vld [vmem:[%s3043 + $0x34] sm:$0xf]
    %v3058 = vld [vmem:[%s3043 + $0x38] sm:$0xf]
    %v3059 = vld [vmem:[%s3043 + $0x3c] sm:$0xf]
    %v3060 = vld [vmem:[%s8 + $0x3] sm:$0x1]
    %v3061 = vlaneseq
    %v3062 = vshrl.u32 %v3061, 7
    %v3063 = vsub.s32 0, %v3062
    %v3064 = vrot.slane %v3060, %v3063
    %v3081 = vunpack.c.l.b16 %v3044
    %v3082 = vunpack.c.l.b16 %v3045
    %v3083 = vunpack.c.l.b16 %v3046
    %v3084 = vunpack.c.l.b16 %v3047
    %v3085 = vunpack.c.l.b16 %v3048
    %v3086 = vunpack.c.l.b16 %v3049
    %v3087 = vunpack.c.l.b16 %v3050
    %v3088 = vunpack.c.l.b16 %v3051
    %v3089 = vunpack.c.l.b16 %v3052
    %v3090 = vunpack.c.l.b16 %v3053
    %v3091 = vunpack.c.l.b16 %v3054
    %v3092 = vunpack.c.l.b16 %v3055
    %v3093 = vunpack.c.l.b16 %v3056
    %v3094 = vunpack.c.l.b16 %v3057
    %v3095 = vunpack.c.l.b16 %v3058
    %v3096 = vunpack.c.l.b16 %v3059
    %v3097 = vpack.c.b16 %v3082, %v3081
    %v3098 = vpack.c.b16 %v3084, %v3083
    %v3099 = vpack.c.b16 %v3086, %v3085
    %v3100 = vpack.c.b16 %v3088, %v3087
    %v3101 = vpack.c.b16 %v3090, %v3089
    %v3102 = vpack.c.b16 %v3092, %v3091
    %v3103 = vpack.c.b16 %v3094, %v3093
    %v3104 = vpack.c.b16 %v3096, %v3095
    %3113 = vmatprep.subr.bf16.mxu0 0
    %3114 = vmatpush1.bf16.msra.mxu0 %v3097
    %3115 = vmatprep.subr.bf16.mxu0 0
    %3116 = vmatpush1.bf16.msra.mxu0 %v3098
    %3117 = vmatprep.subr.bf16.mxu0 0
    %3118 = vmatpush1.bf16.msra.mxu0 %v3099
    %3119 = vmatprep.subr.bf16.mxu0 0
    %3120 = vmatpush1.bf16.msra.mxu0 %v3100
    %3121 = vmatprep.subr.bf16.mxu0 0
    %3122 = vmatpush1.bf16.msra.mxu0 %v3101
    %3123 = vmatprep.subr.bf16.mxu0 0
    %3124 = vmatpush1.bf16.msra.mxu0 %v3102
    %3125 = vmatprep.subr.bf16.mxu0 0
    %3126 = vmatpush1.bf16.msra.mxu0 %v3103
    %3127 = vmatprep.subr.bf16.mxu0 0
    %3128 = vmatpush1.bf16.msra.mxu0 %v3104
    %3129 = vmatprep.subr.bf16.mxu0 0
    %3130 = vmatpush1.bf16.msra.mxu0 0
    %3131 = vmatprep.subr.bf16.mxu0 0
    %3132 = vmatpush1.bf16.msra.mxu0 0
    %3133 = vmatprep.subr.bf16.mxu0 0
    %3134 = vmatpush1.bf16.msra.mxu0 0
    %3135 = vmatprep.subr.bf16.mxu0 0
    %3136 = vmatpush1.bf16.msra.mxu0 0
    %3137 = vmatprep.subr.bf16.mxu0 0
    %3138 = vmatpush1.bf16.msra.mxu0 0
    %3139 = vmatprep.subr.bf16.mxu0 0
    %3140 = vmatpush1.bf16.msra.mxu0 0
    %3141 = vmatprep.subr.bf16.mxu0 0
    %3142 = vmatpush1.bf16.msra.mxu0 0
    %3143 = vmatprep.subr.bf16.mxu0 0
    %3144 = vmatpush1.bf16.msra.mxu0 0
    %3145 = vmatprep.mubr.bf16.mxu0 0
    %3146 = vmatmul.mubr.bf16.gmra.mrb[0].mxu0 %v3042
    %v3147 = vpop.f32.mrb[0].mxu0
    %v3148 = vadd.f32 %v3064, %v3147
    %v3149 = vpop.f32.mrb[0].mxu0
    %v3150 = vpop.f32.mrb[0].mxu0
    %v3151 = vpop.f32.mrb[0].mxu0
    %3152 = vdwg.mxu0
    %v3153 = vmax.f32 %v3148, 0.0
    %v3155 = vcombine.high %v3153, %v3153
    %vm3157 = vcmask 1043456
    %v3158 = vsel %vm3157, %v3153, -inf
    %v3159 = vrot.slane %v3158, 4
    %v3160 = vmax.f32 %v3158, %v3159
    %v3161 = vrot.slane %v3160, 2
    %v3162 = vmax.f32 %v3160, %v3161
    %v3163 = vrot.slane %v3162, 1
    %v3164 = vmax.f32 %v3162, %v3163
    %v3165 = vsel %vm3157, %v3155, -inf
    %v3166 = vrot.slane %v3165, 4
    %v3167 = vmax.f32 %v3165, %v3166
    %v3168 = vrot.slane %v3167, 2
    %v3169 = vmax.f32 %v3167, %v3168
    %v3170 = vrot.slane %v3169, 1
    %v3171 = vmax.f32 %v3169, %v3170
    %v3172 = vsel %vm3157, %v3153, 0.0
    %v3173 = vrot.slane %v3172, 4
    %v3174 = vadd.f32 %v3172, %v3173
    %v3175 = vrot.slane %v3174, 2
    %v3176 = vadd.f32 %v3174, %v3175
    %v3177 = vrot.slane %v3176, 1
    %v3178 = vadd.f32 %v3176, %v3177
    %v3179 = vsel %vm3157, %v3155, 0.0
    %v3180 = vrot.slane %v3179, 4
    %v3181 = vadd.f32 %v3179, %v3180
    %v3182 = vrot.slane %v3181, 2
    %v3183 = vadd.f32 %v3181, %v3182
    %v3184 = vrot.slane %v3183, 1
    %v3185 = vadd.f32 %v3183, %v3184
    %v3186 = vmul.f32 %v3178, 0.25
    %v3187 = vmul.f32 %v3185, 0.25
    %s3188 = scalar_lea.vmem %s11, 12
    %v3189 = vld [vmem:[%s3188] sm:$0x3]
    %v3191 = vrot.slane %v3189, 1
    %v3194 = vmul.f32 %v3164, %v3189
    %v3195 = vmul.f32 %v3171, %v3191
    %v3196 = vpack.c.bf16 %v3194, %v3194
    %v3197 = vpack.c.bf16 %v3195, %v3195
    %s3198 = scalar_lea.vmem %s12, 384
    %v3199 = vld [vmem:[%s3198] sm:$0xf]
    %v3200 = vld [vmem:[%s3198 + $0x4] sm:$0xf]
    %v3201 = vld [vmem:[%s3198 + $0x8] sm:$0xf]
    %v3202 = vld [vmem:[%s3198 + $0xc] sm:$0xf]
    %v3203 = vld [vmem:[%s3198 + $0x10] sm:$0xf]
    %v3204 = vld [vmem:[%s3198 + $0x14] sm:$0xf]
    %v3205 = vld [vmem:[%s3198 + $0x18] sm:$0xf]
    %v3206 = vld [vmem:[%s3198 + $0x1c] sm:$0xf]
    %v3207 = vld [vmem:[%s3198 + $0x20] sm:$0xf]
    %v3208 = vld [vmem:[%s3198 + $0x24] sm:$0xf]
    %v3209 = vld [vmem:[%s3198 + $0x28] sm:$0xf]
    %v3210 = vld [vmem:[%s3198 + $0x2c] sm:$0xf]
    %v3211 = vld [vmem:[%s3198 + $0x30] sm:$0xf]
    %v3212 = vld [vmem:[%s3198 + $0x34] sm:$0xf]
    %v3213 = vld [vmem:[%s3198 + $0x38] sm:$0xf]
    %v3214 = vld [vmem:[%s3198 + $0x3c] sm:$0xf]
    %v3217 = vunpack.c.l.b16 %v3196
    %v3218 = vunpack.c.l.b16 %v3197
    %v3219 = vrot.slane %v3218, 7
    %v3220 = vsel %vm1462, %v3219, %v3217
    %v3221 = vpack.c.b16 %v3220, %v3220
    %v3239 = vunpack.c.l.b16 %v3199
    %v3240 = vunpack.c.l.b16 %v3200
    %v3241 = vunpack.c.l.b16 %v3201
    %v3242 = vunpack.c.l.b16 %v3202
    %v3243 = vunpack.c.l.b16 %v3203
    %v3244 = vunpack.c.l.b16 %v3204
    %v3245 = vunpack.c.l.b16 %v3205
    %v3246 = vunpack.c.l.b16 %v3206
    %v3247 = vunpack.c.l.b16 %v3207
    %v3248 = vunpack.c.l.b16 %v3208
    %v3249 = vunpack.c.l.b16 %v3209
    %v3250 = vunpack.c.l.b16 %v3210
    %v3251 = vunpack.c.l.b16 %v3211
    %v3252 = vunpack.c.l.b16 %v3212
    %v3253 = vunpack.c.l.b16 %v3213
    %v3254 = vunpack.c.l.b16 %v3214
    %v3255 = vpack.c.b16 %v3240, %v3239
    %v3256 = vpack.c.b16 %v3242, %v3241
    %v3257 = vpack.c.b16 %v3244, %v3243
    %v3258 = vpack.c.b16 %v3246, %v3245
    %v3259 = vpack.c.b16 %v3248, %v3247
    %v3260 = vpack.c.b16 %v3250, %v3249
    %v3261 = vpack.c.b16 %v3252, %v3251
    %v3262 = vpack.c.b16 %v3254, %v3253
    %3271 = vmatprep.subr.bf16.mxu0 0
    %3272 = vmatpush1.bf16.msra.mxu0 %v3255
    %3273 = vmatprep.subr.bf16.mxu0 0
    %3274 = vmatpush1.bf16.msra.mxu0 %v3256
    %3275 = vmatprep.subr.bf16.mxu0 0
    %3276 = vmatpush1.bf16.msra.mxu0 %v3257
    %3277 = vmatprep.subr.bf16.mxu0 0
    %3278 = vmatpush1.bf16.msra.mxu0 %v3258
    %3279 = vmatprep.subr.bf16.mxu0 0
    %3280 = vmatpush1.bf16.msra.mxu0 %v3259
    %3281 = vmatprep.subr.bf16.mxu0 0
    %3282 = vmatpush1.bf16.msra.mxu0 %v3260
    %3283 = vmatprep.subr.bf16.mxu0 0
    %3284 = vmatpush1.bf16.msra.mxu0 %v3261
    %3285 = vmatprep.subr.bf16.mxu0 0
    %3286 = vmatpush1.bf16.msra.mxu0 %v3262
    %3287 = vmatprep.subr.bf16.mxu0 0
    %3288 = vmatpush1.bf16.msra.mxu0 0
    %3289 = vmatprep.subr.bf16.mxu0 0
    %3290 = vmatpush1.bf16.msra.mxu0 0
    %3291 = vmatprep.subr.bf16.mxu0 0
    %3292 = vmatpush1.bf16.msra.mxu0 0
    %3293 = vmatprep.subr.bf16.mxu0 0
    %3294 = vmatpush1.bf16.msra.mxu0 0
    %3295 = vmatprep.subr.bf16.mxu0 0
    %3296 = vmatpush1.bf16.msra.mxu0 0
    %3297 = vmatprep.subr.bf16.mxu0 0
    %3298 = vmatpush1.bf16.msra.mxu0 0
    %3299 = vmatprep.subr.bf16.mxu0 0
    %3300 = vmatpush1.bf16.msra.mxu0 0
    %3301 = vmatprep.subr.bf16.mxu0 0
    %3302 = vmatpush1.bf16.msra.mxu0 0
    %3303 = vmatprep.mubr.bf16.mxu0 0
    %3304 = vmatmul.mubr.bf16.gmra.mrb[0].mxu0 %v3221
    %v3305 = vpop.f32.mrb[0].mxu0
    %v3306 = vadd.f32 0.0, %v3305
    %v3307 = vpop.f32.mrb[0].mxu0
    %v3308 = vpop.f32.mrb[0].mxu0
    %v3309 = vpop.f32.mrb[0].mxu0
    %3310 = vdwg.mxu0
    %v3311 = vadd.f32 %v2996, %v3306
    %s3312 = scalar_lea.vmem %s11, 14
    %v3313 = vld [vmem:[%s3312] sm:$0x3]
    %v3315 = vrot.slane %v3313, 1
    %v3318 = vmul.f32 %v3186, %v3313
    %v3319 = vmul.f32 %v3187, %v3315
    %v3320 = vpack.c.bf16 %v3318, %v3318
    %v3321 = vpack.c.bf16 %v3319, %v3319
    %s3322 = scalar_lea.vmem %s12, 448
    %v3323 = vld [vmem:[%s3322] sm:$0xf]
    %v3324 = vld [vmem:[%s3322 + $0x4] sm:$0xf]
    %v3325 = vld [vmem:[%s3322 + $0x8] sm:$0xf]
    %v3326 = vld [vmem:[%s3322 + $0xc] sm:$0xf]
    %v3327 = vld [vmem:[%s3322 + $0x10] sm:$0xf]
    %v3328 = vld [vmem:[%s3322 + $0x14] sm:$0xf]
    %v3329 = vld [vmem:[%s3322 + $0x18] sm:$0xf]
    %v3330 = vld [vmem:[%s3322 + $0x1c] sm:$0xf]
    %v3331 = vld [vmem:[%s3322 + $0x20] sm:$0xf]
    %v3332 = vld [vmem:[%s3322 + $0x24] sm:$0xf]
    %v3333 = vld [vmem:[%s3322 + $0x28] sm:$0xf]
    %v3334 = vld [vmem:[%s3322 + $0x2c] sm:$0xf]
    %v3335 = vld [vmem:[%s3322 + $0x30] sm:$0xf]
    %v3336 = vld [vmem:[%s3322 + $0x34] sm:$0xf]
    %v3337 = vld [vmem:[%s3322 + $0x38] sm:$0xf]
    %v3338 = vld [vmem:[%s3322 + $0x3c] sm:$0xf]
    %v3341 = vunpack.c.l.b16 %v3320
    %v3342 = vunpack.c.l.b16 %v3321
    %v3343 = vrot.slane %v3342, 7
    %v3344 = vsel %vm1462, %v3343, %v3341
    %v3345 = vpack.c.b16 %v3344, %v3344
    %v3363 = vunpack.c.l.b16 %v3323
    %v3364 = vunpack.c.l.b16 %v3324
    %v3365 = vunpack.c.l.b16 %v3325
    %v3366 = vunpack.c.l.b16 %v3326
    %v3367 = vunpack.c.l.b16 %v3327
    %v3368 = vunpack.c.l.b16 %v3328
    %v3369 = vunpack.c.l.b16 %v3329
    %v3370 = vunpack.c.l.b16 %v3330
    %v3371 = vunpack.c.l.b16 %v3331
    %v3372 = vunpack.c.l.b16 %v3332
    %v3373 = vunpack.c.l.b16 %v3333
    %v3374 = vunpack.c.l.b16 %v3334
    %v3375 = vunpack.c.l.b16 %v3335
    %v3376 = vunpack.c.l.b16 %v3336
    %v3377 = vunpack.c.l.b16 %v3337
    %v3378 = vunpack.c.l.b16 %v3338
    %v3379 = vpack.c.b16 %v3364, %v3363
    %v3380 = vpack.c.b16 %v3366, %v3365
    %v3381 = vpack.c.b16 %v3368, %v3367
    %v3382 = vpack.c.b16 %v3370, %v3369
    %v3383 = vpack.c.b16 %v3372, %v3371
    %v3384 = vpack.c.b16 %v3374, %v3373
    %v3385 = vpack.c.b16 %v3376, %v3375
    %v3386 = vpack.c.b16 %v3378, %v3377
    %3395 = vmatprep.subr.bf16.mxu0 0
    %3396 = vmatpush1.bf16.msra.mxu0 %v3379
    %3397 = vmatprep.subr.bf16.mxu0 0
    %3398 = vmatpush1.bf16.msra.mxu0 %v3380
    %3399 = vmatprep.subr.bf16.mxu0 0
    %3400 = vmatpush1.bf16.msra.mxu0 %v3381
    %3401 = vmatprep.subr.bf16.mxu0 0
    %3402 = vmatpush1.bf16.msra.mxu0 %v3382
    %3403 = vmatprep.subr.bf16.mxu0 0
    %3404 = vmatpush1.bf16.msra.mxu0 %v3383
    %3405 = vmatprep.subr.bf16.mxu0 0
    %3406 = vmatpush1.bf16.msra.mxu0 %v3384
    %3407 = vmatprep.subr.bf16.mxu0 0
    %3408 = vmatpush1.bf16.msra.mxu0 %v3385
    %3409 = vmatprep.subr.bf16.mxu0 0
    %3410 = vmatpush1.bf16.msra.mxu0 %v3386
    %3411 = vmatprep.subr.bf16.mxu0 0
    %3412 = vmatpush1.bf16.msra.mxu0 0
    %3413 = vmatprep.subr.bf16.mxu0 0
    %3414 = vmatpush1.bf16.msra.mxu0 0
    %3415 = vmatprep.subr.bf16.mxu0 0
    %3416 = vmatpush1.bf16.msra.mxu0 0
    %3417 = vmatprep.subr.bf16.mxu0 0
    %3418 = vmatpush1.bf16.msra.mxu0 0
    %3419 = vmatprep.subr.bf16.mxu0 0
    %3420 = vmatpush1.bf16.msra.mxu0 0
    %3421 = vmatprep.subr.bf16.mxu0 0
    %3422 = vmatpush1.bf16.msra.mxu0 0
    %3423 = vmatprep.subr.bf16.mxu0 0
    %3424 = vmatpush1.bf16.msra.mxu0 0
    %3425 = vmatprep.subr.bf16.mxu0 0
    %3426 = vmatpush1.bf16.msra.mxu0 0
    %3427 = vmatprep.mubr.bf16.mxu0 0
    %3428 = vmatmul.mubr.bf16.gmra.mrb[0].mxu0 %v3345
    %v3429 = vpop.f32.mrb[0].mxu0
    %v3430 = vadd.f32 0.0, %v3429
    %v3431 = vpop.f32.mrb[0].mxu0
    %v3432 = vpop.f32.mrb[0].mxu0
    %v3433 = vpop.f32.mrb[0].mxu0
    %3434 = vdwg.mxu0
    %v3435 = vadd.f32 %v3311, %v3430
    %v3436 = vld [vmem:[%s6] sm:$0x1]
    %vm3437 = vcmask 64512
    %v3439 = vsel %vm3437, %v3436, 0
    %v3442 = vsel %vm3157, %v3042, 0
    %3444 = vmatprep.subr.bf16.mxu0 0
    %3445 = vmatpush1.bf16.msra.mxu0 %v3442
    %3446 = vmatprep.subr.bf16.mxu0 0
    %3447 = vmatpush1.bf16.msra.mxu0 0
    %3448 = vmatprep.subr.bf16.mxu0 0
    %3449 = vmatpush1.bf16.msra.mxu0 0
    %3450 = vmatprep.subr.bf16.mxu0 0
    %3451 = vmatpush1.bf16.msra.mxu0 0
    %3452 = vmatprep.subr.bf16.mxu0 0
    %3453 = vmatpush1.bf16.msra.mxu0 0
    %3454 = vmatprep.subr.bf16.mxu0 0
    %3455 = vmatpush1.bf16.msra.mxu0 0
    %3456 = vmatprep.subr.bf16.mxu0 0
    %3457 = vmatpush1.bf16.msra.mxu0 0
    %3458 = vmatprep.subr.bf16.mxu0 0
    %3459 = vmatpush1.bf16.msra.mxu0 0
    %3460 = vmatprep.subr.bf16.mxu0 0
    %3461 = vmatpush1.bf16.msra.mxu0 0
    %3462 = vmatprep.subr.bf16.mxu0 0
    %3463 = vmatpush1.bf16.msra.mxu0 0
    %3464 = vmatprep.subr.bf16.mxu0 0
    %3465 = vmatpush1.bf16.msra.mxu0 0
    %3466 = vmatprep.subr.bf16.mxu0 0
    %3467 = vmatpush1.bf16.msra.mxu0 0
    %3468 = vmatprep.subr.bf16.mxu0 0
    %3469 = vmatpush1.bf16.msra.mxu0 0
    %3470 = vmatprep.subr.bf16.mxu0 0
    %3471 = vmatpush1.bf16.msra.mxu0 0
    %3472 = vmatprep.subr.bf16.mxu0 0
    %3473 = vmatpush1.bf16.msra.mxu0 0
    %3474 = vmatprep.subr.bf16.mxu0 0
    %3475 = vmatpush1.bf16.msra.mxu0 0
    %3476 = vmatprep.mubr.bf16.mxu0 0
    %3477 = vmatmul.mubr.bf16.gmra.mrb[0].mxu0 %v3439
    %v3478 = vpop.f32.mrb[0].mxu0
    %v3479 = vadd.f32 0.0, %v3478
    %v3480 = vpop.f32.mrb[0].mxu0
    %v3481 = vpop.f32.mrb[0].mxu0
    %v3482 = vpop.f32.mrb[0].mxu0
    %3483 = vdwg.mxu0
    %v3484 = vpack.c.bf16 %v3479, %v3479
    %s3485 = scalar_lea.vmem %s7, 256
    %v3486 = vld [vmem:[%s3485] sm:$0xf]
    %v3487 = vld [vmem:[%s3485 + $0x4] sm:$0xf]
    %v3488 = vld [vmem:[%s3485 + $0x8] sm:$0xf]
    %v3489 = vld [vmem:[%s3485 + $0xc] sm:$0xf]
    %v3490 = vld [vmem:[%s3485 + $0x10] sm:$0xf]
    %v3491 = vld [vmem:[%s3485 + $0x14] sm:$0xf]
    %v3492 = vld [vmem:[%s3485 + $0x18] sm:$0xf]
    %v3493 = vld [vmem:[%s3485 + $0x1c] sm:$0xf]
    %v3494 = vld [vmem:[%s3485 + $0x20] sm:$0xf]
    %v3495 = vld [vmem:[%s3485 + $0x24] sm:$0xf]
    %v3496 = vld [vmem:[%s3485 + $0x28] sm:$0xf]
    %v3497 = vld [vmem:[%s3485 + $0x2c] sm:$0xf]
    %v3498 = vld [vmem:[%s3485 + $0x30] sm:$0xf]
    %v3499 = vld [vmem:[%s3485 + $0x34] sm:$0xf]
    %v3500 = vld [vmem:[%s3485 + $0x38] sm:$0xf]
    %v3501 = vld [vmem:[%s3485 + $0x3c] sm:$0xf]
    %v3502 = vld [vmem:[%s8 + $0x4] sm:$0x1]
    %v3503 = vlaneseq
    %v3504 = vshrl.u32 %v3503, 7
    %v3505 = vsub.s32 0, %v3504
    %v3506 = vrot.slane %v3502, %v3505
    %v3523 = vunpack.c.l.b16 %v3486
    %v3524 = vunpack.c.l.b16 %v3487
    %v3525 = vunpack.c.l.b16 %v3488
    %v3526 = vunpack.c.l.b16 %v3489
    %v3527 = vunpack.c.l.b16 %v3490
    %v3528 = vunpack.c.l.b16 %v3491
    %v3529 = vunpack.c.l.b16 %v3492
    %v3530 = vunpack.c.l.b16 %v3493
    %v3531 = vunpack.c.l.b16 %v3494
    %v3532 = vunpack.c.l.b16 %v3495
    %v3533 = vunpack.c.l.b16 %v3496
    %v3534 = vunpack.c.l.b16 %v3497
    %v3535 = vunpack.c.l.b16 %v3498
    %v3536 = vunpack.c.l.b16 %v3499
    %v3537 = vunpack.c.l.b16 %v3500
    %v3538 = vunpack.c.l.b16 %v3501
    %v3539 = vpack.c.b16 %v3524, %v3523
    %v3540 = vpack.c.b16 %v3526, %v3525
    %v3541 = vpack.c.b16 %v3528, %v3527
    %v3542 = vpack.c.b16 %v3530, %v3529
    %v3543 = vpack.c.b16 %v3532, %v3531
    %v3544 = vpack.c.b16 %v3534, %v3533
    %v3545 = vpack.c.b16 %v3536, %v3535
    %v3546 = vpack.c.b16 %v3538, %v3537
    %3555 = vmatprep.subr.bf16.mxu0 0
    %3556 = vmatpush1.bf16.msra.mxu0 %v3539
    %3557 = vmatprep.subr.bf16.mxu0 0
    %3558 = vmatpush1.bf16.msra.mxu0 %v3540
    %3559 = vmatprep.subr.bf16.mxu0 0
    %3560 = vmatpush1.bf16.msra.mxu0 %v3541
    %3561 = vmatprep.subr.bf16.mxu0 0
    %3562 = vmatpush1.bf16.msra.mxu0 %v3542
    %3563 = vmatprep.subr.bf16.mxu0 0
    %3564 = vmatpush1.bf16.msra.mxu0 %v3543
    %3565 = vmatprep.subr.bf16.mxu0 0
    %3566 = vmatpush1.bf16.msra.mxu0 %v3544
    %3567 = vmatprep.subr.bf16.mxu0 0
    %3568 = vmatpush1.bf16.msra.mxu0 %v3545
    %3569 = vmatprep.subr.bf16.mxu0 0
    %3570 = vmatpush1.bf16.msra.mxu0 %v3546
    %3571 = vmatprep.subr.bf16.mxu0 0
    %3572 = vmatpush1.bf16.msra.mxu0 0
    %3573 = vmatprep.subr.bf16.mxu0 0
    %3574 = vmatpush1.bf16.msra.mxu0 0
    %3575 = vmatprep.subr.bf16.mxu0 0
    %3576 = vmatpush1.bf16.msra.mxu0 0
    %3577 = vmatprep.subr.bf16.mxu0 0
    %3578 = vmatpush1.bf16.msra.mxu0 0
    %3579 = vmatprep.subr.bf16.mxu0 0
    %3580 = vmatpush1.bf16.msra.mxu0 0
    %3581 = vmatprep.subr.bf16.mxu0 0
    %3582 = vmatpush1.bf16.msra.mxu0 0
    %3583 = vmatprep.subr.bf16.mxu0 0
    %3584 = vmatpush1.bf16.msra.mxu0 0
    %3585 = vmatprep.subr.bf16.mxu0 0
    %3586 = vmatpush1.bf16.msra.mxu0 0
    %3587 = vmatprep.mubr.bf16.mxu0 0
    %3588 = vmatmul.mubr.bf16.gmra.mrb[0].mxu0 %v3484
    %v3589 = vpop.f32.mrb[0].mxu0
    %v3590 = vadd.f32 %v3506, %v3589
    %v3591 = vpop.f32.mrb[0].mxu0
    %v3592 = vpop.f32.mrb[0].mxu0
    %v3593 = vpop.f32.mrb[0].mxu0
    %3594 = vdwg.mxu0
    %v3595 = vmax.f32 %v3590, 0.0
    %s3596 = scalar_lea.vmem %s11, 16
    %v3597 = vld [vmem:[%s3596] sm:$0x3]
    %v3598 = vmul.f32 %v3595, %v3597
    %v3599 = vpack.c.bf16 %v3598, %v3598
    %s3600 = scalar_lea.vmem %s12, 512
    %v3601 = vld [vmem:[%s3600] sm:$0xf]
    %v3602 = vld [vmem:[%s3600 + $0x4] sm:$0xf]
    %v3603 = vld [vmem:[%s3600 + $0x8] sm:$0xf]
    %v3604 = vld [vmem:[%s3600 + $0xc] sm:$0xf]
    %v3605 = vld [vmem:[%s3600 + $0x10] sm:$0xf]
    %v3606 = vld [vmem:[%s3600 + $0x14] sm:$0xf]
    %v3607 = vld [vmem:[%s3600 + $0x18] sm:$0xf]
    %v3608 = vld [vmem:[%s3600 + $0x1c] sm:$0xf]
    %v3609 = vld [vmem:[%s3600 + $0x20] sm:$0xf]
    %v3610 = vld [vmem:[%s3600 + $0x24] sm:$0xf]
    %v3611 = vld [vmem:[%s3600 + $0x28] sm:$0xf]
    %v3612 = vld [vmem:[%s3600 + $0x2c] sm:$0xf]
    %v3613 = vld [vmem:[%s3600 + $0x30] sm:$0xf]
    %v3614 = vld [vmem:[%s3600 + $0x34] sm:$0xf]
    %v3615 = vld [vmem:[%s3600 + $0x38] sm:$0xf]
    %v3616 = vld [vmem:[%s3600 + $0x3c] sm:$0xf]
    %v3633 = vunpack.c.l.b16 %v3601
    %v3634 = vunpack.c.l.b16 %v3602
    %v3635 = vunpack.c.l.b16 %v3603
    %v3636 = vunpack.c.l.b16 %v3604
    %v3637 = vunpack.c.l.b16 %v3605
    %v3638 = vunpack.c.l.b16 %v3606
    %v3639 = vunpack.c.l.b16 %v3607
    %v3640 = vunpack.c.l.b16 %v3608
    %v3641 = vunpack.c.l.b16 %v3609
    %v3642 = vunpack.c.l.b16 %v3610
    %v3643 = vunpack.c.l.b16 %v3611
    %v3644 = vunpack.c.l.b16 %v3612
    %v3645 = vunpack.c.l.b16 %v3613
    %v3646 = vunpack.c.l.b16 %v3614
    %v3647 = vunpack.c.l.b16 %v3615
    %v3648 = vunpack.c.l.b16 %v3616
    %v3649 = vpack.c.b16 %v3634, %v3633
    %v3650 = vpack.c.b16 %v3636, %v3635
    %v3651 = vpack.c.b16 %v3638, %v3637
    %v3652 = vpack.c.b16 %v3640, %v3639
    %v3653 = vpack.c.b16 %v3642, %v3641
    %v3654 = vpack.c.b16 %v3644, %v3643
    %v3655 = vpack.c.b16 %v3646, %v3645
    %v3656 = vpack.c.b16 %v3648, %v3647
    %3665 = vmatprep.subr.bf16.mxu0 0
    %3666 = vmatpush1.bf16.msra.mxu0 %v3649
    %3667 = vmatprep.subr.bf16.mxu0 0
    %3668 = vmatpush1.bf16.msra.mxu0 %v3650
    %3669 = vmatprep.subr.bf16.mxu0 0
    %3670 = vmatpush1.bf16.msra.mxu0 %v3651
    %3671 = vmatprep.subr.bf16.mxu0 0
    %3672 = vmatpush1.bf16.msra.mxu0 %v3652
    %3673 = vmatprep.subr.bf16.mxu0 0
    %3674 = vmatpush1.bf16.msra.mxu0 %v3653
    %3675 = vmatprep.subr.bf16.mxu0 0
    %3676 = vmatpush1.bf16.msra.mxu0 %v3654
    %3677 = vmatprep.subr.bf16.mxu0 0
    %3678 = vmatpush1.bf16.msra.mxu0 %v3655
    %3679 = vmatprep.subr.bf16.mxu0 0
    %3680 = vmatpush1.bf16.msra.mxu0 %v3656
    %3681 = vmatprep.subr.bf16.mxu0 0
    %3682 = vmatpush1.bf16.msra.mxu0 0
    %3683 = vmatprep.subr.bf16.mxu0 0
    %3684 = vmatpush1.bf16.msra.mxu0 0
    %3685 = vmatprep.subr.bf16.mxu0 0
    %3686 = vmatpush1.bf16.msra.mxu0 0
    %3687 = vmatprep.subr.bf16.mxu0 0
    %3688 = vmatpush1.bf16.msra.mxu0 0
    %3689 = vmatprep.subr.bf16.mxu0 0
    %3690 = vmatpush1.bf16.msra.mxu0 0
    %3691 = vmatprep.subr.bf16.mxu0 0
    %3692 = vmatpush1.bf16.msra.mxu0 0
    %3693 = vmatprep.subr.bf16.mxu0 0
    %3694 = vmatpush1.bf16.msra.mxu0 0
    %3695 = vmatprep.subr.bf16.mxu0 0
    %3696 = vmatpush1.bf16.msra.mxu0 0
    %3697 = vmatprep.mubr.bf16.mxu0 0
    %3698 = vmatmul.mubr.bf16.gmra.mrb[0].mxu0 %v3599
    %v3699 = vpop.f32.mrb[0].mxu0
    %v3700 = vadd.f32 0.0, %v3699
    %v3701 = vpop.f32.mrb[0].mxu0
    %v3702 = vpop.f32.mrb[0].mxu0
    %v3703 = vpop.f32.mrb[0].mxu0
    %3704 = vdwg.mxu0
    %v3705 = vadd.f32 %v3435, %v3700
    %s3706 = scalar_lea.vmem %s11, 18
    %v3707 = vld [vmem:[%s3706] sm:$0x3]
    %v3708 = vmul.f32 %v3595, %v3707
    %v3709 = vpack.c.bf16 %v3708, %v3708
    %s3710 = scalar_lea.vmem %s12, 576
    %v3711 = vld [vmem:[%s3710] sm:$0xf]
    %v3712 = vld [vmem:[%s3710 + $0x4] sm:$0xf]
    %v3713 = vld [vmem:[%s3710 + $0x8] sm:$0xf]
    %v3714 = vld [vmem:[%s3710 + $0xc] sm:$0xf]
    %v3715 = vld [vmem:[%s3710 + $0x10] sm:$0xf]
    %v3716 = vld [vmem:[%s3710 + $0x14] sm:$0xf]
    %v3717 = vld [vmem:[%s3710 + $0x18] sm:$0xf]
    %v3718 = vld [vmem:[%s3710 + $0x1c] sm:$0xf]
    %v3719 = vld [vmem:[%s3710 + $0x20] sm:$0xf]
    %v3720 = vld [vmem:[%s3710 + $0x24] sm:$0xf]
    %v3721 = vld [vmem:[%s3710 + $0x28] sm:$0xf]
    %v3722 = vld [vmem:[%s3710 + $0x2c] sm:$0xf]
    %v3723 = vld [vmem:[%s3710 + $0x30] sm:$0xf]
    %v3724 = vld [vmem:[%s3710 + $0x34] sm:$0xf]
    %v3725 = vld [vmem:[%s3710 + $0x38] sm:$0xf]
    %v3726 = vld [vmem:[%s3710 + $0x3c] sm:$0xf]
    %v3743 = vunpack.c.l.b16 %v3711
    %v3744 = vunpack.c.l.b16 %v3712
    %v3745 = vunpack.c.l.b16 %v3713
    %v3746 = vunpack.c.l.b16 %v3714
    %v3747 = vunpack.c.l.b16 %v3715
    %v3748 = vunpack.c.l.b16 %v3716
    %v3749 = vunpack.c.l.b16 %v3717
    %v3750 = vunpack.c.l.b16 %v3718
    %v3751 = vunpack.c.l.b16 %v3719
    %v3752 = vunpack.c.l.b16 %v3720
    %v3753 = vunpack.c.l.b16 %v3721
    %v3754 = vunpack.c.l.b16 %v3722
    %v3755 = vunpack.c.l.b16 %v3723
    %v3756 = vunpack.c.l.b16 %v3724
    %v3757 = vunpack.c.l.b16 %v3725
    %v3758 = vunpack.c.l.b16 %v3726
    %v3759 = vpack.c.b16 %v3744, %v3743
    %v3760 = vpack.c.b16 %v3746, %v3745
    %v3761 = vpack.c.b16 %v3748, %v3747
    %v3762 = vpack.c.b16 %v3750, %v3749
    %v3763 = vpack.c.b16 %v3752, %v3751
    %v3764 = vpack.c.b16 %v3754, %v3753
    %v3765 = vpack.c.b16 %v3756, %v3755
    %v3766 = vpack.c.b16 %v3758, %v3757
    %3775 = vmatprep.subr.bf16.mxu0 0
    %3776 = vmatpush1.bf16.msra.mxu0 %v3759
    %3777 = vmatprep.subr.bf16.mxu0 0
    %3778 = vmatpush1.bf16.msra.mxu0 %v3760
    %3779 = vmatprep.subr.bf16.mxu0 0
    %3780 = vmatpush1.bf16.msra.mxu0 %v3761
    %3781 = vmatprep.subr.bf16.mxu0 0
    %3782 = vmatpush1.bf16.msra.mxu0 %v3762
    %3783 = vmatprep.subr.bf16.mxu0 0
    %3784 = vmatpush1.bf16.msra.mxu0 %v3763
    %3785 = vmatprep.subr.bf16.mxu0 0
    %3786 = vmatpush1.bf16.msra.mxu0 %v3764
    %3787 = vmatprep.subr.bf16.mxu0 0
    %3788 = vmatpush1.bf16.msra.mxu0 %v3765
    %3789 = vmatprep.subr.bf16.mxu0 0
    %3790 = vmatpush1.bf16.msra.mxu0 %v3766
    %3791 = vmatprep.subr.bf16.mxu0 0
    %3792 = vmatpush1.bf16.msra.mxu0 0
    %3793 = vmatprep.subr.bf16.mxu0 0
    %3794 = vmatpush1.bf16.msra.mxu0 0
    %3795 = vmatprep.subr.bf16.mxu0 0
    %3796 = vmatpush1.bf16.msra.mxu0 0
    %3797 = vmatprep.subr.bf16.mxu0 0
    %3798 = vmatpush1.bf16.msra.mxu0 0
    %3799 = vmatprep.subr.bf16.mxu0 0
    %3800 = vmatpush1.bf16.msra.mxu0 0
    %3801 = vmatprep.subr.bf16.mxu0 0
    %3802 = vmatpush1.bf16.msra.mxu0 0
    %3803 = vmatprep.subr.bf16.mxu0 0
    %3804 = vmatpush1.bf16.msra.mxu0 0
    %3805 = vmatprep.subr.bf16.mxu0 0
    %3806 = vmatpush1.bf16.msra.mxu0 0
    %3807 = vmatprep.mubr.bf16.mxu0 0
    %3808 = vmatmul.mubr.bf16.gmra.mrb[0].mxu0 %v3709
    %v3809 = vpop.f32.mrb[0].mxu0
    %v3810 = vadd.f32 0.0, %v3809
    %v3811 = vpop.f32.mrb[0].mxu0
    %v3812 = vpop.f32.mrb[0].mxu0
    %v3813 = vpop.f32.mrb[0].mxu0
    %3814 = vdwg.mxu0
    %v3815 = vadd.f32 %v3705, %v3810
    %v3816 = vlaneseq
    %v3817 = vand.u32 %v3816, 127
    %v3818 = vld [vmem:[%s9] sm:$0x3]
    %vm3819 = vcmp.eq.s32.totalorder %v3817, %v3818
    %s3820 = scalar_lea.vmem %s9, 2
    %v3821 = vld [vmem:[%s3820] sm:$0x3]
    %vm3822 = vcmp.eq.s32.totalorder %v3817, %v3821
    %vm3823 = vmor %vm3819, %vm3822
    %s3824 = scalar_lea.vmem %s9, 4
    %v3825 = vld [vmem:[%s3824] sm:$0x3]
    %vm3826 = vcmp.eq.s32.totalorder %v3817, %v3825
    %vm3827 = vmor %vm3823, %vm3826
    %v3828 = vsel %vm3827, 1, 0
    %v3829 = vcvt.s32.f32 %v3828
    %v3830 = vpack.c.bf16 %v3829, %v3829
    %v3831 = vld [vmem:[%s10] sm:$0xf]
    %v3832 = vld [vmem:[%s10 + $0x4] sm:$0xf]
    %v3833 = vld [vmem:[%s10 + $0x8] sm:$0xf]
    %v3834 = vld [vmem:[%s10 + $0xc] sm:$0xf]
    %v3835 = vld [vmem:[%s10 + $0x10] sm:$0xf]
    %v3836 = vld [vmem:[%s10 + $0x14] sm:$0xf]
    %v3837 = vld [vmem:[%s10 + $0x18] sm:$0xf]
    %v3838 = vld [vmem:[%s10 + $0x1c] sm:$0xf]
    %v3839 = vld [vmem:[%s10 + $0x20] sm:$0xf]
    %v3840 = vld [vmem:[%s10 + $0x24] sm:$0xf]
    %v3841 = vld [vmem:[%s10 + $0x28] sm:$0xf]
    %v3842 = vld [vmem:[%s10 + $0x2c] sm:$0xf]
    %v3843 = vld [vmem:[%s10 + $0x30] sm:$0xf]
    %v3844 = vld [vmem:[%s10 + $0x34] sm:$0xf]
    %v3845 = vld [vmem:[%s10 + $0x38] sm:$0xf]
    %v3846 = vld [vmem:[%s10 + $0x3c] sm:$0xf]
    %v3863 = vunpack.c.l.b16 %v3831
    %v3864 = vunpack.c.l.b16 %v3832
    %v3865 = vunpack.c.l.b16 %v3833
    %v3866 = vunpack.c.l.b16 %v3834
    %v3867 = vunpack.c.l.b16 %v3835
    %v3868 = vunpack.c.l.b16 %v3836
    %v3869 = vunpack.c.l.b16 %v3837
    %v3870 = vunpack.c.l.b16 %v3838
    %v3871 = vunpack.c.l.b16 %v3839
    %v3872 = vunpack.c.l.b16 %v3840
    %v3873 = vunpack.c.l.b16 %v3841
    %v3874 = vunpack.c.l.b16 %v3842
    %v3875 = vunpack.c.l.b16 %v3843
    %v3876 = vunpack.c.l.b16 %v3844
    %v3877 = vunpack.c.l.b16 %v3845
    %v3878 = vunpack.c.l.b16 %v3846
    %v3879 = vpack.c.b16 %v3864, %v3863
    %v3880 = vpack.c.b16 %v3866, %v3865
    %v3881 = vpack.c.b16 %v3868, %v3867
    %v3882 = vpack.c.b16 %v3870, %v3869
    %v3883 = vpack.c.b16 %v3872, %v3871
    %v3884 = vpack.c.b16 %v3874, %v3873
    %v3885 = vpack.c.b16 %v3876, %v3875
    %v3886 = vpack.c.b16 %v3878, %v3877
    %3895 = vmatprep.subr.bf16.mxu0 0
    %3896 = vmatpush1.bf16.msra.mxu0 %v3879
    %3897 = vmatprep.subr.bf16.mxu0 0
    %3898 = vmatpush1.bf16.msra.mxu0 %v3880
    %3899 = vmatprep.subr.bf16.mxu0 0
    %3900 = vmatpush1.bf16.msra.mxu0 %v3881
    %3901 = vmatprep.subr.bf16.mxu0 0
    %3902 = vmatpush1.bf16.msra.mxu0 %v3882
    %3903 = vmatprep.subr.bf16.mxu0 0
    %3904 = vmatpush1.bf16.msra.mxu0 %v3883
    %3905 = vmatprep.subr.bf16.mxu0 0
    %3906 = vmatpush1.bf16.msra.mxu0 %v3884
    %3907 = vmatprep.subr.bf16.mxu0 0
    %3908 = vmatpush1.bf16.msra.mxu0 %v3885
    %3909 = vmatprep.subr.bf16.mxu0 0
    %3910 = vmatpush1.bf16.msra.mxu0 %v3886
    %3911 = vmatprep.subr.bf16.mxu0 0
    %3912 = vmatpush1.bf16.msra.mxu0 0
    %3913 = vmatprep.subr.bf16.mxu0 0
    %3914 = vmatpush1.bf16.msra.mxu0 0
    %3915 = vmatprep.subr.bf16.mxu0 0
    %3916 = vmatpush1.bf16.msra.mxu0 0
    %3917 = vmatprep.subr.bf16.mxu0 0
    %3918 = vmatpush1.bf16.msra.mxu0 0
    %3919 = vmatprep.subr.bf16.mxu0 0
    %3920 = vmatpush1.bf16.msra.mxu0 0
    %3921 = vmatprep.subr.bf16.mxu0 0
    %3922 = vmatpush1.bf16.msra.mxu0 0
    %3923 = vmatprep.subr.bf16.mxu0 0
    %3924 = vmatpush1.bf16.msra.mxu0 0
    %3925 = vmatprep.subr.bf16.mxu0 0
    %3926 = vmatpush1.bf16.msra.mxu0 0
    %3927 = vmatprep.mubr.bf16.mxu0 0
    %3928 = vmatmul.mubr.bf16.gmra.mrb[0].mxu0 %v3830
    %v3929 = vpop.f32.mrb[0].mxu0
    %v3930 = vadd.f32 0.0, %v3929
    %v3931 = vpop.f32.mrb[0].mxu0
    %v3932 = vpop.f32.mrb[0].mxu0
    %v3933 = vpop.f32.mrb[0].mxu0
    %3934 = vdwg.mxu0
    %s3935 = scalar_lea.vmem %s11, 20
    %v3936 = vld [vmem:[%s3935] sm:$0x3]
    %v3937 = vmul.f32 %v3930, %v3936
    %v3938 = vpack.c.bf16 %v3937, %v3937
    %s3939 = scalar_lea.vmem %s12, 640
    %v3940 = vld [vmem:[%s3939] sm:$0xf]
    %v3941 = vld [vmem:[%s3939 + $0x4] sm:$0xf]
    %v3942 = vld [vmem:[%s3939 + $0x8] sm:$0xf]
    %v3943 = vld [vmem:[%s3939 + $0xc] sm:$0xf]
    %v3944 = vld [vmem:[%s3939 + $0x10] sm:$0xf]
    %v3945 = vld [vmem:[%s3939 + $0x14] sm:$0xf]
    %v3946 = vld [vmem:[%s3939 + $0x18] sm:$0xf]
    %v3947 = vld [vmem:[%s3939 + $0x1c] sm:$0xf]
    %v3948 = vld [vmem:[%s3939 + $0x20] sm:$0xf]
    %v3949 = vld [vmem:[%s3939 + $0x24] sm:$0xf]
    %v3950 = vld [vmem:[%s3939 + $0x28] sm:$0xf]
    %v3951 = vld [vmem:[%s3939 + $0x2c] sm:$0xf]
    %v3952 = vld [vmem:[%s3939 + $0x30] sm:$0xf]
    %v3953 = vld [vmem:[%s3939 + $0x34] sm:$0xf]
    %v3954 = vld [vmem:[%s3939 + $0x38] sm:$0xf]
    %v3955 = vld [vmem:[%s3939 + $0x3c] sm:$0xf]
    %v3972 = vunpack.c.l.b16 %v3940
    %v3973 = vunpack.c.l.b16 %v3941
    %v3974 = vunpack.c.l.b16 %v3942
    %v3975 = vunpack.c.l.b16 %v3943
    %v3976 = vunpack.c.l.b16 %v3944
    %v3977 = vunpack.c.l.b16 %v3945
    %v3978 = vunpack.c.l.b16 %v3946
    %v3979 = vunpack.c.l.b16 %v3947
    %v3980 = vunpack.c.l.b16 %v3948
    %v3981 = vunpack.c.l.b16 %v3949
    %v3982 = vunpack.c.l.b16 %v3950
    %v3983 = vunpack.c.l.b16 %v3951
    %v3984 = vunpack.c.l.b16 %v3952
    %v3985 = vunpack.c.l.b16 %v3953
    %v3986 = vunpack.c.l.b16 %v3954
    %v3987 = vunpack.c.l.b16 %v3955
    %v3988 = vpack.c.b16 %v3973, %v3972
    %v3989 = vpack.c.b16 %v3975, %v3974
    %v3990 = vpack.c.b16 %v3977, %v3976
    %v3991 = vpack.c.b16 %v3979, %v3978
    %v3992 = vpack.c.b16 %v3981, %v3980
    %v3993 = vpack.c.b16 %v3983, %v3982
    %v3994 = vpack.c.b16 %v3985, %v3984
    %v3995 = vpack.c.b16 %v3987, %v3986
    %4004 = vmatprep.subr.bf16.mxu0 0
    %4005 = vmatpush1.bf16.msra.mxu0 %v3988
    %4006 = vmatprep.subr.bf16.mxu0 0
    %4007 = vmatpush1.bf16.msra.mxu0 %v3989
    %4008 = vmatprep.subr.bf16.mxu0 0
    %4009 = vmatpush1.bf16.msra.mxu0 %v3990
    %4010 = vmatprep.subr.bf16.mxu0 0
    %4011 = vmatpush1.bf16.msra.mxu0 %v3991
    %4012 = vmatprep.subr.bf16.mxu0 0
    %4013 = vmatpush1.bf16.msra.mxu0 %v3992
    %4014 = vmatprep.subr.bf16.mxu0 0
    %4015 = vmatpush1.bf16.msra.mxu0 %v3993
    %4016 = vmatprep.subr.bf16.mxu0 0
    %4017 = vmatpush1.bf16.msra.mxu0 %v3994
    %4018 = vmatprep.subr.bf16.mxu0 0
    %4019 = vmatpush1.bf16.msra.mxu0 %v3995
    %4020 = vmatprep.subr.bf16.mxu0 0
    %4021 = vmatpush1.bf16.msra.mxu0 0
    %4022 = vmatprep.subr.bf16.mxu0 0
    %4023 = vmatpush1.bf16.msra.mxu0 0
    %4024 = vmatprep.subr.bf16.mxu0 0
    %4025 = vmatpush1.bf16.msra.mxu0 0
    %4026 = vmatprep.subr.bf16.mxu0 0
    %4027 = vmatpush1.bf16.msra.mxu0 0
    %4028 = vmatprep.subr.bf16.mxu0 0
    %4029 = vmatpush1.bf16.msra.mxu0 0
    %4030 = vmatprep.subr.bf16.mxu0 0
    %4031 = vmatpush1.bf16.msra.mxu0 0
    %4032 = vmatprep.subr.bf16.mxu0 0
    %4033 = vmatpush1.bf16.msra.mxu0 0
    %4034 = vmatprep.subr.bf16.mxu0 0
    %4035 = vmatpush1.bf16.msra.mxu0 0
    %4036 = vmatprep.mubr.bf16.mxu0 0
    %4037 = vmatmul.mubr.bf16.gmra.mrb[0].mxu0 %v3938
    %v4038 = vpop.f32.mrb[0].mxu0
    %v4039 = vadd.f32 0.0, %v4038
    %v4040 = vpop.f32.mrb[0].mxu0
    %v4041 = vpop.f32.mrb[0].mxu0
    %v4042 = vpop.f32.mrb[0].mxu0
    %4043 = vdwg.mxu0
    %v4044 = vadd.f32 %v3815, %v4039
    %v4045 = vld [vmem:[%s13] sm:$0x1]
    %v4047 = vlaneseq
    %v4048 = vshrl.u32 %v4047, 7
    %v4049 = vsub.s32 0, %v4048
    %v4050 = vrot.slane %v4045, %v4049
    %v4052 = vadd.f32 %v4044, %v4050
    %4053 = vst [vmem:[#allocation2] sm:$0x3] %v4052
    // Predicated region
    $region58: #{_forward_core.1} parent=1 // pred_check
      _
    $region59: #{_forward_core.1} parent=1 // pred_check_branch
      %4055 = sbr.rel (0) target = $region61
    $region60: #{_forward_core.1} parent=1 // pred_region
      %s4057 = ssub.s32 32, 32
      %4058 = vsyncadd [#allocation3], %s4057
      %s4060 = sshll.u32 [#allocation2], 4
      %s4061 = int_to_ptr.vmem [resolvable:$true] %s4060
      %4063 = dma.vmem_to_hbm [thread:$0]  %s4061, 32, %s14, [#allocation3]
    $region61: #{_forward_core.1} parent=1 // pred_fallthru
      _
    // Predicated region
    $region62: #{_forward_core.1} parent=1 // pred_check
      _
    $region63: #{_forward_core.1} parent=1 // pred_check_branch
      %4065 = sbr.rel (0) target = $region65
    $region64: #{_forward_core.1} parent=1 // pred_region
      %4066 = dma.done [#allocation3], 32
    $region65: #{_forward_core.1} parent=1 // pred_fallthru
      _
    %4067 = vsyncpa [#allocation3], 1

</llo_original>
